<compile_context>
chip_gen: v5e
topology: v5e:2x2
jax: 0.10.0
libtpu: 0.0.40
codegen_flags: <defaults>
</compile_context>

<pallas_src>
import functools

import jax
import jax.numpy as jnp
from jax.experimental import pallas as pl
from jax.experimental.pallas import tpu as pltpu

# ----------------------------- model dims -----------------------------------
PATCH = 8          # RAFT/GMA downsample factor
FDIM = 64          # feature (correlation) dim
HDIM = 32          # GRU hidden dim
CDIM = 32          # context dim
MDIM = 32          # motion-feature dim
DK = 32            # attention q/k dim
GAMMA_INIT = 0.5   # GMA aggregate residual weight (learned scalar in the paper)


# ----------------------------- encoder kernel --------------------------------
def _linear_kernel(x_ref, w_ref, b_ref, o_ref, *, act):
    y = jnp.dot(x_ref[...], w_ref[...], preferred_element_type=jnp.float32)
    y = y + b_ref[...]
    if act == "relu":
        y = jnp.maximum(y, 0.0)
    elif act == "tanh":
        y = jnp.tanh(y)
    elif act == "sigmoid":
        y = jax.nn.sigmoid(y)
    elif act == "ctx":
        # fused feature+context encoder (lane-dense 128-wide output):
        #   cols [0, FDIM)          -> relu  (correlation features)
        #   cols [FDIM, FDIM+HDIM)  -> tanh  (GRU hidden init, "net")
        #   cols [FDIM+HDIM, ...)   -> relu  (context features, "inp")
        col = jax.lax.broadcasted_iota(jnp.int32, y.shape, 1)
        is_net = (col >= FDIM) & (col < FDIM + HDIM)
        y = jnp.where(is_net, jnp.tanh(y), jnp.maximum(y, 0.0))
    o_ref[...] = y


def _pick_tile_m(m):
    if m <= 1024:
        return m
    for t in (1024, 512, 256, 128):
        if m % t == 0:
            return t
    return m  # TODO(synk): pad ragged M instead of falling back to one block.


def linear(x, w, b, act="none"):
    """(M, K) @ (K, N) + b with fused activation, tiled over M."""
    M, K = x.shape
    Kw, Nout = w.shape
    assert K == Kw, (K, Kw)
    tile_m = _pick_tile_m(M)
    return pl.pallas_call(
        functools.partial(_linear_kernel, act=act),
        out_shape=jax.ShapeDtypeStruct((M, Nout), jnp.float32),
        grid=(M // tile_m,),
        in_specs=[
            pl.BlockSpec((tile_m, K), lambda i: (i, 0)),
            pl.BlockSpec((K, Nout), lambda i: (0, 0)),
            pl.BlockSpec((1, Nout), lambda i: (0, 0)),
        ],
        out_specs=pl.BlockSpec((tile_m, Nout), lambda i: (i, 0)),
        compiler_params=pltpu.CompilerParams(
            dimension_semantics=("parallel",)),
    )(x, w, b.reshape(1, Nout))


# --------------------- fused correlation + attention + GRU -------------------
def _gma_update_kernel(
        f1_ref, f2_ref, net0_ref, inp_ref,
        wqk_ref, bqk_ref,
        wmc_ref, wmf_ref, bm_ref,
        wv_ref, bv_ref, wp_ref, bp_ref,
        wzr_net_ref, wzr_inp_ref, wzr_mot_ref, wzr_mg_ref, bzr_ref,
        wh_net_ref, wh_inp_ref, wh_mot_ref, wh_mg_ref, bh_ref,
        wf_ref, bf_ref, gamma_ref,
        flow_ref, *, iters, fscale, ascale):
    f32 = jnp.float32
    bf16 = jnp.bfloat16

    f1 = f1_ref[0].astype(bf16)        # (HW, FDIM)
    f2 = f2_ref[0].astype(bf16)        # (HW, FDIM)
    net0 = net0_ref[0]                 # (HW, HDIM)   f32
    inp = inp_ref[0]                   # (HW, CDIM)   f32
    hw = f1.shape[0]

    # ---- all-pairs correlation volume (computed once, never leaves VMEM) ----
    # TODO(synk): RAFT uses a 4-level pyramid with radius-4 bilinear lookups;
    # the full single-level volume is used as the per-pixel correlation feature.
    corr = jax.lax.dot_general(
        f1, f2, dimension_numbers=(((1,), (1,)), ((), ())),
        preferred_element_type=f32) * fscale                        # (HW, HW)

    # ---- loop-invariant motion-encoder term: corr @ Wm_corr + bm ----
    pre_mot = jnp.dot(corr.astype(bf16), wmc_ref[...].astype(bf16),
                      preferred_element_type=f32) + bm_ref[...]     # (HW, MDIM)

    # ---- GMA attention from context (normalization deferred to aggregation) ----
    qk = jnp.dot(inp, wqk_ref[...], preferred_element_type=f32) + bqk_ref[...]
    q, k = qk[:, :DK], qk[:, DK:]
    s = jax.lax.dot_general(
        q, k, dimension_numbers=(((1,), (1,)), ((), ())),
        preferred_element_type=f32) * ascale                        # (HW, HW)
    s = s - jnp.max(s, axis=-1, keepdims=True)
    p = jnp.exp(s)
    inv_l = 1.0 / jnp.sum(p, axis=-1, keepdims=True)                # (HW, 1)
    p_bf = p.astype(bf16)              # reused every iteration on the MXU

    # ---- loop-invariant GRU gate contributions from the context features ----
    zr_pre = jnp.dot(inp, wzr_inp_ref[...],
                     preferred_element_type=f32) + bzr_ref[...]     # (HW, 2*HDIM)
    h_pre = jnp.dot(inp, wh_inp_ref[...],
                    preferred_element_type=f32) + bh_ref[...]       # (HW, HDIM)

    gamma = gamma_ref[...]             # (1, 1) -> broadcasts
    wmf = wmf_ref[...]                 # (2, MDIM)

    def body(_, carry):
        net, flow = carry
        # motion encoder: only the (HW, 2) flow contribution changes per iter
        mot_flow = flow[:, 0:1] * wmf[0:1, :] + flow[:, 1:2] * wmf[1:2, :]
        motion = jnp.maximum(pre_mot + mot_flow, 0.0)

        # GMA aggregate: motion + gamma * proj(attn @ v(motion))
        v = jnp.dot(motion, wv_ref[...], preferred_element_type=f32) + bv_ref[...]
        agg = jnp.dot(p_bf, v.astype(bf16), preferred_element_type=f32) * inv_l
        mg = motion + gamma * (
            jnp.dot(agg, wp_ref[...], preferred_element_type=f32) + bp_ref[...])

        # fused z||r GRU gates; weights split per input chunk (no concats)
        # TODO(synk): SepConvGRU uses 1x5/5x1 separable convs; 1x1 matmuls here.
        zr = jax.nn.sigmoid(
            zr_pre
            + jnp.dot(net, wzr_net_ref[...], preferred_element_type=f32)
            + jnp.dot(motion, wzr_mot_ref[...], preferred_element_type=f32)
            + jnp.dot(mg, wzr_mg_ref[...], preferred_element_type=f32))
        z, r = zr[:, :HDIM], zr[:, HDIM:]

        h = jnp.tanh(
            h_pre
            + jnp.dot(r * net, wh_net_ref[...], preferred_element_type=f32)
            + jnp.dot(motion, wh_mot_ref[...], preferred_element_type=f32)
            + jnp.dot(mg, wh_mg_ref[...], preferred_element_type=f32))
        net = (1.0 - z) * net + z * h

        # flow head
        dflow = jnp.dot(net, wf_ref[...], preferred_element_type=f32) + bf_ref[...]
        return net, flow + dflow

    _, flow_fin = jax.lax.fori_loop(
        0, iters, body, (net0, jnp.zeros((hw, 2), f32)))
    flow_ref[0] = flow_fin             # written once, after all iterations


def gma_update(params, fmap1, fmap2, net0, inp, iters):
    """One pallas_call: corr + attention + `iters` GRU updates, grid over batch."""
    N, HW, _ = fmap1.shape

    def batched(d):
        return pl.BlockSpec((1, HW, d), lambda n: (n, 0, 0))

    def full(shape):
        nd = len(shape)
        return pl.BlockSpec(tuple(shape), lambda n, nd=nd: (0,) * nd)

    weights = (
        params["wqk"], params["bqk"].reshape(1, -1),
        params["wm_corr"], params["wm_flow"], params["bm"].reshape(1, -1),
        params["wv"], params["bv"].reshape(1, -1),
        params["wp"], params["bp"].reshape(1, -1),
        params["wzr_net"], params["wzr_inp"], params["wzr_mot"], params["wzr_mg"],
        params["bzr"].reshape(1, -1),
        params["wh_net"], params["wh_inp"], params["wh_mot"], params["wh_mg"],
        params["bh"].reshape(1, -1),
        params["wf"], params["bf"].reshape(1, -1),
        params["gamma"],
    )
    in_specs = [batched(FDIM), batched(FDIM), batched(HDIM), batched(CDIM)]
    in_specs += [full(w.shape) for w in weights]

    # TODO(synk): for large HW the (HW, HW) correlation/attention matrices must
    # be tiled (online softmax / k-tiled aggregation) to fit v7x's 64 MiB VMEM.
    return pl.pallas_call(
        functools.partial(
            _gma_update_kernel, iters=iters,
            fscale=float(FDIM) ** -0.5, ascale=float(DK) ** -0.5),
        out_shape=jax.ShapeDtypeStruct((N, HW, 2), jnp.float32),
        grid=(N,),
        in_specs=in_specs,
        out_specs=pl.BlockSpec((1, HW, 2), lambda n: (n, 0, 0)),
        compiler_params=pltpu.CompilerParams(
            dimension_semantics=("parallel",)),
    )(fmap1, fmap2, net0, inp, *weights)


# ----------------------------- plain-JAX glue --------------------------------
def patchify(img, p=PATCH):
    """NCHW image -> (N*H/p*W/p, C*p*p) patch matrix (stride-p conv im2col)."""
    N, C, H, W = img.shape
    x = img.reshape(N, C, H // p, p, W // p, p)
    x = x.transpose(0, 2, 4, 1, 3, 5)          # N, H8, W8, C, p, p
    return x.reshape(N * (H // p) * (W // p), C * p * p)


def init_params(key, hw):
    def dense(k, fan_in, fan_out):
        return (jax.random.normal(k, (fan_in, fan_out), jnp.float32)
                / jnp.sqrt(jnp.float32(fan_in)))

    ks = jax.random.split(key, 12)
    kpatch = 3 * PATCH * PATCH
    gru_in = HDIM + CDIM + MDIM + MDIM         # [net, inp, motion, motion_global]

    wm = dense(ks[2], hw + 2, MDIM)            # motion encoder (corr || flow)
    wzr = dense(ks[5], gru_in, 2 * HDIM)       # fused z||r gates
    wh = dense(ks[6], gru_in, HDIM)

    def split_gru(w):
        return (w[:HDIM], w[HDIM:HDIM + CDIM],
                w[HDIM + CDIM:HDIM + CDIM + MDIM],
                w[HDIM + CDIM + MDIM:])

    wzr_net, wzr_inp, wzr_mot, wzr_mg = split_gru(wzr)
    wh_net, wh_inp, wh_mot, wh_mg = split_gru(wh)

    return {
        "fnet_w": dense(ks[0], kpatch, FDIM), "fnet_b": jnp.zeros((FDIM,)),
        "cnet_w": dense(ks[1], kpatch, HDIM + CDIM),
        "cnet_b": jnp.zeros((HDIM + CDIM,)),
        "wqk": dense(ks[3], CDIM, 2 * DK), "bqk": jnp.zeros((2 * DK,)),
        "wm_corr": wm[:hw], "wm_flow": wm[hw:], "bm": jnp.zeros((MDIM,)),
        "wv": dense(ks[4], MDIM, MDIM), "bv": jnp.zeros((MDIM,)),
        "wp": dense(ks[7], MDIM, MDIM), "bp": jnp.zeros((MDIM,)),
        "wzr_net": wzr_net, "wzr_inp": wzr_inp, "wzr_mot": wzr_mot,
        "wzr_mg": wzr_mg, "bzr": jnp.zeros((2 * HDIM,)),
        "wh_net": wh_net, "wh_inp": wh_inp, "wh_mot": wh_mot,
        "wh_mg": wh_mg, "bh": jnp.zeros((HDIM,)),
        "wf": dense(ks[8], HDIM, 2), "bf": jnp.zeros((2,)),
        "gamma": jnp.full((1, 1), GAMMA_INIT, jnp.float32),
    }


def gma_forward(params, image1, image2, iters=12, test_mode=True):
    N, C, H, W = image1.shape
    H8, W8 = H // PATCH, W // PATCH
    HW = H8 * W8

    # RAFT input normalization: 2*(x/255) - 1
    image1 = 2.0 * (image1.astype(jnp.float32) / 255.0) - 1.0
    image2 = 2.0 * (image2.astype(jnp.float32) / 255.0) - 1.0

    # ---- encoders ----
    # TODO(synk): real BasicEncoder is a 6-residual-block CNN; reduced to one
    # 8x8/stride-8 patch conv. Feature+context encoders for image1 are fused
    # into a single lane-dense (K, 128) matmul.
    enc1_w = jnp.concatenate([params["fnet_w"], params["cnet_w"]], axis=1)
    enc1_b = jnp.concatenate([params["fnet_b"], params["cnet_b"]], axis=0)
    enc1 = linear(patchify(image1), enc1_w, enc1_b, act="ctx")       # (N*HW, 128)
    f2 = linear(patchify(image2), params["fnet_w"], params["fnet_b"], act="relu")

    fmap1 = enc1[:, :FDIM].reshape(N, HW, FDIM)
    net0 = enc1[:, FDIM:FDIM + HDIM].reshape(N, HW, HDIM)   # tanh applied in-kernel
    inp = enc1[:, FDIM + HDIM:].reshape(N, HW, CDIM)        # relu applied in-kernel
    fmap2 = f2.reshape(N, HW, FDIM)

    # ---- correlation + GMA attention + iterative GRU updates (one kernel) ----
    flow = gma_update(params, fmap1, fmap2, net0, inp, iters)        # (N, HW, 2)

    flow_low = flow.reshape(N, H8, W8, 2).transpose(0, 3, 1, 2)      # NCHW, 1/8 res
    # TODO(synk): GMA uses learned convex upsampling; bilinear x8 used instead.
    flow_up = 8.0 * jax.image.resize(flow_low, (N, 2, H, W), method="bilinear")

    if test_mode:
        return flow_low, flow_up
    return flow_up


# ----------------------------- driver ----------------------------------------
if __name__ == "__main__":
    N, C, H, W = 2, 3, 64, 64
    HW = (H // PATCH) * (W // PATCH)

    key = jax.random.PRNGKey(0)
    k1, k2 = jax.random.split(key)
    image1 = jax.random.uniform(k1, (N, C, H, W), jnp.float32, 0.0, 255.0)
    image2 = jax.random.uniform(k2, (N, C, H, W), jnp.float32, 0.0, 255.0)

    params = init_params(jax.random.PRNGKey(42), HW)

    fwd = jax.jit(gma_forward, static_argnames=("iters", "test_mode"))
    flow_low, flow_up = fwd(params, image1, image2, iters=12, test_mode=True)
    jax.block_until_ready((flow_low, flow_up))

    assert flow_low.shape == (N, 2, H // PATCH, W // PATCH)
    assert flow_up.shape == (N, 2, H, W)
    assert jnp.all(jnp.isfinite(flow_up))
    print("KERNEL_OK")
</pallas_src>

<mosaic_0001>
module attributes {stable_mosaic.version = 11 : i64} {
  func.func @_linear_kernel(%arg0: i32, %arg1: memref<128x192xf32, #tpu.memory_space<vmem>>, %arg2: memref<192x128xf32, #tpu.memory_space<vmem>>, %arg3: memref<1x128xf32, #tpu.memory_space<vmem>>, %arg4: memref<128x128xf32, #tpu.memory_space<vmem>>) attributes {dimension_semantics = [#tpu.dimension_semantics<parallel>], iteration_bounds = array<i64: 1>, scalar_prefetch = 0 : i64, scratch_operands = 0 : i64, tpu.core_type = #tpu.core_type<tc>, window_params = [{transform_indices = @transform_0, window_bounds = array<i64: 128, 192>}, {pipeline_mode = #tpu.pipeline_mode<synchronous>, transform_indices = @transform_1, window_bounds = array<i64: 192, 128>}, {pipeline_mode = #tpu.pipeline_mode<synchronous>, transform_indices = @transform_2, window_bounds = array<i64: 1, 128>}, {transform_indices = @transform_3, window_bounds = array<i64: 128, 128>}]} {
    %c0 = arith.constant 0 : index
    %c0_0 = arith.constant 0 : index
    %0 = vector.load %arg1[%c0, %c0_0] : memref<128x192xf32, #tpu.memory_space<vmem>>, vector<128x192xf32>
    %c0_1 = arith.constant 0 : index
    %c0_2 = arith.constant 0 : index
    %1 = vector.load %arg2[%c0_1, %c0_2] : memref<192x128xf32, #tpu.memory_space<vmem>>, vector<192x128xf32>
    %cst = arith.constant dense<0.000000e+00> : vector<128x128xf32>
    %2 = tpu.matmul %0, %1, %cst {dimension_numbers = #tpu.dot_dimension_numbers<[1], [0], [0], [1], [0, 0, 1, 1], [], []>} : vector<128x192xf32>, vector<192x128xf32>, vector<128x128xf32> -> vector<128x128xf32>
    %c0_3 = arith.constant 0 : index
    %c0_4 = arith.constant 0 : index
    %3 = vector.load %arg3[%c0_3, %c0_4] : memref<1x128xf32, #tpu.memory_space<vmem>>, vector<1x128xf32>
    %4 = vector.broadcast %3 : vector<1x128xf32> to vector<128x128xf32>
    %5 = arith.addf %2, %4 : vector<128x128xf32>
    %6 = tpu.iota {dimensions = array<i32: 1>} : vector<128x128xi32>
    %c64_i32 = arith.constant 64 : i32
    %7 = vector.broadcast %c64_i32 : i32 to vector<128x128xi32>
    %8 = arith.cmpi sge, %6, %7 : vector<128x128xi32>
    %c96_i32 = arith.constant 96 : i32
    %9 = vector.broadcast %c96_i32 : i32 to vector<128x128xi32>
    %10 = arith.cmpi slt, %6, %9 : vector<128x128xi32>
    %11 = arith.andi %8, %10 : vector<128x128xi1>
    %12 = math.tanh %5 : vector<128x128xf32>
    %cst_5 = arith.constant 0.000000e+00 : f32
    %13 = vector.broadcast %cst_5 : f32 to vector<128x128xf32>
    %14 = arith.maximumf %5, %13 : vector<128x128xf32>
    %15 = arith.select %11, %12, %14 : vector<128x128xi1>, vector<128x128xf32>
    %c0_6 = arith.constant 0 : index
    %c0_7 = arith.constant 0 : index
    %16 = vector.load %arg4[%c0_6, %c0_7] : memref<128x128xf32, #tpu.memory_space<vmem>>, vector<128x128xf32>
    tpu.vector_store %arg4[%c0_6, %c0_7], %15 {strides = array<i32>} : memref<128x128xf32, #tpu.memory_space<vmem>>, vector<128x128xf32>,
    return
  }
  func.func @transform_0(%arg0: i32) -> (i32, i32) {
    %c0_i32 = arith.constant 0 : i32
    %c0_i32_0 = arith.constant 0 : i32
    return %arg0, %c0_i32 : i32, i32
  }
  func.func @transform_1(%arg0: i32) -> (i32, i32) {
    %c0_i32 = arith.constant 0 : i32
    %c0_i32_0 = arith.constant 0 : i32
    %c0_i32_1 = arith.constant 0 : i32
    return %c0_i32, %c0_i32_0 : i32, i32
  }
  func.func @transform_2(%arg0: i32) -> (i32, i32) {
    %c0_i32 = arith.constant 0 : i32
    %c0_i32_0 = arith.constant 0 : i32
    %c0_i32_1 = arith.constant 0 : i32
    return %c0_i32, %c0_i32_0 : i32, i32
  }
  func.func @transform_3(%arg0: i32) -> (i32, i32) {
    %c0_i32 = arith.constant 0 : i32
    %c0_i32_0 = arith.constant 0 : i32
    return %arg0, %c0_i32 : i32, i32
  }
}

module attributes {stable_mosaic.version = 11 : i64} {
  func.func @_linear_kernel(%arg0: i32, %arg1: memref<128x192xf32, #tpu.memory_space<vmem>>, %arg2: memref<192x64xf32, #tpu.memory_space<vmem>>, %arg3: memref<1x64xf32, #tpu.memory_space<vmem>>, %arg4: memref<128x64xf32, #tpu.memory_space<vmem>>) attributes {dimension_semantics = [#tpu.dimension_semantics<parallel>], iteration_bounds = array<i64: 1>, scalar_prefetch = 0 : i64, scratch_operands = 0 : i64, tpu.core_type = #tpu.core_type<tc>, window_params = [{transform_indices = @transform_0, window_bounds = array<i64: 128, 192>}, {pipeline_mode = #tpu.pipeline_mode<synchronous>, transform_indices = @transform_1, window_bounds = array<i64: 192, 64>}, {pipeline_mode = #tpu.pipeline_mode<synchronous>, transform_indices = @transform_2, window_bounds = array<i64: 1, 64>}, {transform_indices = @transform_3, window_bounds = array<i64: 128, 64>}]} {
    %c0 = arith.constant 0 : index
    %c0_0 = arith.constant 0 : index
    %0 = vector.load %arg1[%c0, %c0_0] : memref<128x192xf32, #tpu.memory_space<vmem>>, vector<128x192xf32>
    %c0_1 = arith.constant 0 : index
    %c0_2 = arith.constant 0 : index
    %1 = vector.load %arg2[%c0_1, %c0_2] : memref<192x64xf32, #tpu.memory_space<vmem>>, vector<192x64xf32>
    %cst = arith.constant dense<0.000000e+00> : vector<128x64xf32>
    %2 = tpu.matmul %0, %1, %cst {dimension_numbers = #tpu.dot_dimension_numbers<[1], [0], [0], [1], [0, 0, 1, 1], [], []>} : vector<128x192xf32>, vector<192x64xf32>, vector<128x64xf32> -> vector<128x64xf32>
    %c0_3 = arith.constant 0 : index
    %c0_4 = arith.constant 0 : index
    %3 = vector.load %arg3[%c0_3, %c0_4] : memref<1x64xf32, #tpu.memory_space<vmem>>, vector<1x64xf32>
    %4 = vector.broadcast %3 : vector<1x64xf32> to vector<128x64xf32>
    %5 = arith.addf %2, %4 : vector<128x64xf32>
    %cst_5 = arith.constant 0.000000e+00 : f32
    %6 = vector.broadcast %cst_5 : f32 to vector<128x64xf32>
    %7 = arith.maximumf %5, %6 : vector<128x64xf32>
    %c0_6 = arith.constant 0 : index
    %c0_7 = arith.constant 0 : index
    %8 = vector.load %arg4[%c0_6, %c0_7] : memref<128x64xf32, #tpu.memory_space<vmem>>, vector<128x64xf32>
    tpu.vector_store %arg4[%c0_6, %c0_7], %7 {strides = array<i32>} : memref<128x64xf32, #tpu.memory_space<vmem>>, vector<128x64xf32>,
    return
  }
  func.func @transform_0(%arg0: i32) -> (i32, i32) {
    %c0_i32 = arith.constant 0 : i32
    %c0_i32_0 = arith.constant 0 : i32
    return %arg0, %c0_i32 : i32, i32
  }
  func.func @transform_1(%arg0: i32) -> (i32, i32) {
    %c0_i32 = arith.constant 0 : i32
    %c0_i32_0 = arith.constant 0 : i32
    %c0_i32_1 = arith.constant 0 : i32
    return %c0_i32, %c0_i32_0 : i32, i32
  }
  func.func @transform_2(%arg0: i32) -> (i32, i32) {
    %c0_i32 = arith.constant 0 : i32
    %c0_i32_0 = arith.constant 0 : i32
    %c0_i32_1 = arith.constant 0 : i32
    return %c0_i32, %c0_i32_0 : i32, i32
  }
  func.func @transform_3(%arg0: i32) -> (i32, i32) {
    %c0_i32 = arith.constant 0 : i32
    %c0_i32_0 = arith.constant 0 : i32
    return %arg0, %c0_i32 : i32, i32
  }
}

module attributes {stable_mosaic.version = 11 : i64} {
  func.func @_gma_update_kernel(%arg0: i32, %arg1: memref<1x64x64xf32, #tpu.memory_space<vmem>>, %arg2: memref<1x64x64xf32, #tpu.memory_space<vmem>>, %arg3: memref<1x64x32xf32, #tpu.memory_space<vmem>>, %arg4: memref<1x64x32xf32, #tpu.memory_space<vmem>>, %arg5: memref<32x64xf32, #tpu.memory_space<vmem>>, %arg6: memref<1x64xf32, #tpu.memory_space<vmem>>, %arg7: memref<64x32xf32, #tpu.memory_space<vmem>>, %arg8: memref<2x32xf32, #tpu.memory_space<vmem>>, %arg9: memref<1x32xf32, #tpu.memory_space<vmem>>, %arg10: memref<32x32xf32, #tpu.memory_space<vmem>>, %arg11: memref<1x32xf32, #tpu.memory_space<vmem>>, %arg12: memref<32x32xf32, #tpu.memory_space<vmem>>, %arg13: memref<1x32xf32, #tpu.memory_space<vmem>>, %arg14: memref<32x64xf32, #tpu.memory_space<vmem>>, %arg15: memref<32x64xf32, #tpu.memory_space<vmem>>, %arg16: memref<32x64xf32, #tpu.memory_space<vmem>>, %arg17: memref<32x64xf32, #tpu.memory_space<vmem>>, %arg18: memref<1x64xf32, #tpu.memory_space<vmem>>, %arg19: memref<32x32xf32, #tpu.memory_space<vmem>>, %arg20: memref<32x32xf32, #tpu.memory_space<vmem>>, %arg21: memref<32x32xf32, #tpu.memory_space<vmem>>, %arg22: memref<32x32xf32, #tpu.memory_space<vmem>>, %arg23: memref<1x32xf32, #tpu.memory_space<vmem>>, %arg24: memref<32x2xf32, #tpu.memory_space<vmem>>, %arg25: memref<1x2xf32, #tpu.memory_space<vmem>>, %arg26: memref<1x1xf32, #tpu.memory_space<vmem>>, %arg27: memref<1x64x2xf32, #tpu.memory_space<vmem>>) attributes {dimension_semantics = [#tpu.dimension_semantics<parallel>], iteration_bounds = array<i64: 2>, scalar_prefetch = 0 : i64, scratch_operands = 0 : i64, tpu.core_type = #tpu.core_type<tc>, window_params = [{transform_indices = @transform_0, window_bounds = array<i64: 1, 64, 64>}, {transform_indices = @transform_1, window_bounds = array<i64: 1, 64, 64>}, {transform_indices = @transform_2, window_bounds = array<i64: 1, 64, 32>}, {transform_indices = @transform_3, window_bounds = array<i64: 1, 64, 32>}, {pipeline_mode = #tpu.pipeline_mode<synchronous>, transform_indices = @transform_4, window_bounds = array<i64: 32, 64>}, {pipeline_mode = #tpu.pipeline_mode<synchronous>, transform_indices = @transform_5, window_bounds = array<i64: 1, 64>}, {pipeline_mode = #tpu.pipeline_mode<synchronous>, transform_indices = @transform_6, window_bounds = array<i64: 64, 32>}, {pipeline_mode = #tpu.pipeline_mode<synchronous>, transform_indices = @transform_7, window_bounds = array<i64: 2, 32>}, {pipeline_mode = #tpu.pipeline_mode<synchronous>, transform_indices = @transform_8, window_bounds = array<i64: 1, 32>}, {pipeline_mode = #tpu.pipeline_mode<synchronous>, transform_indices = @transform_9, window_bounds = array<i64: 32, 32>}, {pipeline_mode = #tpu.pipeline_mode<synchronous>, transform_indices = @transform_10, window_bounds = array<i64: 1, 32>}, {pipeline_mode = #tpu.pipeline_mode<synchronous>, transform_indices = @transform_11, window_bounds = array<i64: 32, 32>}, {pipeline_mode = #tpu.pipeline_mode<synchronous>, transform_indices = @transform_12, window_bounds = array<i64: 1, 32>}, {pipeline_mode = #tpu.pipeline_mode<synchronous>, transform_indices = @transform_13, window_bounds = array<i64: 32, 64>}, {pipeline_mode = #tpu.pipeline_mode<synchronous>, transform_indices = @transform_14, window_bounds = array<i64: 32, 64>}, {pipeline_mode = #tpu.pipeline_mode<synchronous>, transform_indices = @transform_15, window_bounds = array<i64: 32, 64>}, {pipeline_mode = #tpu.pipeline_mode<synchronous>, transform_indices = @transform_16, window_bounds = array<i64: 32, 64>}, {pipeline_mode = #tpu.pipeline_mode<synchronous>, transform_indices = @transform_17, window_bounds = array<i64: 1, 64>}, {pipeline_mode = #tpu.pipeline_mode<synchronous>, transform_indices = @transform_18, window_bounds = array<i64: 32, 32>}, {pipeline_mode = #tpu.pipeline_mode<synchronous>, transform_indices = @transform_19, window_bounds = array<i64: 32, 32>}, {pipeline_mode = #tpu.pipeline_mode<synchronous>, transform_indices = @transform_20, window_bounds = array<i64: 32, 32>}, {pipeline_mode = #tpu.pipeline_mode<synchronous>, transform_indices = @transform_21, window_bounds = array<i64: 32, 32>}, {pipeline_mode = #tpu.pipeline_mode<synchronous>, transform_indices = @transform_22, window_bounds = array<i64: 1, 32>}, {pipeline_mode = #tpu.pipeline_mode<synchronous>, transform_indices = @transform_23, window_bounds = array<i64: 32, 2>}, {pipeline_mode = #tpu.pipeline_mode<synchronous>, transform_indices = @transform_24, window_bounds = array<i64: 1, 2>}, {pipeline_mode = #tpu.pipeline_mode<synchronous>, transform_indices = @transform_25, window_bounds = array<i64: 1, 1>}, {transform_indices = @transform_26, window_bounds = array<i64: 1, 64, 2>}]} {
    %c0 = arith.constant 0 : index
    %c0_0 = arith.constant 0 : index
    %c0_1 = arith.constant 0 : index
    %0 = vector.load %arg1[%c0, %c0_0, %c0_1] : memref<1x64x64xf32, #tpu.memory_space<vmem>>, vector<1x64x64xf32>
    %1 = vector.shape_cast %0 : vector<1x64x64xf32> to vector<64x64xf32>
    %2 = arith.truncf %1 : vector<64x64xf32> to vector<64x64xbf16>
    %c0_2 = arith.constant 0 : index
    %c0_3 = arith.constant 0 : index
    %c0_4 = arith.constant 0 : index
    %3 = vector.load %arg2[%c0_2, %c0_3, %c0_4] : memref<1x64x64xf32, #tpu.memory_space<vmem>>, vector<1x64x64xf32>
    %4 = vector.shape_cast %3 : vector<1x64x64xf32> to vector<64x64xf32>
    %5 = arith.truncf %4 : vector<64x64xf32> to vector<64x64xbf16>
    %c0_5 = arith.constant 0 : index
    %c0_6 = arith.constant 0 : index
    %c0_7 = arith.constant 0 : index
    %6 = vector.load %arg3[%c0_5, %c0_6, %c0_7] : memref<1x64x32xf32, #tpu.memory_space<vmem>>, vector<1x64x32xf32>
    %7 = vector.shape_cast %6 : vector<1x64x32xf32> to vector<64x32xf32>
    %c0_8 = arith.constant 0 : index
    %c0_9 = arith.constant 0 : index
    %c0_10 = arith.constant 0 : index
    %8 = vector.load %arg4[%c0_8, %c0_9, %c0_10] : memref<1x64x32xf32, #tpu.memory_space<vmem>>, vector<1x64x32xf32>
    %9 = vector.shape_cast %8 : vector<1x64x32xf32> to vector<64x32xf32>
    %cst = arith.constant dense<0.000000e+00> : vector<64x64xf32>
    %10 = tpu.matmul %2, %5, %cst {dimension_numbers = #tpu.dot_dimension_numbers<[1], [1], [0], [0], [0, 0, 1, 0], [], []>} : vector<64x64xbf16>, vector<64x64xbf16>, vector<64x64xf32> -> vector<64x64xf32>
    %cst_11 = arith.constant 1.250000e-01 : f32
    %11 = vector.broadcast %cst_11 : f32 to vector<64x64xf32>
    %12 = arith.mulf %10, %11 : vector<64x64xf32>
    %13 = arith.truncf %12 : vector<64x64xf32> to vector<64x64xbf16>
    %c0_12 = arith.constant 0 : index
    %c0_13 = arith.constant 0 : index
    %14 = vector.load %arg7[%c0_12, %c0_13] : memref<64x32xf32, #tpu.memory_space<vmem>>, vector<64x32xf32>
    %15 = arith.truncf %14 : vector<64x32xf32> to vector<64x32xbf16>
    %cst_14 = arith.constant dense<0.000000e+00> : vector<64x32xf32>
    %16 = tpu.matmul %13, %15, %cst_14 {dimension_numbers = #tpu.dot_dimension_numbers<[1], [0], [0], [1], [0, 0, 1, 1], [], []>} : vector<64x64xbf16>, vector<64x32xbf16>, vector<64x32xf32> -> vector<64x32xf32>
    %c0_15 = arith.constant 0 : index
    %c0_16 = arith.constant 0 : index
    %17 = vector.load %arg9[%c0_15, %c0_16] : memref<1x32xf32, #tpu.memory_space<vmem>>, vector<1x32xf32>
    %18 = vector.broadcast %17 : vector<1x32xf32> to vector<64x32xf32>
    %19 = arith.addf %16, %18 : vector<64x32xf32>
    %c0_17 = arith.constant 0 : index
    %c0_18 = arith.constant 0 : index
    %20 = vector.load %arg5[%c0_17, %c0_18] : memref<32x64xf32, #tpu.memory_space<vmem>>, vector<32x64xf32>
    %cst_19 = arith.constant dense<0.000000e+00> : vector<64x64xf32>
    %21 = tpu.matmul %9, %20, %cst_19 {dimension_numbers = #tpu.dot_dimension_numbers<[1], [0], [0], [1], [0, 0, 1, 1], [], []>} : vector<64x32xf32>, vector<32x64xf32>, vector<64x64xf32> -> vector<64x64xf32>
    %c0_20 = arith.constant 0 : index
    %c0_21 = arith.constant 0 : index
    %22 = vector.load %arg6[%c0_20, %c0_21] : memref<1x64xf32, #tpu.memory_space<vmem>>, vector<1x64xf32>
    %23 = vector.broadcast %22 : vector<1x64xf32> to vector<64x64xf32>
    %24 = arith.addf %21, %23 : vector<64x64xf32>
    %25 = vector.extract_strided_slice %24 {offsets = [0, 0], sizes = [64, 32], strides = [1, 1]} : vector<64x64xf32> to vector<64x32xf32>
    %26 = vector.extract_strided_slice %24 {offsets = [0, 32], sizes = [64, 32], strides = [1, 1]} : vector<64x64xf32> to vector<64x32xf32>
    %cst_22 = arith.constant dense<0.000000e+00> : vector<64x64xf32>
    %27 = tpu.matmul %25, %26, %cst_22 {dimension_numbers = #tpu.dot_dimension_numbers<[1], [1], [0], [0], [0, 0, 1, 0], [], []>} : vector<64x32xf32>, vector<64x32xf32>, vector<64x64xf32> -> vector<64x64xf32>
    %cst_23 = arith.constant 0.176776692 : f32
    %28 = vector.broadcast %cst_23 : f32 to vector<64x64xf32>
    %29 = arith.mulf %27, %28 : vector<64x64xf32>
    %cst_24 = arith.constant dense<0xFF800000> : vector<64xf32>
    %30 = vector.multi_reduction <maximumf>, %29, %cst_24 [1] : vector<64x64xf32> to vector<64xf32>
    %31 = vector.shape_cast %30 : vector<64xf32> to vector<64x1xf32>
    %32 = vector.broadcast %31 : vector<64x1xf32> to vector<64x64xf32>
    %33 = arith.subf %29, %32 : vector<64x64xf32>
    %34 = math.exp %33 : vector<64x64xf32>
    %cst_25 = arith.constant dense<0.000000e+00> : vector<64xf32>
    %35 = vector.multi_reduction <add>, %34, %cst_25 [1] : vector<64x64xf32> to vector<64xf32>
    %36 = vector.shape_cast %35 : vector<64xf32> to vector<64x1xf32>
    %cst_26 = arith.constant 1.000000e+00 : f32
    %37 = vector.broadcast %cst_26 : f32 to vector<64x1xf32>
    %38 = arith.divf %37, %36 : vector<64x1xf32>
    %39 = arith.truncf %34 : vector<64x64xf32> to vector<64x64xbf16>
    %c0_27 = arith.constant 0 : index
    %c0_28 = arith.constant 0 : index
    %40 = vector.load %arg15[%c0_27, %c0_28] : memref<32x64xf32, #tpu.memory_space<vmem>>, vector<32x64xf32>
    %cst_29 = arith.constant dense<0.000000e+00> : vector<64x64xf32>
    %41 = tpu.matmul %9, %40, %cst_29 {dimension_numbers = #tpu.dot_dimension_numbers<[1], [0], [0], [1], [0, 0, 1, 1], [], []>} : vector<64x32xf32>, vector<32x64xf32>, vector<64x64xf32> -> vector<64x64xf32>
    %c0_30 = arith.constant 0 : index
    %c0_31 = arith.constant 0 : index
    %42 = vector.load %arg18[%c0_30, %c0_31] : memref<1x64xf32, #tpu.memory_space<vmem>>, vector<1x64xf32>
    %43 = vector.broadcast %42 : vector<1x64xf32> to vector<64x64xf32>
    %44 = arith.addf %41, %43 : vector<64x64xf32>
    %c0_32 = arith.constant 0 : index
    %c0_33 = arith.constant 0 : index
    %45 = vector.load %arg20[%c0_32, %c0_33] : memref<32x32xf32, #tpu.memory_space<vmem>>, vector<32x32xf32>
    %cst_34 = arith.constant dense<0.000000e+00> : vector<64x32xf32>
    %46 = tpu.matmul %9, %45, %cst_34 {dimension_numbers = #tpu.dot_dimension_numbers<[1], [0], [0], [1], [0, 0, 1, 1], [], []>} : vector<64x32xf32>, vector<32x32xf32>, vector<64x32xf32> -> vector<64x32xf32>
    %c0_35 = arith.constant 0 : index
    %c0_36 = arith.constant 0 : index
    %47 = vector.load %arg23[%c0_35, %c0_36] : memref<1x32xf32, #tpu.memory_space<vmem>>, vector<1x32xf32>
    %48 = vector.broadcast %47 : vector<1x32xf32> to vector<64x32xf32>
    %49 = arith.addf %46, %48 : vector<64x32xf32>
    %c0_37 = arith.constant 0 : index
    %c0_38 = arith.constant 0 : index
    %50 = vector.load %arg26[%c0_37, %c0_38] : memref<1x1xf32, #tpu.memory_space<vmem>>, vector<1x1xf32>
    %c0_39 = arith.constant 0 : index
    %c0_40 = arith.constant 0 : index
    %51 = vector.load %arg8[%c0_39, %c0_40] : memref<2x32xf32, #tpu.memory_space<vmem>>, vector<2x32xf32>
    %cst_41 = arith.constant 0.000000e+00 : f32
    %52 = vector.broadcast %cst_41 : f32 to vector<64x2xf32>
    %c0_i32 = arith.constant 0 : i32
    %c12_i32 = arith.constant 12 : i32
    %53 = arith.addi %c0_i32, %c12_i32 : i32
    %c1_i32 = arith.constant 1 : i32
    %54:2 = scf.for %arg28 = %c0_i32 to %53 step %c1_i32 iter_args(%arg29 = %7, %arg30 = %52) -> (vector<64x32xf32>, vector<64x2xf32>)  : i32 {
      %58 = vector.extract_strided_slice %arg30 {offsets = [0, 0], sizes = [64, 1], strides = [1, 1]} : vector<64x2xf32> to vector<64x1xf32>
      %59 = vector.extract_strided_slice %51 {offsets = [0, 0], sizes = [1, 32], strides = [1, 1]} : vector<2x32xf32> to vector<1x32xf32>
      %60 = vector.broadcast %58 : vector<64x1xf32> to vector<64x32xf32>
      %61 = vector.broadcast %59 : vector<1x32xf32> to vector<64x32xf32>
      %62 = arith.mulf %60, %61 : vector<64x32xf32>
      %63 = vector.extract_strided_slice %arg30 {offsets = [0, 1], sizes = [64, 1], strides = [1, 1]} : vector<64x2xf32> to vector<64x1xf32>
      %64 = vector.extract_strided_slice %51 {offsets = [1, 0], sizes = [1, 32], strides = [1, 1]} : vector<2x32xf32> to vector<1x32xf32>
      %65 = vector.broadcast %63 : vector<64x1xf32> to vector<64x32xf32>
      %66 = vector.broadcast %64 : vector<1x32xf32> to vector<64x32xf32>
      %67 = arith.mulf %65, %66 : vector<64x32xf32>
      %68 = arith.addf %62, %67 : vector<64x32xf32>
      %69 = arith.addf %19, %68 : vector<64x32xf32>
      %cst_45 = arith.constant 0.000000e+00 : f32
      %70 = vector.broadcast %cst_45 : f32 to vector<64x32xf32>
      %71 = arith.maximumf %69, %70 : vector<64x32xf32>
      %c0_46 = arith.constant 0 : index
      %c0_47 = arith.constant 0 : index
      %72 = vector.load %arg10[%c0_46, %c0_47] : memref<32x32xf32, #tpu.memory_space<vmem>>, vector<32x32xf32>
      %cst_48 = arith.constant dense<0.000000e+00> : vector<64x32xf32>
      %73 = tpu.matmul %71, %72, %cst_48 {dimension_numbers = #tpu.dot_dimension_numbers<[1], [0], [0], [1], [0, 0, 1, 1], [], []>} : vector<64x32xf32>, vector<32x32xf32>, vector<64x32xf32> -> vector<64x32xf32>
      %c0_49 = arith.constant 0 : index
      %c0_50 = arith.constant 0 : index
      %74 = vector.load %arg11[%c0_49, %c0_50] : memref<1x32xf32, #tpu.memory_space<vmem>>, vector<1x32xf32>
      %75 = vector.broadcast %74 : vector<1x32xf32> to vector<64x32xf32>
      %76 = arith.addf %73, %75 : vector<64x32xf32>
      %77 = arith.truncf %76 : vector<64x32xf32> to vector<64x32xbf16>
      %cst_51 = arith.constant dense<0.000000e+00> : vector<64x32xf32>
      %78 = tpu.matmul %39, %77, %cst_51 {dimension_numbers = #tpu.dot_dimension_numbers<[1], [0], [0], [1], [0, 0, 1, 1], [], []>} : vector<64x64xbf16>, vector<64x32xbf16>, vector<64x32xf32> -> vector<64x32xf32>
      %79 = vector.broadcast %38 : vector<64x1xf32> to vector<64x32xf32>
      %80 = arith.mulf %78, %79 : vector<64x32xf32>
      %c0_52 = arith.constant 0 : index
      %c0_53 = arith.constant 0 : index
      %81 = vector.load %arg12[%c0_52, %c0_53] : memref<32x32xf32, #tpu.memory_space<vmem>>, vector<32x32xf32>
      %cst_54 = arith.constant dense<0.000000e+00> : vector<64x32xf32>
      %82 = tpu.matmul %80, %81, %cst_54 {dimension_numbers = #tpu.dot_dimension_numbers<[1], [0], [0], [1], [0, 0, 1, 1], [], []>} : vector<64x32xf32>, vector<32x32xf32>, vector<64x32xf32> -> vector<64x32xf32>
      %c0_55 = arith.constant 0 : index
      %c0_56 = arith.constant 0 : index
      %83 = vector.load %arg13[%c0_55, %c0_56] : memref<1x32xf32, #tpu.memory_space<vmem>>, vector<1x32xf32>
      %84 = vector.broadcast %83 : vector<1x32xf32> to vector<64x32xf32>
      %85 = arith.addf %82, %84 : vector<64x32xf32>
      %86 = vector.broadcast %50 : vector<1x1xf32> to vector<64x32xf32>
      %87 = arith.mulf %86, %85 : vector<64x32xf32>
      %88 = arith.addf %71, %87 : vector<64x32xf32>
      %c0_57 = arith.constant 0 : index
      %c0_58 = arith.constant 0 : index
      %89 = vector.load %arg14[%c0_57, %c0_58] : memref<32x64xf32, #tpu.memory_space<vmem>>, vector<32x64xf32>
      %cst_59 = arith.constant dense<0.000000e+00> : vector<64x64xf32>
      %90 = tpu.matmul %arg29, %89, %cst_59 {dimension_numbers = #tpu.dot_dimension_numbers<[1], [0], [0], [1], [0, 0, 1, 1], [], []>} : vector<64x32xf32>, vector<32x64xf32>, vector<64x64xf32> -> vector<64x64xf32>
      %91 = arith.addf %44, %90 : vector<64x64xf32>
      %c0_60 = arith.constant 0 : index
      %c0_61 = arith.constant 0 : index
      %92 = vector.load %arg16[%c0_60, %c0_61] : memref<32x64xf32, #tpu.memory_space<vmem>>, vector<32x64xf32>
      %cst_62 = arith.constant dense<0.000000e+00> : vector<64x64xf32>
      %93 = tpu.matmul %71, %92, %cst_62 {dimension_numbers = #tpu.dot_dimension_numbers<[1], [0], [0], [1], [0, 0, 1, 1], [], []>} : vector<64x32xf32>, vector<32x64xf32>, vector<64x64xf32> -> vector<64x64xf32>
      %94 = arith.addf %91, %93 : vector<64x64xf32>
      %c0_63 = arith.constant 0 : index
      %c0_64 = arith.constant 0 : index
      %95 = vector.load %arg17[%c0_63, %c0_64] : memref<32x64xf32, #tpu.memory_space<vmem>>, vector<32x64xf32>
      %cst_65 = arith.constant dense<0.000000e+00> : vector<64x64xf32>
      %96 = tpu.matmul %88, %95, %cst_65 {dimension_numbers = #tpu.dot_dimension_numbers<[1], [0], [0], [1], [0, 0, 1, 1], [], []>} : vector<64x32xf32>, vector<32x64xf32>, vector<64x64xf32> -> vector<64x64xf32>
      %97 = arith.addf %94, %96 : vector<64x64xf32>
      %98 = arith.negf %97 : vector<64x64xf32>
      %99 = math.exp %98 : vector<64x64xf32>
      %cst_66 = arith.constant 1.000000e+00 : f32
      %100 = vector.broadcast %cst_66 : f32 to vector<64x64xf32>
      %101 = arith.addf %100, %99 : vector<64x64xf32>
      %102 = arith.divf %100, %101 : vector<64x64xf32>
      %103 = vector.extract_strided_slice %102 {offsets = [0, 0], sizes = [64, 32], strides = [1, 1]} : vector<64x64xf32> to vector<64x32xf32>
      %104 = vector.extract_strided_slice %102 {offsets = [0, 32], sizes = [64, 32], strides = [1, 1]} : vector<64x64xf32> to vector<64x32xf32>
      %105 = arith.mulf %104, %arg29 : vector<64x32xf32>
      %c0_67 = arith.constant 0 : index
      %c0_68 = arith.constant 0 : index
      %106 = vector.load %arg19[%c0_67, %c0_68] : memref<32x32xf32, #tpu.memory_space<vmem>>, vector<32x32xf32>
      %cst_69 = arith.constant dense<0.000000e+00> : vector<64x32xf32>
      %107 = tpu.matmul %105, %106, %cst_69 {dimension_numbers = #tpu.dot_dimension_numbers<[1], [0], [0], [1], [0, 0, 1, 1], [], []>} : vector<64x32xf32>, vector<32x32xf32>, vector<64x32xf32> -> vector<64x32xf32>
      %108 = arith.addf %49, %107 : vector<64x32xf32>
      %c0_70 = arith.constant 0 : index
      %c0_71 = arith.constant 0 : index
      %109 = vector.load %arg21[%c0_70, %c0_71] : memref<32x32xf32, #tpu.memory_space<vmem>>, vector<32x32xf32>
      %cst_72 = arith.constant dense<0.000000e+00> : vector<64x32xf32>
      %110 = tpu.matmul %71, %109, %cst_72 {dimension_numbers = #tpu.dot_dimension_numbers<[1], [0], [0], [1], [0, 0, 1, 1], [], []>} : vector<64x32xf32>, vector<32x32xf32>, vector<64x32xf32> -> vector<64x32xf32>
      %111 = arith.addf %108, %110 : vector<64x32xf32>
      %c0_73 = arith.constant 0 : index
      %c0_74 = arith.constant 0 : index
      %112 = vector.load %arg22[%c0_73, %c0_74] : memref<32x32xf32, #tpu.memory_space<vmem>>, vector<32x32xf32>
      %cst_75 = arith.constant dense<0.000000e+00> : vector<64x32xf32>
      %113 = tpu.matmul %88, %112, %cst_75 {dimension_numbers = #tpu.dot_dimension_numbers<[1], [0], [0], [1], [0, 0, 1, 1], [], []>} : vector<64x32xf32>, vector<32x32xf32>, vector<64x32xf32> -> vector<64x32xf32>
      %114 = arith.addf %111, %113 : vector<64x32xf32>
      %115 = math.tanh %114 : vector<64x32xf32>
      %cst_76 = arith.constant 1.000000e+00 : f32
      %116 = vector.broadcast %cst_76 : f32 to vector<64x32xf32>
      %117 = arith.subf %116, %103 : vector<64x32xf32>
      %118 = arith.mulf %117, %arg29 : vector<64x32xf32>
      %119 = arith.mulf %103, %115 : vector<64x32xf32>
      %120 = arith.addf %118, %119 : vector<64x32xf32>
      %c0_77 = arith.constant 0 : index
      %c0_78 = arith.constant 0 : index
      %121 = vector.load %arg24[%c0_77, %c0_78] : memref<32x2xf32, #tpu.memory_space<vmem>>, vector<32x2xf32>
      %cst_79 = arith.constant dense<0.000000e+00> : vector<64x2xf32>
      %122 = tpu.matmul %120, %121, %cst_79 {dimension_numbers = #tpu.dot_dimension_numbers<[1], [0], [0], [1], [0, 0, 1, 1], [], []>} : vector<64x32xf32>, vector<32x2xf32>, vector<64x2xf32> -> vector<64x2xf32>
      %c0_80 = arith.constant 0 : index
      %c0_81 = arith.constant 0 : index
      %123 = vector.load %arg25[%c0_80, %c0_81] : memref<1x2xf32, #tpu.memory_space<vmem>>, vector<1x2xf32>
      %124 = vector.broadcast %123 : vector<1x2xf32> to vector<64x2xf32>
      %125 = arith.addf %122, %124 : vector<64x2xf32>
      %126 = arith.addf %arg30, %125 : vector<64x2xf32>
      scf.yield %120, %126 : vector<64x32xf32>, vector<64x2xf32>
    }
    %c0_42 = arith.constant 0 : index
    %c0_43 = arith.constant 0 : index
    %c0_44 = arith.constant 0 : index
    %55 = vector.load %arg27[%c0_42, %c0_43, %c0_44] : memref<1x64x2xf32, #tpu.memory_space<vmem>>, vector<1x64x2xf32>
    %56 = vector.shape_cast %55 : vector<1x64x2xf32> to vector<64x2xf32>
    %57 = vector.shape_cast %54#1 : vector<64x2xf32> to vector<1x64x2xf32>
    tpu.vector_store %arg27[%c0_42, %c0_43, %c0_44], %57 {strides = array<i32>} : memref<1x64x2xf32, #tpu.memory_space<vmem>>, vector<1x64x2xf32>,
    return
  }
  func.func @transform_0(%arg0: i32) -> (i32, i32, i32) {
    %c0_i32 = arith.constant 0 : i32
    %c0_i32_0 = arith.constant 0 : i32
    %c0_i32_1 = arith.constant 0 : i32
    return %arg0, %c0_i32, %c0_i32_0 : i32, i32, i32
  }
  func.func @transform_1(%arg0: i32) -> (i32, i32, i32) {
    %c0_i32 = arith.constant 0 : i32
    %c0_i32_0 = arith.constant 0 : i32
    %c0_i32_1 = arith.constant 0 : i32
    return %arg0, %c0_i32, %c0_i32_0 : i32, i32, i32
  }
  func.func @transform_2(%arg0: i32) -> (i32, i32, i32) {
    %c0_i32 = arith.constant 0 : i32
    %c0_i32_0 = arith.constant 0 : i32
    %c0_i32_1 = arith.constant 0 : i32
    return %arg0, %c0_i32, %c0_i32_0 : i32, i32, i32
  }
  func.func @transform_3(%arg0: i32) -> (i32, i32, i32) {
    %c0_i32 = arith.constant 0 : i32
    %c0_i32_0 = arith.constant 0 : i32
    %c0_i32_1 = arith.constant 0 : i32
    return %arg0, %c0_i32, %c0_i32_0 : i32, i32, i32
  }
  func.func @transform_4(%arg0: i32) -> (i32, i32) {
    %c0_i32 = arith.constant 0 : i32
    %c0_i32_0 = arith.constant 0 : i32
    %c0_i32_1 = arith.constant 0 : i32
    return %c0_i32, %c0_i32_0 : i32, i32
  }
  func.func @transform_5(%arg0: i32) -> (i32, i32) {
    %c0_i32 = arith.constant 0 : i32
    %c0_i32_0 = arith.constant 0 : i32
    %c0_i32_1 = arith.constant 0 : i32
    return %c0_i32, %c0_i32_0 : i32, i32
  }
  func.func @transform_6(%arg0: i32) -> (i32, i32) {
    %c0_i32 = arith.constant 0 : i32
    %c0_i32_0 = arith.constant 0 : i32
    %c0_i32_1 = arith.constant 0 : i32
    return %c0_i32, %c0_i32_0 : i32, i32
  }
  func.func @transform_7(%arg0: i32) -> (i32, i32) {
    %c0_i32 = arith.constant 0 : i32
    %c0_i32_0 = arith.constant 0 : i32
    %c0_i32_1 = arith.constant 0 : i32
    return %c0_i32, %c0_i32_0 : i32, i32
  }
  func.func @transform_8(%arg0: i32) -> (i32, i32) {
    %c0_i32 = arith.constant 0 : i32
    %c0_i32_0 = arith.constant 0 : i32
    %c0_i32_1 = arith.constant 0 : i32
    return %c0_i32, %c0_i32_0 : i32, i32
  }
  func.func @transform_9(%arg0: i32) -> (i32, i32) {
    %c0_i32 = arith.constant 0 : i32
    %c0_i32_0 = arith.constant 0 : i32
    %c0_i32_1 = arith.constant 0 : i32
    return %c0_i32, %c0_i32_0 : i32, i32
  }
  func.func @transform_10(%arg0: i32) -> (i32, i32) {
    %c0_i32 = arith.constant 0 : i32
    %c0_i32_0 = arith.constant 0 : i32
    %c0_i32_1 = arith.constant 0 : i32
    return %c0_i32, %c0_i32_0 : i32, i32
  }
  func.func @transform_11(%arg0: i32) -> (i32, i32) {
    %c0_i32 = arith.constant 0 : i32
    %c0_i32_0 = arith.constant 0 : i32
    %c0_i32_1 = arith.constant 0 : i32
    return %c0_i32, %c0_i32_0 : i32, i32
  }
  func.func @transform_12(%arg0: i32) -> (i32, i32) {
    %c0_i32 = arith.constant 0 : i32
    %c0_i32_0 = arith.constant 0 : i32
    %c0_i32_1 = arith.constant 0 : i32
    return %c0_i32, %c0_i32_0 : i32, i32
  }
  func.func @transform_13(%arg0: i32) -> (i32, i32) {
    %c0_i32 = arith.constant 0 : i32
    %c0_i32_0 = arith.constant 0 : i32
    %c0_i32_1 = arith.constant 0 : i32
    return %c0_i32, %c0_i32_0 : i32, i32
  }
  func.func @transform_14(%arg0: i32) -> (i32, i32) {
    %c0_i32 = arith.constant 0 : i32
    %c0_i32_0 = arith.constant 0 : i32
    %c0_i32_1 = arith.constant 0 : i32
    return %c0_i32, %c0_i32_0 : i32, i32
  }
  func.func @transform_15(%arg0: i32) -> (i32, i32) {
    %c0_i32 = arith.constant 0 : i32
    %c0_i32_0 = arith.constant 0 : i32
    %c0_i32_1 = arith.constant 0 : i32
    return %c0_i32, %c0_i32_0 : i32, i32
  }
  func.func @transform_16(%arg0: i32) -> (i32, i32) {
    %c0_i32 = arith.constant 0 : i32
    %c0_i32_0 = arith.constant 0 : i32
    %c0_i32_1 = arith.constant 0 : i32
    return %c0_i32, %c0_i32_0 : i32, i32
  }
  func.func @transform_17(%arg0: i32) -> (i32, i32) {
    %c0_i32 = arith.constant 0 : i32
    %c0_i32_0 = arith.constant 0 : i32
    %c0_i32_1 = arith.constant 0 : i32
    return %c0_i32, %c0_i32_0 : i32, i32
  }
  func.func @transform_18(%arg0: i32) -> (i32, i32) {
    %c0_i32 = arith.constant 0 : i32
    %c0_i32_0 = arith.constant 0 : i32
    %c0_i32_1 = arith.constant 0 : i32
    return %c0_i32, %c0_i32_0 : i32, i32
  }
  func.func @transform_19(%arg0: i32) -> (i32, i32) {
    %c0_i32 = arith.constant 0 : i32
    %c0_i32_0 = arith.constant 0 : i32
    %c0_i32_1 = arith.constant 0 : i32
    return %c0_i32, %c0_i32_0 : i32, i32
  }
  func.func @transform_20(%arg0: i32) -> (i32, i32) {
    %c0_i32 = arith.constant 0 : i32
    %c0_i32_0 = arith.constant 0 : i32
    %c0_i32_1 = arith.constant 0 : i32
    return %c0_i32, %c0_i32_0 : i32, i32
  }
  func.func @transform_21(%arg0: i32) -> (i32, i32) {
    %c0_i32 = arith.constant 0 : i32
    %c0_i32_0 = arith.constant 0 : i32
    %c0_i32_1 = arith.constant 0 : i32
    return %c0_i32, %c0_i32_0 : i32, i32
  }
  func.func @transform_22(%arg0: i32) -> (i32, i32) {
    %c0_i32 = arith.constant 0 : i32
    %c0_i32_0 = arith.constant 0 : i32
    %c0_i32_1 = arith.constant 0 : i32
    return %c0_i32, %c0_i32_0 : i32, i32
  }
  func.func @transform_23(%arg0: i32) -> (i32, i32) {
    %c0_i32 = arith.constant 0 : i32
    %c0_i32_0 = arith.constant 0 : i32
    %c0_i32_1 = arith.constant 0 : i32
    return %c0_i32, %c0_i32_0 : i32, i32
  }
  func.func @transform_24(%arg0: i32) -> (i32, i32) {
    %c0_i32 = arith.constant 0 : i32
    %c0_i32_0 = arith.constant 0 : i32
    %c0_i32_1 = arith.constant 0 : i32
    return %c0_i32, %c0_i32_0 : i32, i32
  }
  func.func @transform_25(%arg0: i32) -> (i32, i32) {
    %c0_i32 = arith.constant 0 : i32
    %c0_i32_0 = arith.constant 0 : i32
    %c0_i32_1 = arith.constant 0 : i32
    return %c0_i32, %c0_i32_0 : i32, i32
  }
  func.func @transform_26(%arg0: i32) -> (i32, i32, i32) {
    %c0_i32 = arith.constant 0 : i32
    %c0_i32_0 = arith.constant 0 : i32
    %c0_i32_1 = arith.constant 0 : i32
    return %arg0, %c0_i32, %c0_i32_0 : i32, i32, i32
  }
}

</mosaic_0001>

<llo_original>
// kernel: gma_forward.3
$region0: #{gma_forward.3}
  #allocation0 [shape = 'u32[]', space=smem, size = 0x4, offset = 0x4, fixed_abs, tag = 'smem constant byte address 0x4 - core index']
  #allocation1 [shape = 'u32[72,128]{1,0:T(1,128)}', space=vmem, size = 0x9000, scoped, tag = 'internal scratch']
  %s0 = inlined_call_operand.vmem [shape: f32[128,192], index: 0, kind: input, shape index: {}]
  %s1 = inlined_call_operand.vmem [shape: f32[192,128], index: 1, kind: input, shape index: {}]
  %s2 = inlined_call_operand.vmem [shape: f32[1,128], index: 2, kind: input, shape index: {}]
  %s3 = inlined_call_operand.vmem [shape: f32[128,128], index: 3, kind: output, shape index: {}]
  %s4 = sld [smem:[#allocation0]]
  $region22: #{gma_forward.3} parent=0
    _
  %s6 = ssub.s32 1, %s4
  %s7 = scalar_select 0, %s6, %s4
  // Predicated region
  $region2: #{gma_forward.3} parent=0 // pred_check
    _
  $region3: #{gma_forward.3} parent=0 // pred_check_branch
    %9 = sbr.rel (0) target = $region5
  $region4: #{gma_forward.3} parent=0 // pred_region
    _
  $region5: #{gma_forward.3} parent=0 // pred_fallthru
    _
  // Predicated region
  $region6: #{gma_forward.3} parent=0 // pred_check
    _
  $region7: #{gma_forward.3} parent=0 // pred_check_branch
    %11 = sbr.rel (0) target = $region9
  $region8: #{gma_forward.3} parent=0 // pred_region
    _
  $region9: #{gma_forward.3} parent=0 // pred_fallthru
    _
  // Predicated region
  $region10: #{gma_forward.3} parent=0 // pred_check
    _
  $region11: #{gma_forward.3} parent=0 // pred_check_branch
    %13 = sbr.rel (0) target = $region13
  $region12: #{gma_forward.3} parent=0 // pred_region
    _
  $region13: #{gma_forward.3} parent=0 // pred_fallthru
    _
  %v14 = vld [vmem:[%s0] sm:$0xff]
  %v15 = vld [vmem:[%s0 + $0x8] sm:$0xff]
  %v16 = vld [vmem:[%s0 + $0x10] sm:$0xff]
  %v17 = vld [vmem:[%s0 + $0x18] sm:$0xff]
  %v18 = vld [vmem:[%s0 + $0x20] sm:$0xff]
  %v19 = vld [vmem:[%s0 + $0x28] sm:$0xff]
  %v20 = vld [vmem:[%s0 + $0x30] sm:$0xff]
  %v21 = vld [vmem:[%s0 + $0x38] sm:$0xff]
  %v22 = vld [vmem:[%s0 + $0x40] sm:$0xff]
  %v23 = vld [vmem:[%s0 + $0x48] sm:$0xff]
  %v24 = vld [vmem:[%s0 + $0x50] sm:$0xff]
  %v25 = vld [vmem:[%s0 + $0x58] sm:$0xff]
  %v26 = vld [vmem:[%s0 + $0x60] sm:$0xff]
  %v27 = vld [vmem:[%s0 + $0x68] sm:$0xff]
  %v28 = vld [vmem:[%s0 + $0x70] sm:$0xff]
  %v29 = vld [vmem:[%s0 + $0x78] sm:$0xff]
  %v30 = vld [vmem:[%s0 + $0x80] sm:$0xff]
  %v31 = vld [vmem:[%s0 + $0x88] sm:$0xff]
  %v32 = vld [vmem:[%s0 + $0x90] sm:$0xff]
  %v33 = vld [vmem:[%s0 + $0x98] sm:$0xff]
  %v34 = vld [vmem:[%s0 + $0xa0] sm:$0xff]
  %v35 = vld [vmem:[%s0 + $0xa8] sm:$0xff]
  %v36 = vld [vmem:[%s0 + $0xb0] sm:$0xff]
  %v37 = vld [vmem:[%s0 + $0xb8] sm:$0xff]
  %v38 = vld [vmem:[%s0 + $0xc0] sm:$0xff]
  %v39 = vld [vmem:[%s0 + $0xc8] sm:$0xff]
  %v40 = vld [vmem:[%s0 + $0xd0] sm:$0xff]
  %v41 = vld [vmem:[%s0 + $0xd8] sm:$0xff]
  %v42 = vld [vmem:[%s0 + $0xe0] sm:$0xff]
  %v43 = vld [vmem:[%s0 + $0xe8] sm:$0xff]
  %v44 = vld [vmem:[%s0 + $0xf0] sm:$0xff]
  %v45 = vld [vmem:[%s0 + $0xf8] sm:$0xff]
  %v46 = vld [vmem:[%s1] sm:$0xff]
  %v47 = vld [vmem:[%s1 + $0x8] sm:$0xff]
  %v48 = vld [vmem:[%s1 + $0x10] sm:$0xff]
  %v49 = vld [vmem:[%s1 + $0x18] sm:$0xff]
  %v50 = vld [vmem:[%s1 + $0x20] sm:$0xff]
  %v51 = vld [vmem:[%s1 + $0x28] sm:$0xff]
  %v52 = vld [vmem:[%s1 + $0x30] sm:$0xff]
  %v53 = vld [vmem:[%s1 + $0x38] sm:$0xff]
  %v54 = vld [vmem:[%s1 + $0x40] sm:$0xff]
  %v55 = vld [vmem:[%s1 + $0x48] sm:$0xff]
  %v56 = vld [vmem:[%s1 + $0x50] sm:$0xff]
  %v57 = vld [vmem:[%s1 + $0x58] sm:$0xff]
  %v58 = vld [vmem:[%s1 + $0x60] sm:$0xff]
  %v59 = vld [vmem:[%s1 + $0x68] sm:$0xff]
  %v60 = vld [vmem:[%s1 + $0x70] sm:$0xff]
  %v61 = vld [vmem:[%s1 + $0x78] sm:$0xff]
  %v62 = vld [vmem:[%s1 + $0x80] sm:$0xff]
  %v63 = vld [vmem:[%s1 + $0x88] sm:$0xff]
  %v64 = vld [vmem:[%s1 + $0x90] sm:$0xff]
  %v65 = vld [vmem:[%s1 + $0x98] sm:$0xff]
  %v66 = vld [vmem:[%s1 + $0xa0] sm:$0xff]
  %v67 = vld [vmem:[%s1 + $0xa8] sm:$0xff]
  %v68 = vld [vmem:[%s1 + $0xb0] sm:$0xff]
  %v69 = vld [vmem:[%s1 + $0xb8] sm:$0xff]
  %v70 = vld [vmem:[%s2] sm:$0x1]
  %v72 = vperm.slane %v70, 0
  %vm74 = vcmask 523264
  %v76 = vsel %vm74, %v15, 0
  %v79 = vsel %vm74, %v17, 0
  %v82 = vsel %vm74, %v19, 0
  %v85 = vsel %vm74, %v21, 0
  %v88 = vsel %vm74, %v23, 0
  %v91 = vsel %vm74, %v25, 0
  %v94 = vsel %vm74, %v27, 0
  %v97 = vsel %vm74, %v29, 0
  %v100 = vsel %vm74, %v31, 0
  %v103 = vsel %vm74, %v33, 0
  %v106 = vsel %vm74, %v35, 0
  %v109 = vsel %vm74, %v37, 0
  %v112 = vsel %vm74, %v39, 0
  %v115 = vsel %vm74, %v41, 0
  %v118 = vsel %vm74, %v43, 0
  %v121 = vsel %vm74, %v45, 0
  %123 = vmatpush.msra.mxu0 %v61
  %124 = vmatpush.msra.mxu0 %v60
  %125 = vmatpush.msra.mxu0 %v59
  %126 = vmatpush.msra.mxu0 %v58
  %127 = vmatpush.msra.mxu0 %v57
  %128 = vmatpush.msra.mxu0 %v56
  %129 = vmatpush.msra.mxu0 %v55
  %130 = vmatpush.msra.mxu0 %v54
  %131 = vmatpush.msra.mxu0 %v53
  %132 = vmatpush.msra.mxu0 %v52
  %133 = vmatpush.msra.mxu0 %v51
  %134 = vmatpush.msra.mxu0 %v50
  %135 = vmatpush.msra.mxu0 %v49
  %136 = vmatpush.msra.mxu0 %v48
  %137 = vmatpush.msra.mxu0 %v47
  %138 = vmatpush.msra.mxu0 %v46
  %139 = vmatmul.f32.gmra.mxu0 %v14
  %v140 = vpop.f32.mrf.mxu0
  %v141 = vadd.f32 %v72, %v140
  %142 = vmatmul.f32.gmra.mxu0 %v16
  %v143 = vpop.f32.mrf.mxu0
  %v144 = vadd.f32 %v72, %v143
  %145 = vmatmul.f32.gmra.mxu0 %v18
  %v146 = vpop.f32.mrf.mxu0
  %v147 = vadd.f32 %v72, %v146
  %148 = vmatmul.f32.gmra.mxu0 %v20
  %v149 = vpop.f32.mrf.mxu0
  %v150 = vadd.f32 %v72, %v149
  %151 = vmatmul.f32.gmra.mxu0 %v22
  %v152 = vpop.f32.mrf.mxu0
  %v153 = vadd.f32 %v72, %v152
  %154 = vmatmul.f32.gmra.mxu0 %v24
  %v155 = vpop.f32.mrf.mxu0
  %v156 = vadd.f32 %v72, %v155
  %157 = vmatmul.f32.gmra.mxu0 %v26
  %v158 = vpop.f32.mrf.mxu0
  %v159 = vadd.f32 %v72, %v158
  %160 = vmatmul.f32.gmra.mxu0 %v28
  %v161 = vpop.f32.mrf.mxu0
  %v162 = vadd.f32 %v72, %v161
  %163 = vmatmul.f32.gmra.mxu0 %v30
  %v164 = vpop.f32.mrf.mxu0
  %v165 = vadd.f32 %v72, %v164
  %166 = vmatmul.f32.gmra.mxu0 %v32
  %v167 = vpop.f32.mrf.mxu0
  %v168 = vadd.f32 %v72, %v167
  %169 = vmatmul.f32.gmra.mxu0 %v34
  %v170 = vpop.f32.mrf.mxu0
  %v171 = vadd.f32 %v72, %v170
  %172 = vmatmul.f32.gmra.mxu0 %v36
  %v173 = vpop.f32.mrf.mxu0
  %v174 = vadd.f32 %v72, %v173
  %175 = vmatmul.f32.gmra.mxu0 %v38
  %v176 = vpop.f32.mrf.mxu0
  %v177 = vadd.f32 %v72, %v176
  %178 = vmatmul.f32.gmra.mxu0 %v40
  %v179 = vpop.f32.mrf.mxu0
  %v180 = vadd.f32 %v72, %v179
  %181 = vmatmul.f32.gmra.mxu0 %v42
  %v182 = vpop.f32.mrf.mxu0
  %v183 = vadd.f32 %v72, %v182
  %184 = vmatmul.f32.gmra.mxu0 %v44
  %v185 = vpop.f32.mrf.mxu0
  %v186 = vadd.f32 %v72, %v185
  %187 = vdwg.mxu0
  %188 = vmatpush.msra.mxu0 0.0
  %189 = vmatpush.msra.mxu0 0.0
  %190 = vmatpush.msra.mxu0 0.0
  %191 = vmatpush.msra.mxu0 0.0
  %192 = vmatpush.msra.mxu0 0.0
  %193 = vmatpush.msra.mxu0 0.0
  %194 = vmatpush.msra.mxu0 0.0
  %195 = vmatpush.msra.mxu0 0.0
  %196 = vmatpush.msra.mxu0 %v69
  %197 = vmatpush.msra.mxu0 %v68
  %198 = vmatpush.msra.mxu0 %v67
  %199 = vmatpush.msra.mxu0 %v66
  %200 = vmatpush.msra.mxu0 %v65
  %201 = vmatpush.msra.mxu0 %v64
  %202 = vmatpush.msra.mxu0 %v63
  %203 = vmatpush.msra.mxu0 %v62
  %204 = vmatmul.f32.gmra.mxu0 %v76
  %v205 = vpop.f32.mrf.mxu0
  %v206 = vadd.f32 %v141, %v205
  %207 = vmatmul.f32.gmra.mxu0 %v79
  %v208 = vpop.f32.mrf.mxu0
  %v209 = vadd.f32 %v144, %v208
  %210 = vmatmul.f32.gmra.mxu0 %v82
  %v211 = vpop.f32.mrf.mxu0
  %v212 = vadd.f32 %v147, %v211
  %213 = vmatmul.f32.gmra.mxu0 %v85
  %v214 = vpop.f32.mrf.mxu0
  %v215 = vadd.f32 %v150, %v214
  %216 = vmatmul.f32.gmra.mxu0 %v88
  %v217 = vpop.f32.mrf.mxu0
  %v218 = vadd.f32 %v153, %v217
  %219 = vmatmul.f32.gmra.mxu0 %v91
  %v220 = vpop.f32.mrf.mxu0
  %v221 = vadd.f32 %v156, %v220
  %222 = vmatmul.f32.gmra.mxu0 %v94
  %v223 = vpop.f32.mrf.mxu0
  %v224 = vadd.f32 %v159, %v223
  %225 = vmatmul.f32.gmra.mxu0 %v97
  %v226 = vpop.f32.mrf.mxu0
  %v227 = vadd.f32 %v162, %v226
  %228 = vmatmul.f32.gmra.mxu0 %v100
  %v229 = vpop.f32.mrf.mxu0
  %v230 = vadd.f32 %v165, %v229
  %231 = vmatmul.f32.gmra.mxu0 %v103
  %v232 = vpop.f32.mrf.mxu0
  %v233 = vadd.f32 %v168, %v232
  %234 = vmatmul.f32.gmra.mxu0 %v106
  %v235 = vpop.f32.mrf.mxu0
  %v236 = vadd.f32 %v171, %v235
  %237 = vmatmul.f32.gmra.mxu0 %v109
  %v238 = vpop.f32.mrf.mxu0
  %v239 = vadd.f32 %v174, %v238
  %240 = vmatmul.f32.gmra.mxu0 %v112
  %v241 = vpop.f32.mrf.mxu0
  %v242 = vadd.f32 %v177, %v241
  %243 = vmatmul.f32.gmra.mxu0 %v115
  %v244 = vpop.f32.mrf.mxu0
  %v245 = vadd.f32 %v180, %v244
  %246 = vmatmul.f32.gmra.mxu0 %v118
  %v247 = vpop.f32.mrf.mxu0
  %v248 = vadd.f32 %v183, %v247
  %249 = vmatmul.f32.gmra.mxu0 %v121
  %v250 = vpop.f32.mrf.mxu0
  %v251 = vadd.f32 %v186, %v250
  %252 = vdwg.mxu0
  %v253 = vlaneseq
  %v254 = vand.u32 %v253, 127
  %vm255 = vcmp.ge.s32.totalorder %v254, 64
  %vm256 = vcmp.lt.s32.totalorder %v254, 96
  %vm257 = vmand %vm255, %vm256
  %v258 = vtanh.pop %v206
  %v259 = vtanh.pop %v209
  %v260 = vtanh.pop %v212
  %v261 = vtanh.pop %v215
  %v262 = vtanh.pop %v218
  %v263 = vtanh.pop %v221
  %v264 = vtanh.pop %v224
  %v265 = vtanh.pop %v227
  %v266 = vtanh.pop %v230
  %v267 = vtanh.pop %v233
  %v268 = vtanh.pop %v236
  %v269 = vtanh.pop %v239
  %v270 = vtanh.pop %v242
  %v271 = vtanh.pop %v245
  %v272 = vtanh.pop %v248
  %v273 = vtanh.pop %v251
  %v274 = vmax.f32 %v206, 0.0
  %v275 = vmax.f32 %v209, 0.0
  %v276 = vmax.f32 %v212, 0.0
  %v277 = vmax.f32 %v215, 0.0
  %v278 = vmax.f32 %v218, 0.0
  %v279 = vmax.f32 %v221, 0.0
  %v280 = vmax.f32 %v224, 0.0
  %v281 = vmax.f32 %v227, 0.0
  %v282 = vmax.f32 %v230, 0.0
  %v283 = vmax.f32 %v233, 0.0
  %v284 = vmax.f32 %v236, 0.0
  %v285 = vmax.f32 %v239, 0.0
  %v286 = vmax.f32 %v242, 0.0
  %v287 = vmax.f32 %v245, 0.0
  %v288 = vmax.f32 %v248, 0.0
  %v289 = vmax.f32 %v251, 0.0
  %v290 = vsel %vm257, %v258, %v274
  %v291 = vsel %vm257, %v259, %v275
  %v292 = vsel %vm257, %v260, %v276
  %v293 = vsel %vm257, %v261, %v277
  %v294 = vsel %vm257, %v262, %v278
  %v295 = vsel %vm257, %v263, %v279
  %v296 = vsel %vm257, %v264, %v280
  %v297 = vsel %vm257, %v265, %v281
  %v298 = vsel %vm257, %v266, %v282
  %v299 = vsel %vm257, %v267, %v283
  %v300 = vsel %vm257, %v268, %v284
  %v301 = vsel %vm257, %v269, %v285
  %v302 = vsel %vm257, %v270, %v286
  %v303 = vsel %vm257, %v271, %v287
  %v304 = vsel %vm257, %v272, %v288
  %v305 = vsel %vm257, %v273, %v289
  %306 = vst [vmem:[%s3] sm:$0xff] %v290
  %307 = vst [vmem:[%s3 + $0x8] sm:$0xff] %v291
  %308 = vst [vmem:[%s3 + $0x10] sm:$0xff] %v292
  %309 = vst [vmem:[%s3 + $0x18] sm:$0xff] %v293
  %310 = vst [vmem:[%s3 + $0x20] sm:$0xff] %v294
  %311 = vst [vmem:[%s3 + $0x28] sm:$0xff] %v295
  %312 = vst [vmem:[%s3 + $0x30] sm:$0xff] %v296
  %313 = vst [vmem:[%s3 + $0x38] sm:$0xff] %v297
  %314 = vst [vmem:[%s3 + $0x40] sm:$0xff] %v298
  %315 = vst [vmem:[%s3 + $0x48] sm:$0xff] %v299
  %316 = vst [vmem:[%s3 + $0x50] sm:$0xff] %v300
  %317 = vst [vmem:[%s3 + $0x58] sm:$0xff] %v301
  %318 = vst [vmem:[%s3 + $0x60] sm:$0xff] %v302
  %319 = vst [vmem:[%s3 + $0x68] sm:$0xff] %v303
  %320 = vst [vmem:[%s3 + $0x70] sm:$0xff] %v304
  %321 = vst [vmem:[%s3 + $0x78] sm:$0xff] %v305
  // Predicated region
  $region14: #{gma_forward.3} parent=0 // pred_check
    _
  $region15: #{gma_forward.3} parent=0 // pred_check_branch
    %323 = sbr.rel (0) target = $region17
  $region16: #{gma_forward.3} parent=0 // pred_region
    _
  $region17: #{gma_forward.3} parent=0 // pred_fallthru
    _
  // Predicated region
  $region18: #{gma_forward.3} parent=0 // pred_check
    _
  $region19: #{gma_forward.3} parent=0 // pred_check_branch
    %325 = sbr.rel (0) target = $region21
  $region20: #{gma_forward.3} parent=0 // pred_region
    _
  $region21: #{gma_forward.3} parent=0 // pred_fallthru
    _

// kernel: gma_forward.4
$region0: #{gma_forward.4}
  #allocation0 [shape = 'u32[]', space=smem, size = 0x4, offset = 0x4, fixed_abs, tag = 'smem constant byte address 0x4 - core index']
  #allocation1 [shape = 'u32[72,128]{1,0:T(1,128)}', space=vmem, size = 0x9000, scoped, tag = 'internal scratch']
  %s0 = inlined_call_operand.vmem [shape: f32[128,192], index: 0, kind: input, shape index: {}]
  %s1 = inlined_call_operand.vmem [shape: f32[192,64], index: 1, kind: input, shape index: {}]
  %s2 = inlined_call_operand.vmem [shape: f32[1,64], index: 2, kind: input, shape index: {}]
  %s3 = inlined_call_operand.vmem [shape: f32[128,64], index: 3, kind: output, shape index: {}]
  %s4 = sld [smem:[#allocation0]]
  $region22: #{gma_forward.4} parent=0
    _
  %s6 = ssub.s32 1, %s4
  %s7 = scalar_select 0, %s6, %s4
  // Predicated region
  $region2: #{gma_forward.4} parent=0 // pred_check
    _
  $region3: #{gma_forward.4} parent=0 // pred_check_branch
    %9 = sbr.rel (0) target = $region5
  $region4: #{gma_forward.4} parent=0 // pred_region
    _
  $region5: #{gma_forward.4} parent=0 // pred_fallthru
    _
  // Predicated region
  $region6: #{gma_forward.4} parent=0 // pred_check
    _
  $region7: #{gma_forward.4} parent=0 // pred_check_branch
    %11 = sbr.rel (0) target = $region9
  $region8: #{gma_forward.4} parent=0 // pred_region
    _
  $region9: #{gma_forward.4} parent=0 // pred_fallthru
    _
  // Predicated region
  $region10: #{gma_forward.4} parent=0 // pred_check
    _
  $region11: #{gma_forward.4} parent=0 // pred_check_branch
    %13 = sbr.rel (0) target = $region13
  $region12: #{gma_forward.4} parent=0 // pred_region
    _
  $region13: #{gma_forward.4} parent=0 // pred_fallthru
    _
  %v14 = vld [vmem:[%s0] sm:$0xff]
  %v15 = vld [vmem:[%s0 + $0x8] sm:$0xff]
  %v16 = vld [vmem:[%s0 + $0x10] sm:$0xff]
  %v17 = vld [vmem:[%s0 + $0x18] sm:$0xff]
  %v18 = vld [vmem:[%s0 + $0x20] sm:$0xff]
  %v19 = vld [vmem:[%s0 + $0x28] sm:$0xff]
  %v20 = vld [vmem:[%s0 + $0x30] sm:$0xff]
  %v21 = vld [vmem:[%s0 + $0x38] sm:$0xff]
  %v22 = vld [vmem:[%s0 + $0x40] sm:$0xff]
  %v23 = vld [vmem:[%s0 + $0x48] sm:$0xff]
  %v24 = vld [vmem:[%s0 + $0x50] sm:$0xff]
  %v25 = vld [vmem:[%s0 + $0x58] sm:$0xff]
  %v26 = vld [vmem:[%s0 + $0x60] sm:$0xff]
  %v27 = vld [vmem:[%s0 + $0x68] sm:$0xff]
  %v28 = vld [vmem:[%s0 + $0x70] sm:$0xff]
  %v29 = vld [vmem:[%s0 + $0x78] sm:$0xff]
  %v30 = vld [vmem:[%s0 + $0x80] sm:$0xff]
  %v31 = vld [vmem:[%s0 + $0x88] sm:$0xff]
  %v32 = vld [vmem:[%s0 + $0x90] sm:$0xff]
  %v33 = vld [vmem:[%s0 + $0x98] sm:$0xff]
  %v34 = vld [vmem:[%s0 + $0xa0] sm:$0xff]
  %v35 = vld [vmem:[%s0 + $0xa8] sm:$0xff]
  %v36 = vld [vmem:[%s0 + $0xb0] sm:$0xff]
  %v37 = vld [vmem:[%s0 + $0xb8] sm:$0xff]
  %v38 = vld [vmem:[%s0 + $0xc0] sm:$0xff]
  %v39 = vld [vmem:[%s0 + $0xc8] sm:$0xff]
  %v40 = vld [vmem:[%s0 + $0xd0] sm:$0xff]
  %v41 = vld [vmem:[%s0 + $0xd8] sm:$0xff]
  %v42 = vld [vmem:[%s0 + $0xe0] sm:$0xff]
  %v43 = vld [vmem:[%s0 + $0xe8] sm:$0xff]
  %v44 = vld [vmem:[%s0 + $0xf0] sm:$0xff]
  %v45 = vld [vmem:[%s0 + $0xf8] sm:$0xff]
  %v46 = vld [vmem:[%s1] sm:$0xff]
  %v47 = vld [vmem:[%s1 + $0x8] sm:$0xff]
  %v48 = vld [vmem:[%s1 + $0x10] sm:$0xff]
  %v49 = vld [vmem:[%s1 + $0x18] sm:$0xff]
  %v50 = vld [vmem:[%s1 + $0x20] sm:$0xff]
  %v51 = vld [vmem:[%s1 + $0x28] sm:$0xff]
  %v52 = vld [vmem:[%s1 + $0x30] sm:$0xff]
  %v53 = vld [vmem:[%s1 + $0x38] sm:$0xff]
  %v54 = vld [vmem:[%s1 + $0x40] sm:$0xff]
  %v55 = vld [vmem:[%s1 + $0x48] sm:$0xff]
  %v56 = vld [vmem:[%s1 + $0x50] sm:$0xff]
  %v57 = vld [vmem:[%s1 + $0x58] sm:$0xff]
  %v58 = vld [vmem:[%s1 + $0x60] sm:$0xff]
  %v59 = vld [vmem:[%s1 + $0x68] sm:$0xff]
  %v60 = vld [vmem:[%s1 + $0x70] sm:$0xff]
  %v61 = vld [vmem:[%s1 + $0x78] sm:$0xff]
  %v62 = vld [vmem:[%s1 + $0x80] sm:$0xff]
  %v63 = vld [vmem:[%s1 + $0x88] sm:$0xff]
  %v64 = vld [vmem:[%s1 + $0x90] sm:$0xff]
  %v65 = vld [vmem:[%s1 + $0x98] sm:$0xff]
  %v66 = vld [vmem:[%s1 + $0xa0] sm:$0xff]
  %v67 = vld [vmem:[%s1 + $0xa8] sm:$0xff]
  %v68 = vld [vmem:[%s1 + $0xb0] sm:$0xff]
  %v69 = vld [vmem:[%s1 + $0xb8] sm:$0xff]
  %v70 = vld [vmem:[%s2] sm:$0x1]
  %v72 = vperm.slane %v70, 0
  %vm74 = vcmask 523264
  %v76 = vsel %vm74, %v15, 0
  %v79 = vsel %vm74, %v17, 0
  %v82 = vsel %vm74, %v19, 0
  %v85 = vsel %vm74, %v21, 0
  %v88 = vsel %vm74, %v23, 0
  %v91 = vsel %vm74, %v25, 0
  %v94 = vsel %vm74, %v27, 0
  %v97 = vsel %vm74, %v29, 0
  %v100 = vsel %vm74, %v31, 0
  %v103 = vsel %vm74, %v33, 0
  %v106 = vsel %vm74, %v35, 0
  %v109 = vsel %vm74, %v37, 0
  %v112 = vsel %vm74, %v39, 0
  %v115 = vsel %vm74, %v41, 0
  %v118 = vsel %vm74, %v43, 0
  %v121 = vsel %vm74, %v45, 0
  %123 = vmatpush.msra.mxu0 %v61
  %124 = vmatpush.msra.mxu0 %v60
  %125 = vmatpush.msra.mxu0 %v59
  %126 = vmatpush.msra.mxu0 %v58
  %127 = vmatpush.msra.mxu0 %v57
  %128 = vmatpush.msra.mxu0 %v56
  %129 = vmatpush.msra.mxu0 %v55
  %130 = vmatpush.msra.mxu0 %v54
  %131 = vmatpush.msra.mxu0 %v53
  %132 = vmatpush.msra.mxu0 %v52
  %133 = vmatpush.msra.mxu0 %v51
  %134 = vmatpush.msra.mxu0 %v50
  %135 = vmatpush.msra.mxu0 %v49
  %136 = vmatpush.msra.mxu0 %v48
  %137 = vmatpush.msra.mxu0 %v47
  %138 = vmatpush.msra.mxu0 %v46
  %139 = vmatmul.f32.gmra.mxu0 %v14
  %v140 = vpop.f32.mrf.mxu0
  %v141 = vadd.f32 %v72, %v140
  %142 = vmatmul.f32.gmra.mxu0 %v16
  %v143 = vpop.f32.mrf.mxu0
  %v144 = vadd.f32 %v72, %v143
  %145 = vmatmul.f32.gmra.mxu0 %v18
  %v146 = vpop.f32.mrf.mxu0
  %v147 = vadd.f32 %v72, %v146
  %148 = vmatmul.f32.gmra.mxu0 %v20
  %v149 = vpop.f32.mrf.mxu0
  %v150 = vadd.f32 %v72, %v149
  %151 = vmatmul.f32.gmra.mxu0 %v22
  %v152 = vpop.f32.mrf.mxu0
  %v153 = vadd.f32 %v72, %v152
  %154 = vmatmul.f32.gmra.mxu0 %v24
  %v155 = vpop.f32.mrf.mxu0
  %v156 = vadd.f32 %v72, %v155
  %157 = vmatmul.f32.gmra.mxu0 %v26
  %v158 = vpop.f32.mrf.mxu0
  %v159 = vadd.f32 %v72, %v158
  %160 = vmatmul.f32.gmra.mxu0 %v28
  %v161 = vpop.f32.mrf.mxu0
  %v162 = vadd.f32 %v72, %v161
  %163 = vmatmul.f32.gmra.mxu0 %v30
  %v164 = vpop.f32.mrf.mxu0
  %v165 = vadd.f32 %v72, %v164
  %166 = vmatmul.f32.gmra.mxu0 %v32
  %v167 = vpop.f32.mrf.mxu0
  %v168 = vadd.f32 %v72, %v167
  %169 = vmatmul.f32.gmra.mxu0 %v34
  %v170 = vpop.f32.mrf.mxu0
  %v171 = vadd.f32 %v72, %v170
  %172 = vmatmul.f32.gmra.mxu0 %v36
  %v173 = vpop.f32.mrf.mxu0
  %v174 = vadd.f32 %v72, %v173
  %175 = vmatmul.f32.gmra.mxu0 %v38
  %v176 = vpop.f32.mrf.mxu0
  %v177 = vadd.f32 %v72, %v176
  %178 = vmatmul.f32.gmra.mxu0 %v40
  %v179 = vpop.f32.mrf.mxu0
  %v180 = vadd.f32 %v72, %v179
  %181 = vmatmul.f32.gmra.mxu0 %v42
  %v182 = vpop.f32.mrf.mxu0
  %v183 = vadd.f32 %v72, %v182
  %184 = vmatmul.f32.gmra.mxu0 %v44
  %v185 = vpop.f32.mrf.mxu0
  %v186 = vadd.f32 %v72, %v185
  %187 = vdwg.mxu0
  %188 = vmatpush.msra.mxu0 0.0
  %189 = vmatpush.msra.mxu0 0.0
  %190 = vmatpush.msra.mxu0 0.0
  %191 = vmatpush.msra.mxu0 0.0
  %192 = vmatpush.msra.mxu0 0.0
  %193 = vmatpush.msra.mxu0 0.0
  %194 = vmatpush.msra.mxu0 0.0
  %195 = vmatpush.msra.mxu0 0.0
  %196 = vmatpush.msra.mxu0 %v69
  %197 = vmatpush.msra.mxu0 %v68
  %198 = vmatpush.msra.mxu0 %v67
  %199 = vmatpush.msra.mxu0 %v66
  %200 = vmatpush.msra.mxu0 %v65
  %201 = vmatpush.msra.mxu0 %v64
  %202 = vmatpush.msra.mxu0 %v63
  %203 = vmatpush.msra.mxu0 %v62
  %204 = vmatmul.f32.gmra.mxu0 %v76
  %v205 = vpop.f32.mrf.mxu0
  %v206 = vadd.f32 %v141, %v205
  %207 = vmatmul.f32.gmra.mxu0 %v79
  %v208 = vpop.f32.mrf.mxu0
  %v209 = vadd.f32 %v144, %v208
  %210 = vmatmul.f32.gmra.mxu0 %v82
  %v211 = vpop.f32.mrf.mxu0
  %v212 = vadd.f32 %v147, %v211
  %213 = vmatmul.f32.gmra.mxu0 %v85
  %v214 = vpop.f32.mrf.mxu0
  %v215 = vadd.f32 %v150, %v214
  %216 = vmatmul.f32.gmra.mxu0 %v88
  %v217 = vpop.f32.mrf.mxu0
  %v218 = vadd.f32 %v153, %v217
  %219 = vmatmul.f32.gmra.mxu0 %v91
  %v220 = vpop.f32.mrf.mxu0
  %v221 = vadd.f32 %v156, %v220
  %222 = vmatmul.f32.gmra.mxu0 %v94
  %v223 = vpop.f32.mrf.mxu0
  %v224 = vadd.f32 %v159, %v223
  %225 = vmatmul.f32.gmra.mxu0 %v97
  %v226 = vpop.f32.mrf.mxu0
  %v227 = vadd.f32 %v162, %v226
  %228 = vmatmul.f32.gmra.mxu0 %v100
  %v229 = vpop.f32.mrf.mxu0
  %v230 = vadd.f32 %v165, %v229
  %231 = vmatmul.f32.gmra.mxu0 %v103
  %v232 = vpop.f32.mrf.mxu0
  %v233 = vadd.f32 %v168, %v232
  %234 = vmatmul.f32.gmra.mxu0 %v106
  %v235 = vpop.f32.mrf.mxu0
  %v236 = vadd.f32 %v171, %v235
  %237 = vmatmul.f32.gmra.mxu0 %v109
  %v238 = vpop.f32.mrf.mxu0
  %v239 = vadd.f32 %v174, %v238
  %240 = vmatmul.f32.gmra.mxu0 %v112
  %v241 = vpop.f32.mrf.mxu0
  %v242 = vadd.f32 %v177, %v241
  %243 = vmatmul.f32.gmra.mxu0 %v115
  %v244 = vpop.f32.mrf.mxu0
  %v245 = vadd.f32 %v180, %v244
  %246 = vmatmul.f32.gmra.mxu0 %v118
  %v247 = vpop.f32.mrf.mxu0
  %v248 = vadd.f32 %v183, %v247
  %249 = vmatmul.f32.gmra.mxu0 %v121
  %v250 = vpop.f32.mrf.mxu0
  %v251 = vadd.f32 %v186, %v250
  %252 = vdwg.mxu0
  %v253 = vmax.f32 %v206, 0.0
  %v254 = vmax.f32 %v209, 0.0
  %v255 = vmax.f32 %v212, 0.0
  %v256 = vmax.f32 %v215, 0.0
  %v257 = vmax.f32 %v218, 0.0
  %v258 = vmax.f32 %v221, 0.0
  %v259 = vmax.f32 %v224, 0.0
  %v260 = vmax.f32 %v227, 0.0
  %v261 = vmax.f32 %v230, 0.0
  %v262 = vmax.f32 %v233, 0.0
  %v263 = vmax.f32 %v236, 0.0
  %v264 = vmax.f32 %v239, 0.0
  %v265 = vmax.f32 %v242, 0.0
  %v266 = vmax.f32 %v245, 0.0
  %v267 = vmax.f32 %v248, 0.0
  %v268 = vmax.f32 %v251, 0.0
  %269 = vst.msk [vmem:[%s3] sm:$0xff] %vm74, %v253
  %270 = vst.msk [vmem:[%s3 + $0x8] sm:$0xff] %vm74, %v254
  %271 = vst.msk [vmem:[%s3 + $0x10] sm:$0xff] %vm74, %v255
  %272 = vst.msk [vmem:[%s3 + $0x18] sm:$0xff] %vm74, %v256
  %273 = vst.msk [vmem:[%s3 + $0x20] sm:$0xff] %vm74, %v257
  %274 = vst.msk [vmem:[%s3 + $0x28] sm:$0xff] %vm74, %v258
  %275 = vst.msk [vmem:[%s3 + $0x30] sm:$0xff] %vm74, %v259
  %276 = vst.msk [vmem:[%s3 + $0x38] sm:$0xff] %vm74, %v260
  %277 = vst.msk [vmem:[%s3 + $0x40] sm:$0xff] %vm74, %v261
  %278 = vst.msk [vmem:[%s3 + $0x48] sm:$0xff] %vm74, %v262
  %279 = vst.msk [vmem:[%s3 + $0x50] sm:$0xff] %vm74, %v263
  %280 = vst.msk [vmem:[%s3 + $0x58] sm:$0xff] %vm74, %v264
  %281 = vst.msk [vmem:[%s3 + $0x60] sm:$0xff] %vm74, %v265
  %282 = vst.msk [vmem:[%s3 + $0x68] sm:$0xff] %vm74, %v266
  %283 = vst.msk [vmem:[%s3 + $0x70] sm:$0xff] %vm74, %v267
  %284 = vst.msk [vmem:[%s3 + $0x78] sm:$0xff] %vm74, %v268
  // Predicated region
  $region14: #{gma_forward.4} parent=0 // pred_check
    _
  $region15: #{gma_forward.4} parent=0 // pred_check_branch
    %286 = sbr.rel (0) target = $region17
  $region16: #{gma_forward.4} parent=0 // pred_region
    _
  $region17: #{gma_forward.4} parent=0 // pred_fallthru
    _
  // Predicated region
  $region18: #{gma_forward.4} parent=0 // pred_check
    _
  $region19: #{gma_forward.4} parent=0 // pred_check_branch
    %288 = sbr.rel (0) target = $region21
  $region20: #{gma_forward.4} parent=0 // pred_region
    _
  $region21: #{gma_forward.4} parent=0 // pred_fallthru
    _

// kernel: gma_forward.5
$region0: #{gma_forward.5}
  #allocation0 [shape = 'u32[]', space=smem, size = 0x4, offset = 0x4, fixed_abs, tag = 'smem constant byte address 0x4 - core index']
  #allocation1 [shape = 'u32[72,128]{1,0:T(1,128)}', space=vmem, size = 0x9000, scoped, tag = 'internal scratch']
  #allocation2 [shape = 'f32[1,1]{1,0:T(1,128)S(1)}', space=vmem, size = 0x200, scoped, tag = 'scoped memory for gma_forward.5']
  %s0 = inlined_call_operand.vmem [shape: f32[2,64,64], index: 0, kind: input, shape index: {}]
  %s1 = inlined_call_operand.vmem [shape: f32[2,64,64], index: 1, kind: input, shape index: {}]
  %s2 = inlined_call_operand.vmem [shape: f32[2,64,32], index: 2, kind: input, shape index: {}]
  %s3 = inlined_call_operand.vmem [shape: f32[2,64,32], index: 3, kind: input, shape index: {}]
  %s4 = inlined_call_operand.vmem [shape: f32[32,64], index: 4, kind: input, shape index: {}]
  %s5 = inlined_call_operand.vmem [shape: f32[1,64], index: 5, kind: input, shape index: {}]
  %s6 = inlined_call_operand.vmem [shape: f32[64,32], index: 6, kind: input, shape index: {}]
  %s7 = inlined_call_operand.vmem [shape: f32[2,32], index: 7, kind: input, shape index: {}]
  %s8 = inlined_call_operand.vmem [shape: f32[1,32], index: 8, kind: input, shape index: {}]
  %s9 = inlined_call_operand.vmem [shape: f32[32,32], index: 9, kind: input, shape index: {}]
  %s10 = inlined_call_operand.vmem [shape: f32[1,32], index: 10, kind: input, shape index: {}]
  %s11 = inlined_call_operand.vmem [shape: f32[32,32], index: 11, kind: input, shape index: {}]
  %s12 = inlined_call_operand.vmem [shape: f32[1,32], index: 12, kind: input, shape index: {}]
  %s13 = inlined_call_operand.vmem [shape: f32[32,64], index: 13, kind: input, shape index: {}]
  %s14 = inlined_call_operand.vmem [shape: f32[32,64], index: 14, kind: input, shape index: {}]
  %s15 = inlined_call_operand.vmem [shape: f32[32,64], index: 15, kind: input, shape index: {}]
  %s16 = inlined_call_operand.vmem [shape: f32[32,64], index: 16, kind: input, shape index: {}]
  %s17 = inlined_call_operand.vmem [shape: f32[1,64], index: 17, kind: input, shape index: {}]
  %s18 = inlined_call_operand.vmem [shape: f32[32,32], index: 18, kind: input, shape index: {}]
  %s19 = inlined_call_operand.vmem [shape: f32[32,32], index: 19, kind: input, shape index: {}]
  %s20 = inlined_call_operand.vmem [shape: f32[32,32], index: 20, kind: input, shape index: {}]
  %s21 = inlined_call_operand.vmem [shape: f32[32,32], index: 21, kind: input, shape index: {}]
  %s22 = inlined_call_operand.vmem [shape: f32[1,32], index: 22, kind: input, shape index: {}]
  %s23 = inlined_call_operand.vmem [shape: f32[32,2], index: 23, kind: input, shape index: {}]
  %s24 = inlined_call_operand.vmem [shape: f32[1,2], index: 24, kind: input, shape index: {}]
  %s25 = inlined_call_operand.<no memory space> [shape: f32[1,1], index: 25, kind: input, shape index: {}]
  %s26 = inlined_call_operand.vmem [shape: f32[2,64,2], index: 26, kind: output, shape index: {}]
  %s27 = sld [smem:[#allocation0]]
  $region144: #{gma_forward.5} parent=0
    _
  %s29 = ssub.s32 1, %s27
  %s30 = scalar_select 0, %s29, %s27
  %v31 = vstv %s25
  %32 = vst [vmem:[#allocation2] sm:$0x1] %v31
  loop: start=0, step=1, limit=4
  $region2: #{gma_forward.5} parent=0 // loop_pre_header
    _
  $region3: #{gma_forward.5} parent=0 // loop_header
    %s34 = sphi 0, %s38
    %p35 = scmp.ge.s32.totalorder %s34, 4
    %s44 = sphi 0, %s46
    %s47 = sphi 0, %s44
    %s48 = sphi 0, %s47
    %s64 = sphi 0, %s48
    %s70 = sphi 0, %s72
    %s73 = sphi 0, %s70
    %s74 = sphi 0, %s73
    %s90 = sphi 0, %s74
    %s96 = sphi 0, %s98
    %s99 = sphi 0, %s96
    %s100 = sphi 0, %s99
    %s116 = sphi 0, %s100
    %s122 = sphi 0, %s124
    %s125 = sphi 0, %s122
    %s126 = sphi 0, %s125
    %s142 = sphi 0, %s126
    %s146 = sphi 0, %s146
    %s148 = sphi 0, %s146
    %s149 = sphi 0, %s148
    %s163 = sphi 0, %s149
    %s167 = sphi 0, %s167
    %s169 = sphi 0, %s167
    %s170 = sphi 0, %s169
    %s184 = sphi 0, %s170
    %s188 = sphi 0, %s188
    %s190 = sphi 0, %s188
    %s191 = sphi 0, %s190
    %s205 = sphi 0, %s191
    %s209 = sphi 0, %s209
    %s211 = sphi 0, %s209
    %s212 = sphi 0, %s211
    %s226 = sphi 0, %s212
    %s230 = sphi 0, %s230
    %s232 = sphi 0, %s230
    %s233 = sphi 0, %s232
    %s247 = sphi 0, %s233
    %s251 = sphi 0, %s251
    %s253 = sphi 0, %s251
    %s254 = sphi 0, %s253
    %s268 = sphi 0, %s254
    %s272 = sphi 0, %s272
    %s274 = sphi 0, %s272
    %s275 = sphi 0, %s274
    %s289 = sphi 0, %s275
    %s293 = sphi 0, %s293
    %s295 = sphi 0, %s293
    %s296 = sphi 0, %s295
    %s310 = sphi 0, %s296
    %s314 = sphi 0, %s314
    %s316 = sphi 0, %s314
    %s317 = sphi 0, %s316
    %s331 = sphi 0, %s317
    %s335 = sphi 0, %s335
    %s337 = sphi 0, %s335
    %s338 = sphi 0, %s337
    %s352 = sphi 0, %s338
    %s356 = sphi 0, %s356
    %s358 = sphi 0, %s356
    %s359 = sphi 0, %s358
    %s373 = sphi 0, %s359
    %s377 = sphi 0, %s377
    %s379 = sphi 0, %s377
    %s380 = sphi 0, %s379
    %s394 = sphi 0, %s380
    %s398 = sphi 0, %s398
    %s400 = sphi 0, %s398
    %s401 = sphi 0, %s400
    %s415 = sphi 0, %s401
    %s419 = sphi 0, %s419
    %s421 = sphi 0, %s419
    %s422 = sphi 0, %s421
    %s436 = sphi 0, %s422
    %s440 = sphi 0, %s440
    %s442 = sphi 0, %s440
    %s443 = sphi 0, %s442
    %s457 = sphi 0, %s443
    %s461 = sphi 0, %s461
    %s463 = sphi 0, %s461
    %s464 = sphi 0, %s463
    %s478 = sphi 0, %s464
    %s482 = sphi 0, %s482
    %s484 = sphi 0, %s482
    %s485 = sphi 0, %s484
    %s499 = sphi 0, %s485
    %s503 = sphi 0, %s503
    %s505 = sphi 0, %s503
    %s506 = sphi 0, %s505
    %s520 = sphi 0, %s506
    %s524 = sphi 0, %s524
    %s526 = sphi 0, %s524
    %s527 = sphi 0, %s526
    %s541 = sphi 0, %s527
    %s545 = sphi 0, %s545
    %s547 = sphi 0, %s545
    %s548 = sphi 0, %s547
    %s562 = sphi 0, %s548
    %s566 = sphi 0, %s566
    %s568 = sphi 0, %s566
    %s569 = sphi 0, %s568
    %s583 = sphi 0, %s569
    %s587 = sphi 0, %s587
    %s589 = sphi 0, %s587
    %s590 = sphi 0, %s589
    %s604 = sphi 0, %s590
    %s610 = sphi 0, %s612
    %s613 = sphi 0, %s610
    %s614 = sphi 0, %s613
    %s630 = sphi 0, %s614
  $region4: #{gma_forward.5} parent=0 // loop_header_branch
    %37 = sbr.rel (%p35) target = $region8
  $region5: #{gma_forward.5} parent=0 // loop_body
    %s39 = ssub.s32 %s34, 1
    %s40 = ssub.s32 %s34, 2
    %s41 = sadd.s32 %s34, 1
    %s42 = ssub.s32 %s34, %s41
    %p43 = scmp.eq.s32.totalorder %s42, 0
    %s45 = sadd.s32 %s44, 1
    %s46 = scalar_select %p43, %s44, %s45
    %p49 = pneg %p43
    %p50 = scmp.eq.s32.totalorder %s34, 1
    %p51 = por %p49, %p50
    %p52 = scmp.ne.s32.totalorder %s44, %s47
    %p53 = scmp.eq.s32.totalorder %s34, 0
    %p54 = por %p52, %p53
    %p55 = scmp.ne.s32.totalorder %s44, %s47
    %p56 = scmp.eq.s32.totalorder %s39, 1
    %p57 = por %p55, %p56
    %p58 = scmp.ne.s32.totalorder %s47, %s48
    %p59 = scmp.eq.s32.totalorder %s39, 0
    %p60 = por %p58, %p59
    %p61 = scmp.ne.s32.totalorder %s47, %s48
    %p62 = scmp.eq.s32.totalorder %s40, 1
    %p63 = por %p61, %p62
    %p65 = scmp.ne.s32.totalorder %s48, %s64
    %p66 = scmp.eq.s32.totalorder %s40, 0
    %p67 = por %p65, %p66
    %s68 = ssub.s32 %s34, %s41
    %p69 = scmp.eq.s32.totalorder %s68, 0
    %s71 = sadd.s32 %s70, 1
    %s72 = scalar_select %p69, %s70, %s71
    %p75 = pneg %p69
    %p76 = scmp.eq.s32.totalorder %s34, 1
    %p77 = por %p75, %p76
    %p78 = scmp.ne.s32.totalorder %s70, %s73
    %p79 = scmp.eq.s32.totalorder %s34, 0
    %p80 = por %p78, %p79
    %p81 = scmp.ne.s32.totalorder %s70, %s73
    %p82 = scmp.eq.s32.totalorder %s39, 1
    %p83 = por %p81, %p82
    %p84 = scmp.ne.s32.totalorder %s73, %s74
    %p85 = scmp.eq.s32.totalorder %s39, 0
    %p86 = por %p84, %p85
    %p87 = scmp.ne.s32.totalorder %s73, %s74
    %p88 = scmp.eq.s32.totalorder %s40, 1
    %p89 = por %p87, %p88
    %p91 = scmp.ne.s32.totalorder %s74, %s90
    %p92 = scmp.eq.s32.totalorder %s40, 0
    %p93 = por %p91, %p92
    %s94 = ssub.s32 %s34, %s41
    %p95 = scmp.eq.s32.totalorder %s94, 0
    %s97 = sadd.s32 %s96, 1
    %s98 = scalar_select %p95, %s96, %s97
    %p101 = pneg %p95
    %p102 = scmp.eq.s32.totalorder %s34, 1
    %p103 = por %p101, %p102
    %p104 = scmp.ne.s32.totalorder %s96, %s99
    %p105 = scmp.eq.s32.totalorder %s34, 0
    %p106 = por %p104, %p105
    %p107 = scmp.ne.s32.totalorder %s96, %s99
    %p108 = scmp.eq.s32.totalorder %s39, 1
    %p109 = por %p107, %p108
    %p110 = scmp.ne.s32.totalorder %s99, %s100
    %p111 = scmp.eq.s32.totalorder %s39, 0
    %p112 = por %p110, %p111
    %p113 = scmp.ne.s32.totalorder %s99, %s100
    %p114 = scmp.eq.s32.totalorder %s40, 1
    %p115 = por %p113, %p114
    %p117 = scmp.ne.s32.totalorder %s100, %s116
    %p118 = scmp.eq.s32.totalorder %s40, 0
    %p119 = por %p117, %p118
    %s120 = ssub.s32 %s34, %s41
    %p121 = scmp.eq.s32.totalorder %s120, 0
    %s123 = sadd.s32 %s122, 1
    %s124 = scalar_select %p121, %s122, %s123
    %p127 = pneg %p121
    %p128 = scmp.eq.s32.totalorder %s34, 1
    %p129 = por %p127, %p128
    %p130 = scmp.ne.s32.totalorder %s122, %s125
    %p131 = scmp.eq.s32.totalorder %s34, 0
    %p132 = por %p130, %p131
    %p133 = scmp.ne.s32.totalorder %s122, %s125
    %p134 = scmp.eq.s32.totalorder %s39, 1
    %p135 = por %p133, %p134
    %p136 = scmp.ne.s32.totalorder %s125, %s126
    %p137 = scmp.eq.s32.totalorder %s39, 0
    %p138 = por %p136, %p137
    %p139 = scmp.ne.s32.totalorder %s125, %s126
    %p140 = scmp.eq.s32.totalorder %s40, 1
    %p141 = por %p139, %p140
    %p143 = scmp.ne.s32.totalorder %s126, %s142
    %p144 = scmp.eq.s32.totalorder %s40, 0
    %p145 = por %p143, %p144
    %s147 = sadd.s32 %s146, 1
    %p150 = scmp.eq.s32.totalorder %s34, 1
    %p151 = scmp.ne.s32.totalorder %s146, %s148
    %p152 = scmp.eq.s32.totalorder %s34, 0
    %p153 = por %p151, %p152
    %p154 = scmp.ne.s32.totalorder %s146, %s148
    %p155 = scmp.eq.s32.totalorder %s39, 1
    %p156 = por %p154, %p155
    %p157 = scmp.ne.s32.totalorder %s148, %s149
    %p158 = scmp.eq.s32.totalorder %s39, 0
    %p159 = por %p157, %p158
    %p160 = scmp.ne.s32.totalorder %s148, %s149
    %p161 = scmp.eq.s32.totalorder %s40, 1
    %p162 = por %p160, %p161
    %p164 = scmp.ne.s32.totalorder %s149, %s163
    %p165 = scmp.eq.s32.totalorder %s40, 0
    %p166 = por %p164, %p165
    %s168 = sadd.s32 %s167, 1
    %p171 = scmp.eq.s32.totalorder %s34, 1
    %p172 = scmp.ne.s32.totalorder %s167, %s169
    %p173 = scmp.eq.s32.totalorder %s34, 0
    %p174 = por %p172, %p173
    %p175 = scmp.ne.s32.totalorder %s167, %s169
    %p176 = scmp.eq.s32.totalorder %s39, 1
    %p177 = por %p175, %p176
    %p178 = scmp.ne.s32.totalorder %s169, %s170
    %p179 = scmp.eq.s32.totalorder %s39, 0
    %p180 = por %p178, %p179
    %p181 = scmp.ne.s32.totalorder %s169, %s170
    %p182 = scmp.eq.s32.totalorder %s40, 1
    %p183 = por %p181, %p182
    %p185 = scmp.ne.s32.totalorder %s170, %s184
    %p186 = scmp.eq.s32.totalorder %s40, 0
    %p187 = por %p185, %p186
    %s189 = sadd.s32 %s188, 1
    %p192 = scmp.eq.s32.totalorder %s34, 1
    %p193 = scmp.ne.s32.totalorder %s188, %s190
    %p194 = scmp.eq.s32.totalorder %s34, 0
    %p195 = por %p193, %p194
    %p196 = scmp.ne.s32.totalorder %s188, %s190
    %p197 = scmp.eq.s32.totalorder %s39, 1
    %p198 = por %p196, %p197
    %p199 = scmp.ne.s32.totalorder %s190, %s191
    %p200 = scmp.eq.s32.totalorder %s39, 0
    %p201 = por %p199, %p200
    %p202 = scmp.ne.s32.totalorder %s190, %s191
    %p203 = scmp.eq.s32.totalorder %s40, 1
    %p204 = por %p202, %p203
    %p206 = scmp.ne.s32.totalorder %s191, %s205
    %p207 = scmp.eq.s32.totalorder %s40, 0
    %p208 = por %p206, %p207
    %s210 = sadd.s32 %s209, 1
    %p213 = scmp.eq.s32.totalorder %s34, 1
    %p214 = scmp.ne.s32.totalorder %s209, %s211
    %p215 = scmp.eq.s32.totalorder %s34, 0
    %p216 = por %p214, %p215
    %p217 = scmp.ne.s32.totalorder %s209, %s211
    %p218 = scmp.eq.s32.totalorder %s39, 1
    %p219 = por %p217, %p218
    %p220 = scmp.ne.s32.totalorder %s211, %s212
    %p221 = scmp.eq.s32.totalorder %s39, 0
    %p222 = por %p220, %p221
    %p223 = scmp.ne.s32.totalorder %s211, %s212
    %p224 = scmp.eq.s32.totalorder %s40, 1
    %p225 = por %p223, %p224
    %p227 = scmp.ne.s32.totalorder %s212, %s226
    %p228 = scmp.eq.s32.totalorder %s40, 0
    %p229 = por %p227, %p228
    %s231 = sadd.s32 %s230, 1
    %p234 = scmp.eq.s32.totalorder %s34, 1
    %p235 = scmp.ne.s32.totalorder %s230, %s232
    %p236 = scmp.eq.s32.totalorder %s34, 0
    %p237 = por %p235, %p236
    %p238 = scmp.ne.s32.totalorder %s230, %s232
    %p239 = scmp.eq.s32.totalorder %s39, 1
    %p240 = por %p238, %p239
    %p241 = scmp.ne.s32.totalorder %s232, %s233
    %p242 = scmp.eq.s32.totalorder %s39, 0
    %p243 = por %p241, %p242
    %p244 = scmp.ne.s32.totalorder %s232, %s233
    %p245 = scmp.eq.s32.totalorder %s40, 1
    %p246 = por %p244, %p245
    %p248 = scmp.ne.s32.totalorder %s233, %s247
    %p249 = scmp.eq.s32.totalorder %s40, 0
    %p250 = por %p248, %p249
    %s252 = sadd.s32 %s251, 1
    %p255 = scmp.eq.s32.totalorder %s34, 1
    %p256 = scmp.ne.s32.totalorder %s251, %s253
    %p257 = scmp.eq.s32.totalorder %s34, 0
    %p258 = por %p256, %p257
    %p259 = scmp.ne.s32.totalorder %s251, %s253
    %p260 = scmp.eq.s32.totalorder %s39, 1
    %p261 = por %p259, %p260
    %p262 = scmp.ne.s32.totalorder %s253, %s254
    %p263 = scmp.eq.s32.totalorder %s39, 0
    %p264 = por %p262, %p263
    %p265 = scmp.ne.s32.totalorder %s253, %s254
    %p266 = scmp.eq.s32.totalorder %s40, 1
    %p267 = por %p265, %p266
    %p269 = scmp.ne.s32.totalorder %s254, %s268
    %p270 = scmp.eq.s32.totalorder %s40, 0
    %p271 = por %p269, %p270
    %s273 = sadd.s32 %s272, 1
    %p276 = scmp.eq.s32.totalorder %s34, 1
    %p277 = scmp.ne.s32.totalorder %s272, %s274
    %p278 = scmp.eq.s32.totalorder %s34, 0
    %p279 = por %p277, %p278
    %p280 = scmp.ne.s32.totalorder %s272, %s274
    %p281 = scmp.eq.s32.totalorder %s39, 1
    %p282 = por %p280, %p281
    %p283 = scmp.ne.s32.totalorder %s274, %s275
    %p284 = scmp.eq.s32.totalorder %s39, 0
    %p285 = por %p283, %p284
    %p286 = scmp.ne.s32.totalorder %s274, %s275
    %p287 = scmp.eq.s32.totalorder %s40, 1
    %p288 = por %p286, %p287
    %p290 = scmp.ne.s32.totalorder %s275, %s289
    %p291 = scmp.eq.s32.totalorder %s40, 0
    %p292 = por %p290, %p291
    %s294 = sadd.s32 %s293, 1
    %p297 = scmp.eq.s32.totalorder %s34, 1
    %p298 = scmp.ne.s32.totalorder %s293, %s295
    %p299 = scmp.eq.s32.totalorder %s34, 0
    %p300 = por %p298, %p299
    %p301 = scmp.ne.s32.totalorder %s293, %s295
    %p302 = scmp.eq.s32.totalorder %s39, 1
    %p303 = por %p301, %p302
    %p304 = scmp.ne.s32.totalorder %s295, %s296
    %p305 = scmp.eq.s32.totalorder %s39, 0
    %p306 = por %p304, %p305
    %p307 = scmp.ne.s32.totalorder %s295, %s296
    %p308 = scmp.eq.s32.totalorder %s40, 1
    %p309 = por %p307, %p308
    %p311 = scmp.ne.s32.totalorder %s296, %s310
    %p312 = scmp.eq.s32.totalorder %s40, 0
    %p313 = por %p311, %p312
    %s315 = sadd.s32 %s314, 1
    %p318 = scmp.eq.s32.totalorder %s34, 1
    %p319 = scmp.ne.s32.totalorder %s314, %s316
    %p320 = scmp.eq.s32.totalorder %s34, 0
    %p321 = por %p319, %p320
    %p322 = scmp.ne.s32.totalorder %s314, %s316
    %p323 = scmp.eq.s32.totalorder %s39, 1
    %p324 = por %p322, %p323
    %p325 = scmp.ne.s32.totalorder %s316, %s317
    %p326 = scmp.eq.s32.totalorder %s39, 0
    %p327 = por %p325, %p326
    %p328 = scmp.ne.s32.totalorder %s316, %s317
    %p329 = scmp.eq.s32.totalorder %s40, 1
    %p330 = por %p328, %p329
    %p332 = scmp.ne.s32.totalorder %s317, %s331
    %p333 = scmp.eq.s32.totalorder %s40, 0
    %p334 = por %p332, %p333
    %s336 = sadd.s32 %s335, 1
    %p339 = scmp.eq.s32.totalorder %s34, 1
    %p340 = scmp.ne.s32.totalorder %s335, %s337
    %p341 = scmp.eq.s32.totalorder %s34, 0
    %p342 = por %p340, %p341
    %p343 = scmp.ne.s32.totalorder %s335, %s337
    %p344 = scmp.eq.s32.totalorder %s39, 1
    %p345 = por %p343, %p344
    %p346 = scmp.ne.s32.totalorder %s337, %s338
    %p347 = scmp.eq.s32.totalorder %s39, 0
    %p348 = por %p346, %p347
    %p349 = scmp.ne.s32.totalorder %s337, %s338
    %p350 = scmp.eq.s32.totalorder %s40, 1
    %p351 = por %p349, %p350
    %p353 = scmp.ne.s32.totalorder %s338, %s352
    %p354 = scmp.eq.s32.totalorder %s40, 0
    %p355 = por %p353, %p354
    %s357 = sadd.s32 %s356, 1
    %p360 = scmp.eq.s32.totalorder %s34, 1
    %p361 = scmp.ne.s32.totalorder %s356, %s358
    %p362 = scmp.eq.s32.totalorder %s34, 0
    %p363 = por %p361, %p362
    %p364 = scmp.ne.s32.totalorder %s356, %s358
    %p365 = scmp.eq.s32.totalorder %s39, 1
    %p366 = por %p364, %p365
    %p367 = scmp.ne.s32.totalorder %s358, %s359
    %p368 = scmp.eq.s32.totalorder %s39, 0
    %p369 = por %p367, %p368
    %p370 = scmp.ne.s32.totalorder %s358, %s359
    %p371 = scmp.eq.s32.totalorder %s40, 1
    %p372 = por %p370, %p371
    %p374 = scmp.ne.s32.totalorder %s359, %s373
    %p375 = scmp.eq.s32.totalorder %s40, 0
    %p376 = por %p374, %p375
    %s378 = sadd.s32 %s377, 1
    %p381 = scmp.eq.s32.totalorder %s34, 1
    %p382 = scmp.ne.s32.totalorder %s377, %s379
    %p383 = scmp.eq.s32.totalorder %s34, 0
    %p384 = por %p382, %p383
    %p385 = scmp.ne.s32.totalorder %s377, %s379
    %p386 = scmp.eq.s32.totalorder %s39, 1
    %p387 = por %p385, %p386
    %p388 = scmp.ne.s32.totalorder %s379, %s380
    %p389 = scmp.eq.s32.totalorder %s39, 0
    %p390 = por %p388, %p389
    %p391 = scmp.ne.s32.totalorder %s379, %s380
    %p392 = scmp.eq.s32.totalorder %s40, 1
    %p393 = por %p391, %p392
    %p395 = scmp.ne.s32.totalorder %s380, %s394
    %p396 = scmp.eq.s32.totalorder %s40, 0
    %p397 = por %p395, %p396
    %s399 = sadd.s32 %s398, 1
    %p402 = scmp.eq.s32.totalorder %s34, 1
    %p403 = scmp.ne.s32.totalorder %s398, %s400
    %p404 = scmp.eq.s32.totalorder %s34, 0
    %p405 = por %p403, %p404
    %p406 = scmp.ne.s32.totalorder %s398, %s400
    %p407 = scmp.eq.s32.totalorder %s39, 1
    %p408 = por %p406, %p407
    %p409 = scmp.ne.s32.totalorder %s400, %s401
    %p410 = scmp.eq.s32.totalorder %s39, 0
    %p411 = por %p409, %p410
    %p412 = scmp.ne.s32.totalorder %s400, %s401
    %p413 = scmp.eq.s32.totalorder %s40, 1
    %p414 = por %p412, %p413
    %p416 = scmp.ne.s32.totalorder %s401, %s415
    %p417 = scmp.eq.s32.totalorder %s40, 0
    %p418 = por %p416, %p417
    %s420 = sadd.s32 %s419, 1
    %p423 = scmp.eq.s32.totalorder %s34, 1
    %p424 = scmp.ne.s32.totalorder %s419, %s421
    %p425 = scmp.eq.s32.totalorder %s34, 0
    %p426 = por %p424, %p425
    %p427 = scmp.ne.s32.totalorder %s419, %s421
    %p428 = scmp.eq.s32.totalorder %s39, 1
    %p429 = por %p427, %p428
    %p430 = scmp.ne.s32.totalorder %s421, %s422
    %p431 = scmp.eq.s32.totalorder %s39, 0
    %p432 = por %p430, %p431
    %p433 = scmp.ne.s32.totalorder %s421, %s422
    %p434 = scmp.eq.s32.totalorder %s40, 1
    %p435 = por %p433, %p434
    %p437 = scmp.ne.s32.totalorder %s422, %s436
    %p438 = scmp.eq.s32.totalorder %s40, 0
    %p439 = por %p437, %p438
    %s441 = sadd.s32 %s440, 1
    %p444 = scmp.eq.s32.totalorder %s34, 1
    %p445 = scmp.ne.s32.totalorder %s440, %s442
    %p446 = scmp.eq.s32.totalorder %s34, 0
    %p447 = por %p445, %p446
    %p448 = scmp.ne.s32.totalorder %s440, %s442
    %p449 = scmp.eq.s32.totalorder %s39, 1
    %p450 = por %p448, %p449
    %p451 = scmp.ne.s32.totalorder %s442, %s443
    %p452 = scmp.eq.s32.totalorder %s39, 0
    %p453 = por %p451, %p452
    %p454 = scmp.ne.s32.totalorder %s442, %s443
    %p455 = scmp.eq.s32.totalorder %s40, 1
    %p456 = por %p454, %p455
    %p458 = scmp.ne.s32.totalorder %s443, %s457
    %p459 = scmp.eq.s32.totalorder %s40, 0
    %p460 = por %p458, %p459
    %s462 = sadd.s32 %s461, 1
    %p465 = scmp.eq.s32.totalorder %s34, 1
    %p466 = scmp.ne.s32.totalorder %s461, %s463
    %p467 = scmp.eq.s32.totalorder %s34, 0
    %p468 = por %p466, %p467
    %p469 = scmp.ne.s32.totalorder %s461, %s463
    %p470 = scmp.eq.s32.totalorder %s39, 1
    %p471 = por %p469, %p470
    %p472 = scmp.ne.s32.totalorder %s463, %s464
    %p473 = scmp.eq.s32.totalorder %s39, 0
    %p474 = por %p472, %p473
    %p475 = scmp.ne.s32.totalorder %s463, %s464
    %p476 = scmp.eq.s32.totalorder %s40, 1
    %p477 = por %p475, %p476
    %p479 = scmp.ne.s32.totalorder %s464, %s478
    %p480 = scmp.eq.s32.totalorder %s40, 0
    %p481 = por %p479, %p480
    %s483 = sadd.s32 %s482, 1
    %p486 = scmp.eq.s32.totalorder %s34, 1
    %p487 = scmp.ne.s32.totalorder %s482, %s484
    %p488 = scmp.eq.s32.totalorder %s34, 0
    %p489 = por %p487, %p488
    %p490 = scmp.ne.s32.totalorder %s482, %s484
    %p491 = scmp.eq.s32.totalorder %s39, 1
    %p492 = por %p490, %p491
    %p493 = scmp.ne.s32.totalorder %s484, %s485
    %p494 = scmp.eq.s32.totalorder %s39, 0
    %p495 = por %p493, %p494
    %p496 = scmp.ne.s32.totalorder %s484, %s485
    %p497 = scmp.eq.s32.totalorder %s40, 1
    %p498 = por %p496, %p497
    %p500 = scmp.ne.s32.totalorder %s485, %s499
    %p501 = scmp.eq.s32.totalorder %s40, 0
    %p502 = por %p500, %p501
    %s504 = sadd.s32 %s503, 1
    %p507 = scmp.eq.s32.totalorder %s34, 1
    %p508 = scmp.ne.s32.totalorder %s503, %s505
    %p509 = scmp.eq.s32.totalorder %s34, 0
    %p510 = por %p508, %p509
    %p511 = scmp.ne.s32.totalorder %s503, %s505
    %p512 = scmp.eq.s32.totalorder %s39, 1
    %p513 = por %p511, %p512
    %p514 = scmp.ne.s32.totalorder %s505, %s506
    %p515 = scmp.eq.s32.totalorder %s39, 0
    %p516 = por %p514, %p515
    %p517 = scmp.ne.s32.totalorder %s505, %s506
    %p518 = scmp.eq.s32.totalorder %s40, 1
    %p519 = por %p517, %p518
    %p521 = scmp.ne.s32.totalorder %s506, %s520
    %p522 = scmp.eq.s32.totalorder %s40, 0
    %p523 = por %p521, %p522
    %s525 = sadd.s32 %s524, 1
    %p528 = scmp.eq.s32.totalorder %s34, 1
    %p529 = scmp.ne.s32.totalorder %s524, %s526
    %p530 = scmp.eq.s32.totalorder %s34, 0
    %p531 = por %p529, %p530
    %p532 = scmp.ne.s32.totalorder %s524, %s526
    %p533 = scmp.eq.s32.totalorder %s39, 1
    %p534 = por %p532, %p533
    %p535 = scmp.ne.s32.totalorder %s526, %s527
    %p536 = scmp.eq.s32.totalorder %s39, 0
    %p537 = por %p535, %p536
    %p538 = scmp.ne.s32.totalorder %s526, %s527
    %p539 = scmp.eq.s32.totalorder %s40, 1
    %p540 = por %p538, %p539
    %p542 = scmp.ne.s32.totalorder %s527, %s541
    %p543 = scmp.eq.s32.totalorder %s40, 0
    %p544 = por %p542, %p543
    %s546 = sadd.s32 %s545, 1
    %p549 = scmp.eq.s32.totalorder %s34, 1
    %p550 = scmp.ne.s32.totalorder %s545, %s547
    %p551 = scmp.eq.s32.totalorder %s34, 0
    %p552 = por %p550, %p551
    %p553 = scmp.ne.s32.totalorder %s545, %s547
    %p554 = scmp.eq.s32.totalorder %s39, 1
    %p555 = por %p553, %p554
    %p556 = scmp.ne.s32.totalorder %s547, %s548
    %p557 = scmp.eq.s32.totalorder %s39, 0
    %p558 = por %p556, %p557
    %p559 = scmp.ne.s32.totalorder %s547, %s548
    %p560 = scmp.eq.s32.totalorder %s40, 1
    %p561 = por %p559, %p560
    %p563 = scmp.ne.s32.totalorder %s548, %s562
    %p564 = scmp.eq.s32.totalorder %s40, 0
    %p565 = por %p563, %p564
    %s567 = sadd.s32 %s566, 1
    %p570 = scmp.eq.s32.totalorder %s34, 1
    %p571 = scmp.ne.s32.totalorder %s566, %s568
    %p572 = scmp.eq.s32.totalorder %s34, 0
    %p573 = por %p571, %p572
    %p574 = scmp.ne.s32.totalorder %s566, %s568
    %p575 = scmp.eq.s32.totalorder %s39, 1
    %p576 = por %p574, %p575
    %p577 = scmp.ne.s32.totalorder %s568, %s569
    %p578 = scmp.eq.s32.totalorder %s39, 0
    %p579 = por %p577, %p578
    %p580 = scmp.ne.s32.totalorder %s568, %s569
    %p581 = scmp.eq.s32.totalorder %s40, 1
    %p582 = por %p580, %p581
    %p584 = scmp.ne.s32.totalorder %s569, %s583
    %p585 = scmp.eq.s32.totalorder %s40, 0
    %p586 = por %p584, %p585
    %s588 = sadd.s32 %s587, 1
    %p591 = scmp.eq.s32.totalorder %s34, 1
    %p592 = scmp.ne.s32.totalorder %s587, %s589
    %p593 = scmp.eq.s32.totalorder %s34, 0
    %p594 = por %p592, %p593
    %p595 = scmp.ne.s32.totalorder %s587, %s589
    %p596 = scmp.eq.s32.totalorder %s39, 1
    %p597 = por %p595, %p596
    %p598 = scmp.ne.s32.totalorder %s589, %s590
    %p599 = scmp.eq.s32.totalorder %s39, 0
    %p600 = por %p598, %p599
    %p601 = scmp.ne.s32.totalorder %s589, %s590
    %p602 = scmp.eq.s32.totalorder %s40, 1
    %p603 = por %p601, %p602
    %p605 = scmp.ne.s32.totalorder %s590, %s604
    %p606 = scmp.eq.s32.totalorder %s40, 0
    %p607 = por %p605, %p606
    %s608 = ssub.s32 %s34, %s41
    %p609 = scmp.eq.s32.totalorder %s608, 0
    %s611 = sadd.s32 %s610, 1
    %s612 = scalar_select %p609, %s610, %s611
    %p615 = pneg %p609
    %p616 = scmp.eq.s32.totalorder %s34, 1
    %p617 = por %p615, %p616
    %p618 = scmp.ne.s32.totalorder %s610, %s613
    %p619 = scmp.eq.s32.totalorder %s34, 0
    %p620 = por %p618, %p619
    %p621 = scmp.ne.s32.totalorder %s610, %s613
    %p622 = scmp.eq.s32.totalorder %s39, 1
    %p623 = por %p621, %p622
    %p624 = scmp.ne.s32.totalorder %s613, %s614
    %p625 = scmp.eq.s32.totalorder %s39, 0
    %p626 = por %p624, %p625
    %p627 = scmp.ne.s32.totalorder %s613, %s614
    %p628 = scmp.eq.s32.totalorder %s40, 1
    %p629 = por %p627, %p628
    %p631 = scmp.ne.s32.totalorder %s614, %s630
    %p632 = scmp.eq.s32.totalorder %s40, 0
    %p633 = por %p631, %p632
    %p634 = scmp.le.s32.totalorder 1, %s34
    %p635 = scmp.lt.s32.totalorder %s34, 3
    %p636 = pnand %p634, %p635
    %p637 = pneg %p636
    // Predicated region
    $region9: #{gma_forward.5} parent=5 // pred_check
      _
    $region10: #{gma_forward.5} parent=5 // pred_check_branch
      %639 = sbr.rel (%p636) target = $region12
    $region11: #{gma_forward.5} parent=5 // pred_region
      %s640 = ssub.s32 %s34, 1
      // Predicated region
      $region13: #{gma_forward.5} parent=11 // pred_check
        %p641 = pneg %p159
      $region14: #{gma_forward.5} parent=11 // pred_check_branch
        %643 = sbr.rel (%p641) target = $region16
      $region15: #{gma_forward.5} parent=11 // pred_region
        _
      $region16: #{gma_forward.5} parent=11 // pred_fallthru
        _
      // Predicated region
      $region17: #{gma_forward.5} parent=11 // pred_check
        %p644 = pneg %p180
      $region18: #{gma_forward.5} parent=11 // pred_check_branch
        %646 = sbr.rel (%p644) target = $region20
      $region19: #{gma_forward.5} parent=11 // pred_region
        _
      $region20: #{gma_forward.5} parent=11 // pred_fallthru
        _
      // Predicated region
      $region21: #{gma_forward.5} parent=11 // pred_check
        %p647 = pneg %p201
      $region22: #{gma_forward.5} parent=11 // pred_check_branch
        %649 = sbr.rel (%p647) target = $region24
      $region23: #{gma_forward.5} parent=11 // pred_region
        _
      $region24: #{gma_forward.5} parent=11 // pred_fallthru
        _
      // Predicated region
      $region25: #{gma_forward.5} parent=11 // pred_check
        %p650 = pneg %p222
      $region26: #{gma_forward.5} parent=11 // pred_check_branch
        %652 = sbr.rel (%p650) target = $region28
      $region27: #{gma_forward.5} parent=11 // pred_region
        _
      $region28: #{gma_forward.5} parent=11 // pred_fallthru
        _
      // Predicated region
      $region29: #{gma_forward.5} parent=11 // pred_check
        %p653 = pneg %p243
      $region30: #{gma_forward.5} parent=11 // pred_check_branch
        %655 = sbr.rel (%p653) target = $region32
      $region31: #{gma_forward.5} parent=11 // pred_region
        _
      $region32: #{gma_forward.5} parent=11 // pred_fallthru
        _
      // Predicated region
      $region33: #{gma_forward.5} parent=11 // pred_check
        %p656 = pneg %p264
      $region34: #{gma_forward.5} parent=11 // pred_check_branch
        %658 = sbr.rel (%p656) target = $region36
      $region35: #{gma_forward.5} parent=11 // pred_region
        _
      $region36: #{gma_forward.5} parent=11 // pred_fallthru
        _
      // Predicated region
      $region37: #{gma_forward.5} parent=11 // pred_check
        %p659 = pneg %p285
      $region38: #{gma_forward.5} parent=11 // pred_check_branch
        %661 = sbr.rel (%p659) target = $region40
      $region39: #{gma_forward.5} parent=11 // pred_region
        _
      $region40: #{gma_forward.5} parent=11 // pred_fallthru
        _
      // Predicated region
      $region41: #{gma_forward.5} parent=11 // pred_check
        %p662 = pneg %p306
      $region42: #{gma_forward.5} parent=11 // pred_check_branch
        %664 = sbr.rel (%p662) target = $region44
      $region43: #{gma_forward.5} parent=11 // pred_region
        _
      $region44: #{gma_forward.5} parent=11 // pred_fallthru
        _
      // Predicated region
      $region45: #{gma_forward.5} parent=11 // pred_check
        %p665 = pneg %p327
      $region46: #{gma_forward.5} parent=11 // pred_check_branch
        %667 = sbr.rel (%p665) target = $region48
      $region47: #{gma_forward.5} parent=11 // pred_region
        _
      $region48: #{gma_forward.5} parent=11 // pred_fallthru
        _
      // Predicated region
      $region49: #{gma_forward.5} parent=11 // pred_check
        %p668 = pneg %p348
      $region50: #{gma_forward.5} parent=11 // pred_check_branch
        %670 = sbr.rel (%p668) target = $region52
      $region51: #{gma_forward.5} parent=11 // pred_region
        _
      $region52: #{gma_forward.5} parent=11 // pred_fallthru
        _
      // Predicated region
      $region53: #{gma_forward.5} parent=11 // pred_check
        %p671 = pneg %p369
      $region54: #{gma_forward.5} parent=11 // pred_check_branch
        %673 = sbr.rel (%p671) target = $region56
      $region55: #{gma_forward.5} parent=11 // pred_region
        _
      $region56: #{gma_forward.5} parent=11 // pred_fallthru
        _
      // Predicated region
      $region57: #{gma_forward.5} parent=11 // pred_check
        %p674 = pneg %p390
      $region58: #{gma_forward.5} parent=11 // pred_check_branch
        %676 = sbr.rel (%p674) target = $region60
      $region59: #{gma_forward.5} parent=11 // pred_region
        _
      $region60: #{gma_forward.5} parent=11 // pred_fallthru
        _
      // Predicated region
      $region61: #{gma_forward.5} parent=11 // pred_check
        %p677 = pneg %p411
      $region62: #{gma_forward.5} parent=11 // pred_check_branch
        %679 = sbr.rel (%p677) target = $region64
      $region63: #{gma_forward.5} parent=11 // pred_region
        _
      $region64: #{gma_forward.5} parent=11 // pred_fallthru
        _
      // Predicated region
      $region65: #{gma_forward.5} parent=11 // pred_check
        %p680 = pneg %p432
      $region66: #{gma_forward.5} parent=11 // pred_check_branch
        %682 = sbr.rel (%p680) target = $region68
      $region67: #{gma_forward.5} parent=11 // pred_region
        _
      $region68: #{gma_forward.5} parent=11 // pred_fallthru
        _
      // Predicated region
      $region69: #{gma_forward.5} parent=11 // pred_check
        %p683 = pneg %p453
      $region70: #{gma_forward.5} parent=11 // pred_check_branch
        %685 = sbr.rel (%p683) target = $region72
      $region71: #{gma_forward.5} parent=11 // pred_region
        _
      $region72: #{gma_forward.5} parent=11 // pred_fallthru
        _
      // Predicated region
      $region73: #{gma_forward.5} parent=11 // pred_check
        %p686 = pneg %p474
      $region74: #{gma_forward.5} parent=11 // pred_check_branch
        %688 = sbr.rel (%p686) target = $region76
      $region75: #{gma_forward.5} parent=11 // pred_region
        _
      $region76: #{gma_forward.5} parent=11 // pred_fallthru
        _
      // Predicated region
      $region77: #{gma_forward.5} parent=11 // pred_check
        %p689 = pneg %p495
      $region78: #{gma_forward.5} parent=11 // pred_check_branch
        %691 = sbr.rel (%p689) target = $region80
      $region79: #{gma_forward.5} parent=11 // pred_region
        _
      $region80: #{gma_forward.5} parent=11 // pred_fallthru
        _
      // Predicated region
      $region81: #{gma_forward.5} parent=11 // pred_check
        %p692 = pneg %p516
      $region82: #{gma_forward.5} parent=11 // pred_check_branch
        %694 = sbr.rel (%p692) target = $region84
      $region83: #{gma_forward.5} parent=11 // pred_region
        _
      $region84: #{gma_forward.5} parent=11 // pred_fallthru
        _
      // Predicated region
      $region85: #{gma_forward.5} parent=11 // pred_check
        %p695 = pneg %p537
      $region86: #{gma_forward.5} parent=11 // pred_check_branch
        %697 = sbr.rel (%p695) target = $region88
      $region87: #{gma_forward.5} parent=11 // pred_region
        _
      $region88: #{gma_forward.5} parent=11 // pred_fallthru
        _
      // Predicated region
      $region89: #{gma_forward.5} parent=11 // pred_check
        %p698 = pneg %p558
      $region90: #{gma_forward.5} parent=11 // pred_check_branch
        %700 = sbr.rel (%p698) target = $region92
      $region91: #{gma_forward.5} parent=11 // pred_region
        _
      $region92: #{gma_forward.5} parent=11 // pred_fallthru
        _
      // Predicated region
      $region93: #{gma_forward.5} parent=11 // pred_check
        %p701 = pneg %p579
      $region94: #{gma_forward.5} parent=11 // pred_check_branch
        %703 = sbr.rel (%p701) target = $region96
      $region95: #{gma_forward.5} parent=11 // pred_region
        _
      $region96: #{gma_forward.5} parent=11 // pred_fallthru
        _
      // Predicated region
      $region97: #{gma_forward.5} parent=11 // pred_check
        %p704 = pneg %p600
      $region98: #{gma_forward.5} parent=11 // pred_check_branch
        %706 = sbr.rel (%p704) target = $region100
      $region99: #{gma_forward.5} parent=11 // pred_region
        _
      $region100: #{gma_forward.5} parent=11 // pred_fallthru
        _
    $region12: #{gma_forward.5} parent=5 // pred_fallthru
      _
    %p707 = scmp.lt.s32.totalorder %s34, 2
    // Predicated region
    $region101: #{gma_forward.5} parent=5 // pred_check
      %p708 = pneg %p707
    $region102: #{gma_forward.5} parent=5 // pred_check_branch
      %710 = sbr.rel (%p708) target = $region104
    $region103: #{gma_forward.5} parent=5 // pred_region
      // Predicated region
      $region105: #{gma_forward.5} parent=103 // pred_check
        %p711 = pneg %p54
      $region106: #{gma_forward.5} parent=103 // pred_check_branch
        %713 = sbr.rel (%p711) target = $region108
      $region107: #{gma_forward.5} parent=103 // pred_region
        %p714 = scmp.lt.s32.totalorder %s34, 1
        %s715 = scalar_select %p714, %s34, 1
        %s716 = smul.addr %s715, 8
        %s717 = smul.addr %s716, 8
        %s718 = scalar_lea.vmem %s0, %s717
      $region108: #{gma_forward.5} parent=103 // pred_fallthru
        _
      // Predicated region
      $region109: #{gma_forward.5} parent=103 // pred_check
        %p719 = pneg %p80
      $region110: #{gma_forward.5} parent=103 // pred_check_branch
        %721 = sbr.rel (%p719) target = $region112
      $region111: #{gma_forward.5} parent=103 // pred_region
        %p722 = scmp.lt.s32.totalorder %s34, 1
        %s723 = scalar_select %p722, %s34, 1
        %s724 = smul.addr %s723, 8
        %s725 = smul.addr %s724, 8
        %s726 = scalar_lea.vmem %s1, %s725
      $region112: #{gma_forward.5} parent=103 // pred_fallthru
        _
      // Predicated region
      $region113: #{gma_forward.5} parent=103 // pred_check
        %p727 = pneg %p106
      $region114: #{gma_forward.5} parent=103 // pred_check_branch
        %729 = sbr.rel (%p727) target = $region116
      $region115: #{gma_forward.5} parent=103 // pred_region
        %p730 = scmp.lt.s32.totalorder %s34, 1
        %s731 = scalar_select %p730, %s34, 1
        %s732 = smul.addr %s731, 8
        %s733 = smul.addr %s732, 8
        %s734 = scalar_lea.vmem %s2, %s733
      $region116: #{gma_forward.5} parent=103 // pred_fallthru
        _
      // Predicated region
      $region117: #{gma_forward.5} parent=103 // pred_check
        %p735 = pneg %p132
      $region118: #{gma_forward.5} parent=103 // pred_check_branch
        %737 = sbr.rel (%p735) target = $region120
      $region119: #{gma_forward.5} parent=103 // pred_region
        %p738 = scmp.lt.s32.totalorder %s34, 1
        %s739 = scalar_select %p738, %s34, 1
        %s740 = smul.addr %s739, 8
        %s741 = smul.addr %s740, 8
        %s742 = scalar_lea.vmem %s3, %s741
      $region120: #{gma_forward.5} parent=103 // pred_fallthru
        _
    $region104: #{gma_forward.5} parent=5 // pred_fallthru
      _
    %p743 = scmp.le.s32.totalorder 1, %s34
    %p744 = scmp.lt.s32.totalorder %s34, 3
    %p745 = pnand %p743, %p744
    %p746 = pneg %p745
    // Predicated region
    $region121: #{gma_forward.5} parent=5 // pred_check
      _
    $region122: #{gma_forward.5} parent=5 // pred_check_branch
      %748 = sbr.rel (%p745) target = $region124
    $region123: #{gma_forward.5} parent=5 // pred_region
      %s749 = ssub.s32 %s34, 1
      %p750 = scmp.lt.s32.totalorder %s39, 1
      %s751 = scalar_select %p750, %s39, 1
      %s752 = smul.addr %s751, 8
      %s753 = smul.addr %s752, 8
      %s754 = scalar_lea.vmem %s0, %s753
      %p755 = pneg %p60
      %p756 = pneg %p57
      %p757 = scmp.lt.s32.totalorder %s39, 1
      %s758 = scalar_select %p757, %s39, 1
      %s759 = smul.addr %s758, 8
      %s760 = smul.addr %s759, 8
      %s761 = scalar_lea.vmem %s1, %s760
      %p762 = pneg %p86
      %p763 = pneg %p83
      %p764 = scmp.lt.s32.totalorder %s39, 1
      %s765 = scalar_select %p764, %s39, 1
      %s766 = smul.addr %s765, 8
      %s767 = smul.addr %s766, 8
      %s768 = scalar_lea.vmem %s2, %s767
      %p769 = pneg %p112
      %p770 = pneg %p109
      %p771 = scmp.lt.s32.totalorder %s39, 1
      %s772 = scalar_select %p771, %s39, 1
      %s773 = smul.addr %s772, 8
      %s774 = smul.addr %s773, 8
      %s775 = scalar_lea.vmem %s3, %s774
      %p776 = pneg %p138
      %p777 = pneg %p135
      %p778 = pneg %p159
      %p779 = pneg %p156
      %p780 = pneg %p180
      %p781 = pneg %p177
      %p782 = pneg %p201
      %p783 = pneg %p198
      %p784 = pneg %p222
      %p785 = pneg %p219
      %p786 = pneg %p243
      %p787 = pneg %p240
      %p788 = pneg %p264
      %p789 = pneg %p261
      %p790 = pneg %p285
      %p791 = pneg %p282
      %p792 = pneg %p306
      %p793 = pneg %p303
      %p794 = pneg %p327
      %p795 = pneg %p324
      %p796 = pneg %p348
      %p797 = pneg %p345
      %p798 = pneg %p369
      %p799 = pneg %p366
      %p800 = pneg %p390
      %p801 = pneg %p387
      %p802 = pneg %p411
      %p803 = pneg %p408
      %p804 = pneg %p432
      %p805 = pneg %p429
      %p806 = pneg %p453
      %p807 = pneg %p450
      %p808 = pneg %p474
      %p809 = pneg %p471
      %p810 = pneg %p495
      %p811 = pneg %p492
      %p812 = pneg %p516
      %p813 = pneg %p513
      %p814 = pneg %p537
      %p815 = pneg %p534
      %p816 = pneg %p558
      %p817 = pneg %p555
      %p818 = pneg %p579
      %p819 = pneg %p576
      %p820 = pneg %p600
      %p821 = pneg %p597
      %p822 = pneg %p626
      %p823 = pneg %p623
      %p824 = scmp.lt.s32.totalorder %s39, 1
      %s825 = scalar_select %p824, %s39, 1
      %s826 = smul.addr %s825, 8
      %s827 = smul.addr %s826, 8
      %s828 = scalar_lea.vmem %s26, %s827
      %p829 = scmp.lt.s32.totalorder %s39, 1
      %s830 = scalar_select %p829, %s39, 1
      %s831 = smul.addr %s830, 8
      %s832 = smul.addr %s831, 8
      %s833 = scalar_lea.vmem %s0, %s832
      %p834 = scmp.lt.s32.totalorder %s39, 1
      %s835 = scalar_select %p834, %s39, 1
      %s836 = smul.addr %s835, 8
      %s837 = smul.addr %s836, 8
      %s838 = scalar_lea.vmem %s1, %s837
      %p839 = scmp.lt.s32.totalorder %s39, 1
      %s840 = scalar_select %p839, %s39, 1
      %s841 = smul.addr %s840, 8
      %s842 = smul.addr %s841, 8
      %s843 = scalar_lea.vmem %s2, %s842
      %p844 = scmp.lt.s32.totalorder %s39, 1
      %s845 = scalar_select %p844, %s39, 1
      %s846 = smul.addr %s845, 8
      %s847 = smul.addr %s846, 8
      %s848 = scalar_lea.vmem %s3, %s847
      %p849 = scmp.lt.s32.totalorder %s39, 1
      %s850 = scalar_select %p849, %s39, 1
      %s851 = smul.addr %s850, 8
      %s852 = smul.addr %s851, 8
      %s853 = scalar_lea.vmem %s26, %s852
      %v855 = vld [vmem:[%s833] sm:$0xff]
      %v856 = vld [vmem:[%s833 + $0x8] sm:$0xff]
      %v857 = vld [vmem:[%s833 + $0x10] sm:$0xff]
      %v858 = vld [vmem:[%s833 + $0x18] sm:$0xff]
      %v859 = vld [vmem:[%s833 + $0x20] sm:$0xff]
      %v860 = vld [vmem:[%s833 + $0x28] sm:$0xff]
      %v861 = vld [vmem:[%s833 + $0x30] sm:$0xff]
      %v862 = vld [vmem:[%s833 + $0x38] sm:$0xff]
      %v863 = vpack.c.bf16 %v856, %v855
      %v864 = vpack.c.bf16 %v858, %v857
      %v865 = vpack.c.bf16 %v860, %v859
      %v866 = vpack.c.bf16 %v862, %v861
      %v867 = vld [vmem:[%s838] sm:$0xff]
      %v868 = vld [vmem:[%s838 + $0x8] sm:$0xff]
      %v869 = vld [vmem:[%s838 + $0x10] sm:$0xff]
      %v870 = vld [vmem:[%s838 + $0x18] sm:$0xff]
      %v871 = vld [vmem:[%s838 + $0x20] sm:$0xff]
      %v872 = vld [vmem:[%s838 + $0x28] sm:$0xff]
      %v873 = vld [vmem:[%s838 + $0x30] sm:$0xff]
      %v874 = vld [vmem:[%s838 + $0x38] sm:$0xff]
      %v875 = vpack.c.bf16 %v868, %v867
      %v876 = vpack.c.bf16 %v870, %v869
      %v877 = vpack.c.bf16 %v872, %v871
      %v878 = vpack.c.bf16 %v874, %v873
      %v879 = vld [vmem:[%s843] sm:$0xff]
      %v880 = vld [vmem:[%s843 + $0x8] sm:$0xff]
      %v881 = vld [vmem:[%s843 + $0x10] sm:$0xff]
      %v882 = vld [vmem:[%s843 + $0x18] sm:$0xff]
      %v883 = vld [vmem:[%s843 + $0x20] sm:$0xff]
      %v884 = vld [vmem:[%s843 + $0x28] sm:$0xff]
      %v885 = vld [vmem:[%s843 + $0x30] sm:$0xff]
      %v886 = vld [vmem:[%s843 + $0x38] sm:$0xff]
      %v887 = vld [vmem:[%s848] sm:$0xff]
      %v888 = vld [vmem:[%s848 + $0x8] sm:$0xff]
      %v889 = vld [vmem:[%s848 + $0x10] sm:$0xff]
      %v890 = vld [vmem:[%s848 + $0x18] sm:$0xff]
      %v891 = vld [vmem:[%s848 + $0x20] sm:$0xff]
      %v892 = vld [vmem:[%s848 + $0x28] sm:$0xff]
      %v893 = vld [vmem:[%s848 + $0x30] sm:$0xff]
      %v894 = vld [vmem:[%s848 + $0x38] sm:$0xff]
      %vm895 = vcmask 523264
      %v897 = vsel %vm895, %v863, 0
      %v900 = vsel %vm895, %v864, 0
      %v903 = vsel %vm895, %v865, 0
      %v906 = vsel %vm895, %v866, 0
      %v909 = vsel %vm895, %v875, 0
      %v912 = vsel %vm895, %v876, 0
      %v915 = vsel %vm895, %v877, 0
      %v918 = vsel %vm895, %v878, 0
      %920 = vmatpush.bf16.xpose.msra.mxu0 0
      %921 = vmatpush.bf16.xpose.msra.mxu0 0
      %922 = vmatpush.bf16.xpose.msra.mxu0 0
      %923 = vmatpush.bf16.xpose.msra.mxu0 0
      %924 = vmatpush.bf16.xpose.msra.mxu0 %v918
      %925 = vmatpush.bf16.xpose.msra.mxu0 %v915
      %926 = vmatpush.bf16.xpose.msra.mxu0 %v912
      %927 = vmatpush.bf16.xpose.msra.mxu0 %v909
      %928 = vmatmul.bf16.gmra.mxu0 %v897
      %v929 = vpop.f32.mrf.mxu0
      %v930 = vadd.f32 0.0, %v929
      %v931 = vpop.f32.mrf.mxu0
      %v932 = vadd.f32 0.0, %v931
      %933 = vmatmul.bf16.gmra.mxu0 %v900
      %v934 = vpop.f32.mrf.mxu0
      %v935 = vadd.f32 0.0, %v934
      %v936 = vpop.f32.mrf.mxu0
      %v937 = vadd.f32 0.0, %v936
      %938 = vmatmul.bf16.gmra.mxu0 %v903
      %v939 = vpop.f32.mrf.mxu0
      %v940 = vadd.f32 0.0, %v939
      %v941 = vpop.f32.mrf.mxu0
      %v942 = vadd.f32 0.0, %v941
      %943 = vmatmul.bf16.gmra.mxu0 %v906
      %v944 = vpop.f32.mrf.mxu0
      %v945 = vadd.f32 0.0, %v944
      %v946 = vpop.f32.mrf.mxu0
      %v947 = vadd.f32 0.0, %v946
      %948 = vdwg.mxu0
      %v949 = vmul.f32 %v930, 0.125
      %v950 = vmul.f32 %v932, 0.125
      %v951 = vmul.f32 %v935, 0.125
      %v952 = vmul.f32 %v937, 0.125
      %v953 = vmul.f32 %v940, 0.125
      %v954 = vmul.f32 %v942, 0.125
      %v955 = vmul.f32 %v945, 0.125
      %v956 = vmul.f32 %v947, 0.125
      %v957 = vpack.c.bf16 %v950, %v949
      %v958 = vpack.c.bf16 %v952, %v951
      %v959 = vpack.c.bf16 %v954, %v953
      %v960 = vpack.c.bf16 %v956, %v955
      %v961 = vld [vmem:[%s6] sm:$0xff]
      %v962 = vld [vmem:[%s6 + $0x8] sm:$0xff]
      %v963 = vld [vmem:[%s6 + $0x10] sm:$0xff]
      %v964 = vld [vmem:[%s6 + $0x18] sm:$0xff]
      %v965 = vld [vmem:[%s6 + $0x20] sm:$0xff]
      %v966 = vld [vmem:[%s6 + $0x28] sm:$0xff]
      %v967 = vld [vmem:[%s6 + $0x30] sm:$0xff]
      %v968 = vld [vmem:[%s6 + $0x38] sm:$0xff]
      %v969 = vpack.c.bf16 %v962, %v961
      %v970 = vpack.c.bf16 %v964, %v963
      %v971 = vpack.c.bf16 %v966, %v965
      %v972 = vpack.c.bf16 %v968, %v967
      %v973 = vld [vmem:[%s8] sm:$0x1]
      %v975 = vperm.slane %v973, 0
      %v978 = vsel %vm895, %v957, 0
      %v981 = vsel %vm895, %v958, 0
      %v984 = vsel %vm895, %v959, 0
      %v987 = vsel %vm895, %v960, 0
      %989 = vmatpush.bf16.msra.mxu0 0
      %990 = vmatpush.bf16.msra.mxu0 0
      %991 = vmatpush.bf16.msra.mxu0 0
      %992 = vmatpush.bf16.msra.mxu0 0
      %993 = vmatpush.bf16.msra.mxu0 %v972
      %994 = vmatpush.bf16.msra.mxu0 %v971
      %995 = vmatpush.bf16.msra.mxu0 %v970
      %996 = vmatpush.bf16.msra.mxu0 %v969
      %997 = vmatmul.bf16.gmra.mxu0 %v978
      %v998 = vpop.f32.mrf.mxu0
      %v999 = vadd.f32 %v975, %v998
      %v1000 = vpop.f32.mrf.mxu0
      %v1001 = vadd.f32 %v975, %v1000
      %1002 = vmatmul.bf16.gmra.mxu0 %v981
      %v1003 = vpop.f32.mrf.mxu0
      %v1004 = vadd.f32 %v975, %v1003
      %v1005 = vpop.f32.mrf.mxu0
      %v1006 = vadd.f32 %v975, %v1005
      %1007 = vmatmul.bf16.gmra.mxu0 %v984
      %v1008 = vpop.f32.mrf.mxu0
      %v1009 = vadd.f32 %v975, %v1008
      %v1010 = vpop.f32.mrf.mxu0
      %v1011 = vadd.f32 %v975, %v1010
      %1012 = vmatmul.bf16.gmra.mxu0 %v987
      %v1013 = vpop.f32.mrf.mxu0
      %v1014 = vadd.f32 %v975, %v1013
      %v1015 = vpop.f32.mrf.mxu0
      %v1016 = vadd.f32 %v975, %v1015
      %1017 = vdwg.mxu0
      %v1018 = vld [vmem:[%s4] sm:$0xff]
      %v1019 = vld [vmem:[%s4 + $0x8] sm:$0xff]
      %v1020 = vld [vmem:[%s4 + $0x10] sm:$0xff]
      %v1021 = vld [vmem:[%s4 + $0x18] sm:$0xff]
      %v1022 = vld [vmem:[%s5] sm:$0x1]
      %v1024 = vperm.slane %v1022, 0
      %vm1026 = vcmask 261120
      %v1028 = vsel %vm1026, %v887, 0
      %v1031 = vsel %vm1026, %v888, 0
      %v1034 = vsel %vm1026, %v889, 0
      %v1037 = vsel %vm1026, %v890, 0
      %v1040 = vsel %vm1026, %v891, 0
      %v1043 = vsel %vm1026, %v892, 0
      %v1046 = vsel %vm1026, %v893, 0
      %v1049 = vsel %vm1026, %v894, 0
      %1051 = vmatpush.msra.mxu0 0.0
      %1052 = vmatpush.msra.mxu0 0.0
      %1053 = vmatpush.msra.mxu0 0.0
      %1054 = vmatpush.msra.mxu0 0.0
      %1055 = vmatpush.msra.mxu0 0.0
      %1056 = vmatpush.msra.mxu0 0.0
      %1057 = vmatpush.msra.mxu0 0.0
      %1058 = vmatpush.msra.mxu0 0.0
      %1059 = vmatpush.msra.mxu0 0.0
      %1060 = vmatpush.msra.mxu0 0.0
      %1061 = vmatpush.msra.mxu0 0.0
      %1062 = vmatpush.msra.mxu0 0.0
      %1063 = vmatpush.msra.mxu0 %v1021
      %1064 = vmatpush.msra.mxu0 %v1020
      %1065 = vmatpush.msra.mxu0 %v1019
      %1066 = vmatpush.msra.mxu0 %v1018
      %1067 = vmatmul.f32.gmra.mxu0 %v1028
      %v1068 = vpop.f32.mrf.mxu0
      %v1069 = vadd.f32 %v1024, %v1068
      %1070 = vmatmul.f32.gmra.mxu0 %v1031
      %v1071 = vpop.f32.mrf.mxu0
      %v1072 = vadd.f32 %v1024, %v1071
      %1073 = vmatmul.f32.gmra.mxu0 %v1034
      %v1074 = vpop.f32.mrf.mxu0
      %v1075 = vadd.f32 %v1024, %v1074
      %1076 = vmatmul.f32.gmra.mxu0 %v1037
      %v1077 = vpop.f32.mrf.mxu0
      %v1078 = vadd.f32 %v1024, %v1077
      %1079 = vmatmul.f32.gmra.mxu0 %v1040
      %v1080 = vpop.f32.mrf.mxu0
      %v1081 = vadd.f32 %v1024, %v1080
      %1082 = vmatmul.f32.gmra.mxu0 %v1043
      %v1083 = vpop.f32.mrf.mxu0
      %v1084 = vadd.f32 %v1024, %v1083
      %1085 = vmatmul.f32.gmra.mxu0 %v1046
      %v1086 = vpop.f32.mrf.mxu0
      %v1087 = vadd.f32 %v1024, %v1086
      %1088 = vmatmul.f32.gmra.mxu0 %v1049
      %v1089 = vpop.f32.mrf.mxu0
      %v1090 = vadd.f32 %v1024, %v1089
      %1091 = vdwg.mxu0
      %1100 = vrot.lane.b32.xlu0 %v1069, 96
      %v1101 = vpop.permute.xlu0 %1100
      %1102 = vrot.lane.b32.xlu0 %v1072, 96
      %v1103 = vpop.permute.xlu0 %1102
      %1104 = vrot.lane.b32.xlu0 %v1075, 96
      %v1105 = vpop.permute.xlu0 %1104
      %1106 = vrot.lane.b32.xlu0 %v1078, 96
      %v1107 = vpop.permute.xlu0 %1106
      %1108 = vrot.lane.b32.xlu0 %v1081, 96
      %v1109 = vpop.permute.xlu0 %1108
      %1110 = vrot.lane.b32.xlu0 %v1084, 96
      %v1111 = vpop.permute.xlu0 %1110
      %1112 = vrot.lane.b32.xlu0 %v1087, 96
      %v1113 = vpop.permute.xlu0 %1112
      %1114 = vrot.lane.b32.xlu0 %v1090, 96
      %v1115 = vpop.permute.xlu0 %1114
      %v1116 = vsel %vm1026, %v1069, 0
      %v1118 = vsel %vm1026, %v1072, 0
      %v1120 = vsel %vm1026, %v1075, 0
      %v1122 = vsel %vm1026, %v1078, 0
      %v1124 = vsel %vm1026, %v1081, 0
      %v1126 = vsel %vm1026, %v1084, 0
      %v1128 = vsel %vm1026, %v1087, 0
      %v1130 = vsel %vm1026, %v1090, 0
      %v1132 = vsel %vm1026, %v1101, 0
      %v1134 = vsel %vm1026, %v1103, 0
      %v1136 = vsel %vm1026, %v1105, 0
      %v1138 = vsel %vm1026, %v1107, 0
      %v1140 = vsel %vm1026, %v1109, 0
      %v1142 = vsel %vm1026, %v1111, 0
      %v1144 = vsel %vm1026, %v1113, 0
      %v1146 = vsel %vm1026, %v1115, 0
      %1148 = vmatpush.xpose.msra.mxu0 0.0
      %1149 = vmatpush.xpose.msra.mxu0 0.0
      %1150 = vmatpush.xpose.msra.mxu0 0.0
      %1151 = vmatpush.xpose.msra.mxu0 0.0
      %1152 = vmatpush.xpose.msra.mxu0 0.0
      %1153 = vmatpush.xpose.msra.mxu0 0.0
      %1154 = vmatpush.xpose.msra.mxu0 0.0
      %1155 = vmatpush.xpose.msra.mxu0 0.0
      %1156 = vmatpush.xpose.msra.mxu0 %v1146
      %1157 = vmatpush.xpose.msra.mxu0 %v1144
      %1158 = vmatpush.xpose.msra.mxu0 %v1142
      %1159 = vmatpush.xpose.msra.mxu0 %v1140
      %1160 = vmatpush.xpose.msra.mxu0 %v1138
      %1161 = vmatpush.xpose.msra.mxu0 %v1136
      %1162 = vmatpush.xpose.msra.mxu0 %v1134
      %1163 = vmatpush.xpose.msra.mxu0 %v1132
      %1164 = vmatmul.f32.gmra.mxu0 %v1116
      %v1165 = vpop.f32.mrf.mxu0
      %v1166 = vadd.f32 0.0, %v1165
      %1167 = vmatmul.f32.gmra.mxu0 %v1118
      %v1168 = vpop.f32.mrf.mxu0
      %v1169 = vadd.f32 0.0, %v1168
      %1170 = vmatmul.f32.gmra.mxu0 %v1120
      %v1171 = vpop.f32.mrf.mxu0
      %v1172 = vadd.f32 0.0, %v1171
      %1173 = vmatmul.f32.gmra.mxu0 %v1122
      %v1174 = vpop.f32.mrf.mxu0
      %v1175 = vadd.f32 0.0, %v1174
      %1176 = vmatmul.f32.gmra.mxu0 %v1124
      %v1177 = vpop.f32.mrf.mxu0
      %v1178 = vadd.f32 0.0, %v1177
      %1179 = vmatmul.f32.gmra.mxu0 %v1126
      %v1180 = vpop.f32.mrf.mxu0
      %v1181 = vadd.f32 0.0, %v1180
      %1182 = vmatmul.f32.gmra.mxu0 %v1128
      %v1183 = vpop.f32.mrf.mxu0
      %v1184 = vadd.f32 0.0, %v1183
      %1185 = vmatmul.f32.gmra.mxu0 %v1130
      %v1186 = vpop.f32.mrf.mxu0
      %v1187 = vadd.f32 0.0, %v1186
      %1188 = vdwg.mxu0
      %v1189 = vmul.f32 %v1166, 0.17677669
      %v1190 = vmul.f32 %v1169, 0.17677669
      %v1191 = vmul.f32 %v1172, 0.17677669
      %v1192 = vmul.f32 %v1175, 0.17677669
      %v1193 = vmul.f32 %v1178, 0.17677669
      %v1194 = vmul.f32 %v1181, 0.17677669
      %v1195 = vmul.f32 %v1184, 0.17677669
      %v1196 = vmul.f32 %v1187, 0.17677669
      %v1197 = vsel %vm895, %v1189, -inf
      %1198 = vmax.xlane.f32.xlu0 %v1197
      %v1199 = vpop.xlane.xlu0 %1198
      %v1200 = vsel %vm895, %v1190, -inf
      %1201 = vmax.xlane.f32.xlu0 %v1200
      %v1202 = vpop.xlane.xlu0 %1201
      %v1203 = vsel %vm895, %v1191, -inf
      %1204 = vmax.xlane.f32.xlu0 %v1203
      %v1205 = vpop.xlane.xlu0 %1204
      %v1206 = vsel %vm895, %v1192, -inf
      %1207 = vmax.xlane.f32.xlu0 %v1206
      %v1208 = vpop.xlane.xlu0 %1207
      %v1209 = vsel %vm895, %v1193, -inf
      %1210 = vmax.xlane.f32.xlu0 %v1209
      %v1211 = vpop.xlane.xlu0 %1210
      %v1212 = vsel %vm895, %v1194, -inf
      %1213 = vmax.xlane.f32.xlu0 %v1212
      %v1214 = vpop.xlane.xlu0 %1213
      %v1215 = vsel %vm895, %v1195, -inf
      %1216 = vmax.xlane.f32.xlu0 %v1215
      %v1217 = vpop.xlane.xlu0 %1216
      %v1218 = vsel %vm895, %v1196, -inf
      %1219 = vmax.xlane.f32.xlu0 %v1218
      %v1220 = vpop.xlane.xlu0 %1219
      %v1221 = vsub.f32 %v1189, %v1199
      %v1222 = vsub.f32 %v1190, %v1202
      %v1223 = vsub.f32 %v1191, %v1205
      %v1224 = vsub.f32 %v1192, %v1208
      %v1225 = vsub.f32 %v1193, %v1211
      %v1226 = vsub.f32 %v1194, %v1214
      %v1227 = vsub.f32 %v1195, %v1217
      %v1228 = vsub.f32 %v1196, %v1220
      %v1229 = vmul.f32 %v1221, 1.442695
      %v1230 = vpow.pop %v1229
      %v1231 = vmul.f32 %v1222, 1.442695
      %v1232 = vpow.pop %v1231
      %v1233 = vmul.f32 %v1223, 1.442695
      %v1234 = vpow.pop %v1233
      %v1235 = vmul.f32 %v1224, 1.442695
      %v1236 = vpow.pop %v1235
      %v1237 = vmul.f32 %v1225, 1.442695
      %v1238 = vpow.pop %v1237
      %v1239 = vmul.f32 %v1226, 1.442695
      %v1240 = vpow.pop %v1239
      %v1241 = vmul.f32 %v1227, 1.442695
      %v1242 = vpow.pop %v1241
      %v1243 = vmul.f32 %v1228, 1.442695
      %v1244 = vpow.pop %v1243
      %v1245 = vsel %vm895, %v1230, 0.0
      %1246 = vadd.xlane.f32.xlu0 %v1245
      %v1247 = vpop.xlane.xlu0 %1246
      %v1248 = vsel %vm895, %v1232, 0.0
      %1249 = vadd.xlane.f32.xlu0 %v1248
      %v1250 = vpop.xlane.xlu0 %1249
      %v1251 = vsel %vm895, %v1234, 0.0
      %1252 = vadd.xlane.f32.xlu0 %v1251
      %v1253 = vpop.xlane.xlu0 %1252
      %v1254 = vsel %vm895, %v1236, 0.0
      %1255 = vadd.xlane.f32.xlu0 %v1254
      %v1256 = vpop.xlane.xlu0 %1255
      %v1257 = vsel %vm895, %v1238, 0.0
      %1258 = vadd.xlane.f32.xlu0 %v1257
      %v1259 = vpop.xlane.xlu0 %1258
      %v1260 = vsel %vm895, %v1240, 0.0
      %1261 = vadd.xlane.f32.xlu0 %v1260
      %v1262 = vpop.xlane.xlu0 %1261
      %v1263 = vsel %vm895, %v1242, 0.0
      %1264 = vadd.xlane.f32.xlu0 %v1263
      %v1265 = vpop.xlane.xlu0 %1264
      %v1266 = vsel %vm895, %v1244, 0.0
      %1267 = vadd.xlane.f32.xlu0 %v1266
      %v1268 = vpop.xlane.xlu0 %1267
      %v1269 = vrcp.pop %v1247
      %v1270 = vmul.f32 %v1247, %v1269
      %v1271 = vsub.f32 1.0, %v1270
      %v1272 = vmul.f32 %v1269, %v1271
      %v1273 = vadd.f32 %v1269, %v1272
      %vm1274 = vweird.f32 %v1247
      %vm1275 = vweird.f32 %v1269
      %vm1276 = vmor %vm1274, %vm1275
      %v1277 = vsel %vm1276, %v1269, %v1273
      %v1278 = vand.u32 2147483647, %v1247
      %vm1279 = vcmp.eq.f32.partialorder %v1278, 8.507059e+37
      %v1280 = vand.u32 %v1247, 2147483648
      %v1281 = vor.u32 1.1754944e-38, %v1280
      %v1282 = vsel %vm1279, %v1281, %v1277
      %v1283 = vmul.f32 1.0, %v1282
      %v1284 = vrcp.pop %v1250
      %v1285 = vmul.f32 %v1250, %v1284
      %v1286 = vsub.f32 1.0, %v1285
      %v1287 = vmul.f32 %v1284, %v1286
      %v1288 = vadd.f32 %v1284, %v1287
      %vm1289 = vweird.f32 %v1250
      %vm1290 = vweird.f32 %v1284
      %vm1291 = vmor %vm1289, %vm1290
      %v1292 = vsel %vm1291, %v1284, %v1288
      %v1293 = vand.u32 2147483647, %v1250
      %vm1294 = vcmp.eq.f32.partialorder %v1293, 8.507059e+37
      %v1295 = vand.u32 %v1250, 2147483648
      %v1296 = vor.u32 1.1754944e-38, %v1295
      %v1297 = vsel %vm1294, %v1296, %v1292
      %v1298 = vmul.f32 1.0, %v1297
      %v1299 = vrcp.pop %v1253
      %v1300 = vmul.f32 %v1253, %v1299
      %v1301 = vsub.f32 1.0, %v1300
      %v1302 = vmul.f32 %v1299, %v1301
      %v1303 = vadd.f32 %v1299, %v1302
      %vm1304 = vweird.f32 %v1253
      %vm1305 = vweird.f32 %v1299
      %vm1306 = vmor %vm1304, %vm1305
      %v1307 = vsel %vm1306, %v1299, %v1303
      %v1308 = vand.u32 2147483647, %v1253
      %vm1309 = vcmp.eq.f32.partialorder %v1308, 8.507059e+37
      %v1310 = vand.u32 %v1253, 2147483648
      %v1311 = vor.u32 1.1754944e-38, %v1310
      %v1312 = vsel %vm1309, %v1311, %v1307
      %v1313 = vmul.f32 1.0, %v1312
      %v1314 = vrcp.pop %v1256
      %v1315 = vmul.f32 %v1256, %v1314
      %v1316 = vsub.f32 1.0, %v1315
      %v1317 = vmul.f32 %v1314, %v1316
      %v1318 = vadd.f32 %v1314, %v1317
      %vm1319 = vweird.f32 %v1256
      %vm1320 = vweird.f32 %v1314
      %vm1321 = vmor %vm1319, %vm1320
      %v1322 = vsel %vm1321, %v1314, %v1318
      %v1323 = vand.u32 2147483647, %v1256
      %vm1324 = vcmp.eq.f32.partialorder %v1323, 8.507059e+37
      %v1325 = vand.u32 %v1256, 2147483648
      %v1326 = vor.u32 1.1754944e-38, %v1325
      %v1327 = vsel %vm1324, %v1326, %v1322
      %v1328 = vmul.f32 1.0, %v1327
      %v1329 = vrcp.pop %v1259
      %v1330 = vmul.f32 %v1259, %v1329
      %v1331 = vsub.f32 1.0, %v1330
      %v1332 = vmul.f32 %v1329, %v1331
      %v1333 = vadd.f32 %v1329, %v1332
      %vm1334 = vweird.f32 %v1259
      %vm1335 = vweird.f32 %v1329
      %vm1336 = vmor %vm1334, %vm1335
      %v1337 = vsel %vm1336, %v1329, %v1333
      %v1338 = vand.u32 2147483647, %v1259
      %vm1339 = vcmp.eq.f32.partialorder %v1338, 8.507059e+37
      %v1340 = vand.u32 %v1259, 2147483648
      %v1341 = vor.u32 1.1754944e-38, %v1340
      %v1342 = vsel %vm1339, %v1341, %v1337
      %v1343 = vmul.f32 1.0, %v1342
      %v1344 = vrcp.pop %v1262
      %v1345 = vmul.f32 %v1262, %v1344
      %v1346 = vsub.f32 1.0, %v1345
      %v1347 = vmul.f32 %v1344, %v1346
      %v1348 = vadd.f32 %v1344, %v1347
      %vm1349 = vweird.f32 %v1262
      %vm1350 = vweird.f32 %v1344
      %vm1351 = vmor %vm1349, %vm1350
      %v1352 = vsel %vm1351, %v1344, %v1348
      %v1353 = vand.u32 2147483647, %v1262
      %vm1354 = vcmp.eq.f32.partialorder %v1353, 8.507059e+37
      %v1355 = vand.u32 %v1262, 2147483648
      %v1356 = vor.u32 1.1754944e-38, %v1355
      %v1357 = vsel %vm1354, %v1356, %v1352
      %v1358 = vmul.f32 1.0, %v1357
      %v1359 = vrcp.pop %v1265
      %v1360 = vmul.f32 %v1265, %v1359
      %v1361 = vsub.f32 1.0, %v1360
      %v1362 = vmul.f32 %v1359, %v1361
      %v1363 = vadd.f32 %v1359, %v1362
      %vm1364 = vweird.f32 %v1265
      %vm1365 = vweird.f32 %v1359
      %vm1366 = vmor %vm1364, %vm1365
      %v1367 = vsel %vm1366, %v1359, %v1363
      %v1368 = vand.u32 2147483647, %v1265
      %vm1369 = vcmp.eq.f32.partialorder %v1368, 8.507059e+37
      %v1370 = vand.u32 %v1265, 2147483648
      %v1371 = vor.u32 1.1754944e-38, %v1370
      %v1372 = vsel %vm1369, %v1371, %v1367
      %v1373 = vmul.f32 1.0, %v1372
      %v1374 = vrcp.pop %v1268
      %v1375 = vmul.f32 %v1268, %v1374
      %v1376 = vsub.f32 1.0, %v1375
      %v1377 = vmul.f32 %v1374, %v1376
      %v1378 = vadd.f32 %v1374, %v1377
      %vm1379 = vweird.f32 %v1268
      %vm1380 = vweird.f32 %v1374
      %vm1381 = vmor %vm1379, %vm1380
      %v1382 = vsel %vm1381, %v1374, %v1378
      %v1383 = vand.u32 2147483647, %v1268
      %vm1384 = vcmp.eq.f32.partialorder %v1383, 8.507059e+37
      %v1385 = vand.u32 %v1268, 2147483648
      %v1386 = vor.u32 1.1754944e-38, %v1385
      %v1387 = vsel %vm1384, %v1386, %v1382
      %v1388 = vmul.f32 1.0, %v1387
      %v1389 = vpack.c.bf16 %v1232, %v1230
      %v1390 = vpack.c.bf16 %v1236, %v1234
      %v1391 = vpack.c.bf16 %v1240, %v1238
      %v1392 = vpack.c.bf16 %v1244, %v1242
      %v1393 = vld [vmem:[%s14] sm:$0xff]
      %v1394 = vld [vmem:[%s14 + $0x8] sm:$0xff]
      %v1395 = vld [vmem:[%s14 + $0x10] sm:$0xff]
      %v1396 = vld [vmem:[%s14 + $0x18] sm:$0xff]
      %v1397 = vld [vmem:[%s17] sm:$0x1]
      %v1399 = vperm.slane %v1397, 0
      %1401 = vmatpush.msra.mxu0 0.0
      %1402 = vmatpush.msra.mxu0 0.0
      %1403 = vmatpush.msra.mxu0 0.0
      %1404 = vmatpush.msra.mxu0 0.0
      %1405 = vmatpush.msra.mxu0 0.0
      %1406 = vmatpush.msra.mxu0 0.0
      %1407 = vmatpush.msra.mxu0 0.0
      %1408 = vmatpush.msra.mxu0 0.0
      %1409 = vmatpush.msra.mxu0 0.0
      %1410 = vmatpush.msra.mxu0 0.0
      %1411 = vmatpush.msra.mxu0 0.0
      %1412 = vmatpush.msra.mxu0 0.0
      %1413 = vmatpush.msra.mxu0 %v1396
      %1414 = vmatpush.msra.mxu0 %v1395
      %1415 = vmatpush.msra.mxu0 %v1394
      %1416 = vmatpush.msra.mxu0 %v1393
      %1417 = vmatmul.f32.gmra.mxu0 %v1028
      %v1418 = vpop.f32.mrf.mxu0
      %v1419 = vadd.f32 %v1399, %v1418
      %1420 = vmatmul.f32.gmra.mxu0 %v1031
      %v1421 = vpop.f32.mrf.mxu0
      %v1422 = vadd.f32 %v1399, %v1421
      %1423 = vmatmul.f32.gmra.mxu0 %v1034
      %v1424 = vpop.f32.mrf.mxu0
      %v1425 = vadd.f32 %v1399, %v1424
      %1426 = vmatmul.f32.gmra.mxu0 %v1037
      %v1427 = vpop.f32.mrf.mxu0
      %v1428 = vadd.f32 %v1399, %v1427
      %1429 = vmatmul.f32.gmra.mxu0 %v1040
      %v1430 = vpop.f32.mrf.mxu0
      %v1431 = vadd.f32 %v1399, %v1430
      %1432 = vmatmul.f32.gmra.mxu0 %v1043
      %v1433 = vpop.f32.mrf.mxu0
      %v1434 = vadd.f32 %v1399, %v1433
      %1435 = vmatmul.f32.gmra.mxu0 %v1046
      %v1436 = vpop.f32.mrf.mxu0
      %v1437 = vadd.f32 %v1399, %v1436
      %1438 = vmatmul.f32.gmra.mxu0 %v1049
      %v1439 = vpop.f32.mrf.mxu0
      %v1440 = vadd.f32 %v1399, %v1439
      %1441 = vdwg.mxu0
      %v1442 = vld [vmem:[%s19] sm:$0xff]
      %v1443 = vld [vmem:[%s19 + $0x8] sm:$0xff]
      %v1444 = vld [vmem:[%s19 + $0x10] sm:$0xff]
      %v1445 = vld [vmem:[%s19 + $0x18] sm:$0xff]
      %v1446 = vld [vmem:[%s22] sm:$0x1]
      %v1448 = vperm.slane %v1446, 0
      %1450 = vmatpush.msra.mxu0 0.0
      %1451 = vmatpush.msra.mxu0 0.0
      %1452 = vmatpush.msra.mxu0 0.0
      %1453 = vmatpush.msra.mxu0 0.0
      %1454 = vmatpush.msra.mxu0 0.0
      %1455 = vmatpush.msra.mxu0 0.0
      %1456 = vmatpush.msra.mxu0 0.0
      %1457 = vmatpush.msra.mxu0 0.0
      %1458 = vmatpush.msra.mxu0 0.0
      %1459 = vmatpush.msra.mxu0 0.0
      %1460 = vmatpush.msra.mxu0 0.0
      %1461 = vmatpush.msra.mxu0 0.0
      %1462 = vmatpush.msra.mxu0 %v1445
      %1463 = vmatpush.msra.mxu0 %v1444
      %1464 = vmatpush.msra.mxu0 %v1443
      %1465 = vmatpush.msra.mxu0 %v1442
      %1466 = vmatmul.f32.gmra.mxu0 %v1028
      %v1467 = vpop.f32.mrf.mxu0
      %v1468 = vadd.f32 %v1448, %v1467
      %1469 = vmatmul.f32.gmra.mxu0 %v1031
      %v1470 = vpop.f32.mrf.mxu0
      %v1471 = vadd.f32 %v1448, %v1470
      %1472 = vmatmul.f32.gmra.mxu0 %v1034
      %v1473 = vpop.f32.mrf.mxu0
      %v1474 = vadd.f32 %v1448, %v1473
      %1475 = vmatmul.f32.gmra.mxu0 %v1037
      %v1476 = vpop.f32.mrf.mxu0
      %v1477 = vadd.f32 %v1448, %v1476
      %1478 = vmatmul.f32.gmra.mxu0 %v1040
      %v1479 = vpop.f32.mrf.mxu0
      %v1480 = vadd.f32 %v1448, %v1479
      %1481 = vmatmul.f32.gmra.mxu0 %v1043
      %v1482 = vpop.f32.mrf.mxu0
      %v1483 = vadd.f32 %v1448, %v1482
      %1484 = vmatmul.f32.gmra.mxu0 %v1046
      %v1485 = vpop.f32.mrf.mxu0
      %v1486 = vadd.f32 %v1448, %v1485
      %1487 = vmatmul.f32.gmra.mxu0 %v1049
      %v1488 = vpop.f32.mrf.mxu0
      %v1489 = vadd.f32 %v1448, %v1488
      %1490 = vdwg.mxu0
      %v1491 = vld [vmem:[#allocation2] sm:$0x1]
      %v1492 = vld [vmem:[%s7] sm:$0x3]
      loop: start=0, step=1, limit=12
      $region125: #{gma_forward.5} parent=123 // loop_pre_header
        _
      $region126: #{gma_forward.5} parent=123 // loop_header
        %s1494 = sphi 0, %s1498
        %p1495 = scmp.ge.s32.totalorder %s1494, 12
        %v1499 = vphi %v879, %v2472
        %v1500 = vphi %v880, %v2473
        %v1501 = vphi %v881, %v2474
        %v1502 = vphi %v882, %v2475
        %v1503 = vphi %v883, %v2476
        %v1504 = vphi %v884, %v2477
        %v1505 = vphi %v885, %v2478
        %v1506 = vphi %v886, %v2479
        %v1507 = vphi 0.0, %v2553
        %v1508 = vphi 0.0, %v2554
        %v1509 = vphi 0.0, %v2555
        %v1510 = vphi 0.0, %v2556
        %v1511 = vphi 0.0, %v2557
        %v1512 = vphi 0.0, %v2558
        %v1513 = vphi 0.0, %v2559
        %v1514 = vphi 0.0, %v2560
      $region127: #{gma_forward.5} parent=123 // loop_header_branch
        %1497 = sbr.rel (%p1495) target = $region131
      $region128: #{gma_forward.5} parent=123 // loop_body
        %1516 = vset.pattern.permute.xlu0 0
        %1517 = vperm.xlu0 %1516, %v1507
        %v1518 = vpop.permute.xlu0 %1517
        %1521 = vset.pattern.permute.xlu0 0
        %1522 = vperm.xlu0 %1521, %v1508
        %v1523 = vpop.permute.xlu0 %1522
        %1526 = vset.pattern.permute.xlu0 0
        %1527 = vperm.xlu0 %1526, %v1509
        %v1528 = vpop.permute.xlu0 %1527
        %1531 = vset.pattern.permute.xlu0 0
        %1532 = vperm.xlu0 %1531, %v1510
        %v1533 = vpop.permute.xlu0 %1532
        %1536 = vset.pattern.permute.xlu0 0
        %1537 = vperm.xlu0 %1536, %v1511
        %v1538 = vpop.permute.xlu0 %1537
        %1541 = vset.pattern.permute.xlu0 0
        %1542 = vperm.xlu0 %1541, %v1512
        %v1543 = vpop.permute.xlu0 %1542
        %1546 = vset.pattern.permute.xlu0 0
        %1547 = vperm.xlu0 %1546, %v1513
        %v1548 = vpop.permute.xlu0 %1547
        %1551 = vset.pattern.permute.xlu0 0
        %1552 = vperm.xlu0 %1551, %v1514
        %v1553 = vpop.permute.xlu0 %1552
        %v1555 = vperm.slane %v1492, 0
        %v1556 = vmul.f32 %v1518, %v1555
        %v1557 = vmul.f32 %v1523, %v1555
        %v1558 = vmul.f32 %v1528, %v1555
        %v1559 = vmul.f32 %v1533, %v1555
        %v1560 = vmul.f32 %v1538, %v1555
        %v1561 = vmul.f32 %v1543, %v1555
        %v1562 = vmul.f32 %v1548, %v1555
        %v1563 = vmul.f32 %v1553, %v1555
        %1564 = vset.pattern.permute.xlu0 1
        %1565 = vperm.xlu0 %1564, %v1507
        %v1566 = vpop.permute.xlu0 %1565
        %1568 = vset.pattern.permute.xlu0 1
        %1569 = vperm.xlu0 %1568, %v1508
        %v1570 = vpop.permute.xlu0 %1569
        %1572 = vset.pattern.permute.xlu0 1
        %1573 = vperm.xlu0 %1572, %v1509
        %v1574 = vpop.permute.xlu0 %1573
        %1576 = vset.pattern.permute.xlu0 1
        %1577 = vperm.xlu0 %1576, %v1510
        %v1578 = vpop.permute.xlu0 %1577
        %1580 = vset.pattern.permute.xlu0 1
        %1581 = vperm.xlu0 %1580, %v1511
        %v1582 = vpop.permute.xlu0 %1581
        %1584 = vset.pattern.permute.xlu0 1
        %1585 = vperm.xlu0 %1584, %v1512
        %v1586 = vpop.permute.xlu0 %1585
        %1588 = vset.pattern.permute.xlu0 1
        %1589 = vperm.xlu0 %1588, %v1513
        %v1590 = vpop.permute.xlu0 %1589
        %1592 = vset.pattern.permute.xlu0 1
        %1593 = vperm.xlu0 %1592, %v1514
        %v1594 = vpop.permute.xlu0 %1593
        %v1596 = vperm.slane %v1492, 1
        %v1597 = vmul.f32 %v1566, %v1596
        %v1598 = vmul.f32 %v1570, %v1596
        %v1599 = vmul.f32 %v1574, %v1596
        %v1600 = vmul.f32 %v1578, %v1596
        %v1601 = vmul.f32 %v1582, %v1596
        %v1602 = vmul.f32 %v1586, %v1596
        %v1603 = vmul.f32 %v1590, %v1596
        %v1604 = vmul.f32 %v1594, %v1596
        %v1605 = vadd.f32 %v1556, %v1597
        %v1606 = vadd.f32 %v1557, %v1598
        %v1607 = vadd.f32 %v1558, %v1599
        %v1608 = vadd.f32 %v1559, %v1600
        %v1609 = vadd.f32 %v1560, %v1601
        %v1610 = vadd.f32 %v1561, %v1602
        %v1611 = vadd.f32 %v1562, %v1603
        %v1612 = vadd.f32 %v1563, %v1604
        %v1613 = vadd.f32 %v999, %v1605
        %v1614 = vadd.f32 %v1001, %v1606
        %v1615 = vadd.f32 %v1004, %v1607
        %v1616 = vadd.f32 %v1006, %v1608
        %v1617 = vadd.f32 %v1009, %v1609
        %v1618 = vadd.f32 %v1011, %v1610
        %v1619 = vadd.f32 %v1014, %v1611
        %v1620 = vadd.f32 %v1016, %v1612
        %v1621 = vmax.f32 %v1613, 0.0
        %v1622 = vmax.f32 %v1614, 0.0
        %v1623 = vmax.f32 %v1615, 0.0
        %v1624 = vmax.f32 %v1616, 0.0
        %v1625 = vmax.f32 %v1617, 0.0
        %v1626 = vmax.f32 %v1618, 0.0
        %v1627 = vmax.f32 %v1619, 0.0
        %v1628 = vmax.f32 %v1620, 0.0
        %v1629 = vld [vmem:[%s9] sm:$0xff]
        %v1630 = vld [vmem:[%s9 + $0x8] sm:$0xff]
        %v1631 = vld [vmem:[%s9 + $0x10] sm:$0xff]
        %v1632 = vld [vmem:[%s9 + $0x18] sm:$0xff]
        %v1633 = vld [vmem:[%s10] sm:$0x1]
        %v1635 = vperm.slane %v1633, 0
        %v1638 = vsel %vm1026, %v1621, 0
        %v1641 = vsel %vm1026, %v1622, 0
        %v1644 = vsel %vm1026, %v1623, 0
        %v1647 = vsel %vm1026, %v1624, 0
        %v1650 = vsel %vm1026, %v1625, 0
        %v1653 = vsel %vm1026, %v1626, 0
        %v1656 = vsel %vm1026, %v1627, 0
        %v1659 = vsel %vm1026, %v1628, 0
        %1661 = vmatpush.msra.mxu0 0.0
        %1662 = vmatpush.msra.mxu0 0.0
        %1663 = vmatpush.msra.mxu0 0.0
        %1664 = vmatpush.msra.mxu0 0.0
        %1665 = vmatpush.msra.mxu0 0.0
        %1666 = vmatpush.msra.mxu0 0.0
        %1667 = vmatpush.msra.mxu0 0.0
        %1668 = vmatpush.msra.mxu0 0.0
        %1669 = vmatpush.msra.mxu0 0.0
        %1670 = vmatpush.msra.mxu0 0.0
        %1671 = vmatpush.msra.mxu0 0.0
        %1672 = vmatpush.msra.mxu0 0.0
        %1673 = vmatpush.msra.mxu0 %v1632
        %1674 = vmatpush.msra.mxu0 %v1631
        %1675 = vmatpush.msra.mxu0 %v1630
        %1676 = vmatpush.msra.mxu0 %v1629
        %1677 = vmatmul.f32.gmra.mxu0 %v1638
        %v1678 = vpop.f32.mrf.mxu0
        %v1679 = vadd.f32 %v1635, %v1678
        %1680 = vmatmul.f32.gmra.mxu0 %v1641
        %v1681 = vpop.f32.mrf.mxu0
        %v1682 = vadd.f32 %v1635, %v1681
        %1683 = vmatmul.f32.gmra.mxu0 %v1644
        %v1684 = vpop.f32.mrf.mxu0
        %v1685 = vadd.f32 %v1635, %v1684
        %1686 = vmatmul.f32.gmra.mxu0 %v1647
        %v1687 = vpop.f32.mrf.mxu0
        %v1688 = vadd.f32 %v1635, %v1687
        %1689 = vmatmul.f32.gmra.mxu0 %v1650
        %v1690 = vpop.f32.mrf.mxu0
        %v1691 = vadd.f32 %v1635, %v1690
        %1692 = vmatmul.f32.gmra.mxu0 %v1653
        %v1693 = vpop.f32.mrf.mxu0
        %v1694 = vadd.f32 %v1635, %v1693
        %1695 = vmatmul.f32.gmra.mxu0 %v1656
        %v1696 = vpop.f32.mrf.mxu0
        %v1697 = vadd.f32 %v1635, %v1696
        %1698 = vmatmul.f32.gmra.mxu0 %v1659
        %v1699 = vpop.f32.mrf.mxu0
        %v1700 = vadd.f32 %v1635, %v1699
        %1701 = vdwg.mxu0
        %v1702 = vpack.c.bf16 %v1682, %v1679
        %v1703 = vpack.c.bf16 %v1688, %v1685
        %v1704 = vpack.c.bf16 %v1694, %v1691
        %v1705 = vpack.c.bf16 %v1700, %v1697
        %v1707 = vsel %vm895, %v1389, 0
        %v1710 = vsel %vm895, %v1390, 0
        %v1713 = vsel %vm895, %v1391, 0
        %v1716 = vsel %vm895, %v1392, 0
        %1718 = vmatpush.bf16.msra.mxu0 0
        %1719 = vmatpush.bf16.msra.mxu0 0
        %1720 = vmatpush.bf16.msra.mxu0 0
        %1721 = vmatpush.bf16.msra.mxu0 0
        %1722 = vmatpush.bf16.msra.mxu0 %v1705
        %1723 = vmatpush.bf16.msra.mxu0 %v1704
        %1724 = vmatpush.bf16.msra.mxu0 %v1703
        %1725 = vmatpush.bf16.msra.mxu0 %v1702
        %1726 = vmatmul.bf16.gmra.mxu0 %v1707
        %v1727 = vpop.f32.mrf.mxu0
        %v1728 = vadd.f32 0.0, %v1727
        %v1729 = vpop.f32.mrf.mxu0
        %v1730 = vadd.f32 0.0, %v1729
        %1731 = vmatmul.bf16.gmra.mxu0 %v1710
        %v1732 = vpop.f32.mrf.mxu0
        %v1733 = vadd.f32 0.0, %v1732
        %v1734 = vpop.f32.mrf.mxu0
        %v1735 = vadd.f32 0.0, %v1734
        %1736 = vmatmul.bf16.gmra.mxu0 %v1713
        %v1737 = vpop.f32.mrf.mxu0
        %v1738 = vadd.f32 0.0, %v1737
        %v1739 = vpop.f32.mrf.mxu0
        %v1740 = vadd.f32 0.0, %v1739
        %1741 = vmatmul.bf16.gmra.mxu0 %v1716
        %v1742 = vpop.f32.mrf.mxu0
        %v1743 = vadd.f32 0.0, %v1742
        %v1744 = vpop.f32.mrf.mxu0
        %v1745 = vadd.f32 0.0, %v1744
        %1746 = vdwg.mxu0
        %v1747 = vmul.f32 %v1728, %v1283
        %v1748 = vmul.f32 %v1730, %v1298
        %v1749 = vmul.f32 %v1733, %v1313
        %v1750 = vmul.f32 %v1735, %v1328
        %v1751 = vmul.f32 %v1738, %v1343
        %v1752 = vmul.f32 %v1740, %v1358
        %v1753 = vmul.f32 %v1743, %v1373
        %v1754 = vmul.f32 %v1745, %v1388
        %v1755 = vld [vmem:[%s11] sm:$0xff]
        %v1756 = vld [vmem:[%s11 + $0x8] sm:$0xff]
        %v1757 = vld [vmem:[%s11 + $0x10] sm:$0xff]
        %v1758 = vld [vmem:[%s11 + $0x18] sm:$0xff]
        %v1759 = vld [vmem:[%s12] sm:$0x1]
        %v1761 = vperm.slane %v1759, 0
        %v1764 = vsel %vm1026, %v1747, 0
        %v1767 = vsel %vm1026, %v1748, 0
        %v1770 = vsel %vm1026, %v1749, 0
        %v1773 = vsel %vm1026, %v1750, 0
        %v1776 = vsel %vm1026, %v1751, 0
        %v1779 = vsel %vm1026, %v1752, 0
        %v1782 = vsel %vm1026, %v1753, 0
        %v1785 = vsel %vm1026, %v1754, 0
        %1787 = vmatpush.msra.mxu0 0.0
        %1788 = vmatpush.msra.mxu0 0.0
        %1789 = vmatpush.msra.mxu0 0.0
        %1790 = vmatpush.msra.mxu0 0.0
        %1791 = vmatpush.msra.mxu0 0.0
        %1792 = vmatpush.msra.mxu0 0.0
        %1793 = vmatpush.msra.mxu0 0.0
        %1794 = vmatpush.msra.mxu0 0.0
        %1795 = vmatpush.msra.mxu0 0.0
        %1796 = vmatpush.msra.mxu0 0.0
        %1797 = vmatpush.msra.mxu0 0.0
        %1798 = vmatpush.msra.mxu0 0.0
        %1799 = vmatpush.msra.mxu0 %v1758
        %1800 = vmatpush.msra.mxu0 %v1757
        %1801 = vmatpush.msra.mxu0 %v1756
        %1802 = vmatpush.msra.mxu0 %v1755
        %1803 = vmatmul.f32.gmra.mxu0 %v1764
        %v1804 = vpop.f32.mrf.mxu0
        %v1805 = vadd.f32 %v1761, %v1804
        %1806 = vmatmul.f32.gmra.mxu0 %v1767
        %v1807 = vpop.f32.mrf.mxu0
        %v1808 = vadd.f32 %v1761, %v1807
        %1809 = vmatmul.f32.gmra.mxu0 %v1770
        %v1810 = vpop.f32.mrf.mxu0
        %v1811 = vadd.f32 %v1761, %v1810
        %1812 = vmatmul.f32.gmra.mxu0 %v1773
        %v1813 = vpop.f32.mrf.mxu0
        %v1814 = vadd.f32 %v1761, %v1813
        %1815 = vmatmul.f32.gmra.mxu0 %v1776
        %v1816 = vpop.f32.mrf.mxu0
        %v1817 = vadd.f32 %v1761, %v1816
        %1818 = vmatmul.f32.gmra.mxu0 %v1779
        %v1819 = vpop.f32.mrf.mxu0
        %v1820 = vadd.f32 %v1761, %v1819
        %1821 = vmatmul.f32.gmra.mxu0 %v1782
        %v1822 = vpop.f32.mrf.mxu0
        %v1823 = vadd.f32 %v1761, %v1822
        %1824 = vmatmul.f32.gmra.mxu0 %v1785
        %v1825 = vpop.f32.mrf.mxu0
        %v1826 = vadd.f32 %v1761, %v1825
        %1827 = vdwg.mxu0
        %v1829 = vperm.slane %v1491, 0
        %1830 = vset.pattern.permute.xlu0 0
        %1831 = vperm.xlu0 %1830, %v1829
        %v1832 = vpop.permute.xlu0 %1831
        %v1834 = vmul.f32 %v1832, %v1805
        %v1835 = vmul.f32 %v1832, %v1808
        %v1836 = vmul.f32 %v1832, %v1811
        %v1837 = vmul.f32 %v1832, %v1814
        %v1838 = vmul.f32 %v1832, %v1817
        %v1839 = vmul.f32 %v1832, %v1820
        %v1840 = vmul.f32 %v1832, %v1823
        %v1841 = vmul.f32 %v1832, %v1826
        %v1842 = vadd.f32 %v1621, %v1834
        %v1843 = vadd.f32 %v1622, %v1835
        %v1844 = vadd.f32 %v1623, %v1836
        %v1845 = vadd.f32 %v1624, %v1837
        %v1846 = vadd.f32 %v1625, %v1838
        %v1847 = vadd.f32 %v1626, %v1839
        %v1848 = vadd.f32 %v1627, %v1840
        %v1849 = vadd.f32 %v1628, %v1841
        %v1850 = vld [vmem:[%s13] sm:$0xff]
        %v1851 = vld [vmem:[%s13 + $0x8] sm:$0xff]
        %v1852 = vld [vmem:[%s13 + $0x10] sm:$0xff]
        %v1853 = vld [vmem:[%s13 + $0x18] sm:$0xff]
        %v1855 = vsel %vm1026, %v1499, 0
        %v1858 = vsel %vm1026, %v1500, 0
        %v1861 = vsel %vm1026, %v1501, 0
        %v1864 = vsel %vm1026, %v1502, 0
        %v1867 = vsel %vm1026, %v1503, 0
        %v1870 = vsel %vm1026, %v1504, 0
        %v1873 = vsel %vm1026, %v1505, 0
        %v1876 = vsel %vm1026, %v1506, 0
        %1878 = vmatpush.msra.mxu0 0.0
        %1879 = vmatpush.msra.mxu0 0.0
        %1880 = vmatpush.msra.mxu0 0.0
        %1881 = vmatpush.msra.mxu0 0.0
        %1882 = vmatpush.msra.mxu0 0.0
        %1883 = vmatpush.msra.mxu0 0.0
        %1884 = vmatpush.msra.mxu0 0.0
        %1885 = vmatpush.msra.mxu0 0.0
        %1886 = vmatpush.msra.mxu0 0.0
        %1887 = vmatpush.msra.mxu0 0.0
        %1888 = vmatpush.msra.mxu0 0.0
        %1889 = vmatpush.msra.mxu0 0.0
        %1890 = vmatpush.msra.mxu0 %v1853
        %1891 = vmatpush.msra.mxu0 %v1852
        %1892 = vmatpush.msra.mxu0 %v1851
        %1893 = vmatpush.msra.mxu0 %v1850
        %1894 = vmatmul.f32.gmra.mxu0 %v1855
        %v1895 = vpop.f32.mrf.mxu0
        %v1896 = vadd.f32 0.0, %v1895
        %1897 = vmatmul.f32.gmra.mxu0 %v1858
        %v1898 = vpop.f32.mrf.mxu0
        %v1899 = vadd.f32 0.0, %v1898
        %1900 = vmatmul.f32.gmra.mxu0 %v1861
        %v1901 = vpop.f32.mrf.mxu0
        %v1902 = vadd.f32 0.0, %v1901
        %1903 = vmatmul.f32.gmra.mxu0 %v1864
        %v1904 = vpop.f32.mrf.mxu0
        %v1905 = vadd.f32 0.0, %v1904
        %1906 = vmatmul.f32.gmra.mxu0 %v1867
        %v1907 = vpop.f32.mrf.mxu0
        %v1908 = vadd.f32 0.0, %v1907
        %1909 = vmatmul.f32.gmra.mxu0 %v1870
        %v1910 = vpop.f32.mrf.mxu0
        %v1911 = vadd.f32 0.0, %v1910
        %1912 = vmatmul.f32.gmra.mxu0 %v1873
        %v1913 = vpop.f32.mrf.mxu0
        %v1914 = vadd.f32 0.0, %v1913
        %1915 = vmatmul.f32.gmra.mxu0 %v1876
        %v1916 = vpop.f32.mrf.mxu0
        %v1917 = vadd.f32 0.0, %v1916
        %1918 = vdwg.mxu0
        %v1919 = vadd.f32 %v1419, %v1896
        %v1920 = vadd.f32 %v1422, %v1899
        %v1921 = vadd.f32 %v1425, %v1902
        %v1922 = vadd.f32 %v1428, %v1905
        %v1923 = vadd.f32 %v1431, %v1908
        %v1924 = vadd.f32 %v1434, %v1911
        %v1925 = vadd.f32 %v1437, %v1914
        %v1926 = vadd.f32 %v1440, %v1917
        %v1927 = vld [vmem:[%s15] sm:$0xff]
        %v1928 = vld [vmem:[%s15 + $0x8] sm:$0xff]
        %v1929 = vld [vmem:[%s15 + $0x10] sm:$0xff]
        %v1930 = vld [vmem:[%s15 + $0x18] sm:$0xff]
        %1931 = vmatpush.msra.mxu0 0.0
        %1932 = vmatpush.msra.mxu0 0.0
        %1933 = vmatpush.msra.mxu0 0.0
        %1934 = vmatpush.msra.mxu0 0.0
        %1935 = vmatpush.msra.mxu0 0.0
        %1936 = vmatpush.msra.mxu0 0.0
        %1937 = vmatpush.msra.mxu0 0.0
        %1938 = vmatpush.msra.mxu0 0.0
        %1939 = vmatpush.msra.mxu0 0.0
        %1940 = vmatpush.msra.mxu0 0.0
        %1941 = vmatpush.msra.mxu0 0.0
        %1942 = vmatpush.msra.mxu0 0.0
        %1943 = vmatpush.msra.mxu0 %v1930
        %1944 = vmatpush.msra.mxu0 %v1929
        %1945 = vmatpush.msra.mxu0 %v1928
        %1946 = vmatpush.msra.mxu0 %v1927
        %1947 = vmatmul.f32.gmra.mxu0 %v1638
        %v1948 = vpop.f32.mrf.mxu0
        %v1949 = vadd.f32 0.0, %v1948
        %1950 = vmatmul.f32.gmra.mxu0 %v1641
        %v1951 = vpop.f32.mrf.mxu0
        %v1952 = vadd.f32 0.0, %v1951
        %1953 = vmatmul.f32.gmra.mxu0 %v1644
        %v1954 = vpop.f32.mrf.mxu0
        %v1955 = vadd.f32 0.0, %v1954
        %1956 = vmatmul.f32.gmra.mxu0 %v1647
        %v1957 = vpop.f32.mrf.mxu0
        %v1958 = vadd.f32 0.0, %v1957
        %1959 = vmatmul.f32.gmra.mxu0 %v1650
        %v1960 = vpop.f32.mrf.mxu0
        %v1961 = vadd.f32 0.0, %v1960
        %1962 = vmatmul.f32.gmra.mxu0 %v1653
        %v1963 = vpop.f32.mrf.mxu0
        %v1964 = vadd.f32 0.0, %v1963
        %1965 = vmatmul.f32.gmra.mxu0 %v1656
        %v1966 = vpop.f32.mrf.mxu0
        %v1967 = vadd.f32 0.0, %v1966
        %1968 = vmatmul.f32.gmra.mxu0 %v1659
        %v1969 = vpop.f32.mrf.mxu0
        %v1970 = vadd.f32 0.0, %v1969
        %1971 = vdwg.mxu0
        %v1972 = vadd.f32 %v1919, %v1949
        %v1973 = vadd.f32 %v1920, %v1952
        %v1974 = vadd.f32 %v1921, %v1955
        %v1975 = vadd.f32 %v1922, %v1958
        %v1976 = vadd.f32 %v1923, %v1961
        %v1977 = vadd.f32 %v1924, %v1964
        %v1978 = vadd.f32 %v1925, %v1967
        %v1979 = vadd.f32 %v1926, %v1970
        %v1980 = vld [vmem:[%s16] sm:$0xff]
        %v1981 = vld [vmem:[%s16 + $0x8] sm:$0xff]
        %v1982 = vld [vmem:[%s16 + $0x10] sm:$0xff]
        %v1983 = vld [vmem:[%s16 + $0x18] sm:$0xff]
        %v1985 = vsel %vm1026, %v1842, 0
        %v1988 = vsel %vm1026, %v1843, 0
        %v1991 = vsel %vm1026, %v1844, 0
        %v1994 = vsel %vm1026, %v1845, 0
        %v1997 = vsel %vm1026, %v1846, 0
        %v2000 = vsel %vm1026, %v1847, 0
        %v2003 = vsel %vm1026, %v1848, 0
        %v2006 = vsel %vm1026, %v1849, 0
        %2008 = vmatpush.msra.mxu0 0.0
        %2009 = vmatpush.msra.mxu0 0.0
        %2010 = vmatpush.msra.mxu0 0.0
        %2011 = vmatpush.msra.mxu0 0.0
        %2012 = vmatpush.msra.mxu0 0.0
        %2013 = vmatpush.msra.mxu0 0.0
        %2014 = vmatpush.msra.mxu0 0.0
        %2015 = vmatpush.msra.mxu0 0.0
        %2016 = vmatpush.msra.mxu0 0.0
        %2017 = vmatpush.msra.mxu0 0.0
        %2018 = vmatpush.msra.mxu0 0.0
        %2019 = vmatpush.msra.mxu0 0.0
        %2020 = vmatpush.msra.mxu0 %v1983
        %2021 = vmatpush.msra.mxu0 %v1982
        %2022 = vmatpush.msra.mxu0 %v1981
        %2023 = vmatpush.msra.mxu0 %v1980
        %2024 = vmatmul.f32.gmra.mxu0 %v1985
        %v2025 = vpop.f32.mrf.mxu0
        %v2026 = vadd.f32 0.0, %v2025
        %2027 = vmatmul.f32.gmra.mxu0 %v1988
        %v2028 = vpop.f32.mrf.mxu0
        %v2029 = vadd.f32 0.0, %v2028
        %2030 = vmatmul.f32.gmra.mxu0 %v1991
        %v2031 = vpop.f32.mrf.mxu0
        %v2032 = vadd.f32 0.0, %v2031
        %2033 = vmatmul.f32.gmra.mxu0 %v1994
        %v2034 = vpop.f32.mrf.mxu0
        %v2035 = vadd.f32 0.0, %v2034
        %2036 = vmatmul.f32.gmra.mxu0 %v1997
        %v2037 = vpop.f32.mrf.mxu0
        %v2038 = vadd.f32 0.0, %v2037
        %2039 = vmatmul.f32.gmra.mxu0 %v2000
        %v2040 = vpop.f32.mrf.mxu0
        %v2041 = vadd.f32 0.0, %v2040
        %2042 = vmatmul.f32.gmra.mxu0 %v2003
        %v2043 = vpop.f32.mrf.mxu0
        %v2044 = vadd.f32 0.0, %v2043
        %2045 = vmatmul.f32.gmra.mxu0 %v2006
        %v2046 = vpop.f32.mrf.mxu0
        %v2047 = vadd.f32 0.0, %v2046
        %2048 = vdwg.mxu0
        %v2049 = vadd.f32 %v1972, %v2026
        %v2050 = vadd.f32 %v1973, %v2029
        %v2051 = vadd.f32 %v1974, %v2032
        %v2052 = vadd.f32 %v1975, %v2035
        %v2053 = vadd.f32 %v1976, %v2038
        %v2054 = vadd.f32 %v1977, %v2041
        %v2055 = vadd.f32 %v1978, %v2044
        %v2056 = vadd.f32 %v1979, %v2047
        %v2057 = vxor.u32 %v2049, 2147483648
        %v2058 = vxor.u32 %v2050, 2147483648
        %v2059 = vxor.u32 %v2051, 2147483648
        %v2060 = vxor.u32 %v2052, 2147483648
        %v2061 = vxor.u32 %v2053, 2147483648
        %v2062 = vxor.u32 %v2054, 2147483648
        %v2063 = vxor.u32 %v2055, 2147483648
        %v2064 = vxor.u32 %v2056, 2147483648
        %v2065 = vmul.f32 %v2057, 1.442695
        %v2066 = vpow.pop %v2065
        %v2067 = vmul.f32 %v2058, 1.442695
        %v2068 = vpow.pop %v2067
        %v2069 = vmul.f32 %v2059, 1.442695
        %v2070 = vpow.pop %v2069
        %v2071 = vmul.f32 %v2060, 1.442695
        %v2072 = vpow.pop %v2071
        %v2073 = vmul.f32 %v2061, 1.442695
        %v2074 = vpow.pop %v2073
        %v2075 = vmul.f32 %v2062, 1.442695
        %v2076 = vpow.pop %v2075
        %v2077 = vmul.f32 %v2063, 1.442695
        %v2078 = vpow.pop %v2077
        %v2079 = vmul.f32 %v2064, 1.442695
        %v2080 = vpow.pop %v2079
        %v2081 = vadd.f32 %v2066, 1.0
        %v2082 = vadd.f32 %v2068, 1.0
        %v2083 = vadd.f32 %v2070, 1.0
        %v2084 = vadd.f32 %v2072, 1.0
        %v2085 = vadd.f32 %v2074, 1.0
        %v2086 = vadd.f32 %v2076, 1.0
        %v2087 = vadd.f32 %v2078, 1.0
        %v2088 = vadd.f32 %v2080, 1.0
        %v2089 = vrcp.pop %v2081
        %v2090 = vmul.f32 %v2081, %v2089
        %v2091 = vsub.f32 1.0, %v2090
        %v2092 = vmul.f32 %v2089, %v2091
        %v2093 = vadd.f32 %v2089, %v2092
        %vm2094 = vweird.f32 %v2081
        %vm2095 = vweird.f32 %v2089
        %vm2096 = vmor %vm2094, %vm2095
        %v2097 = vsel %vm2096, %v2089, %v2093
        %v2098 = vand.u32 2147483647, %v2081
        %vm2099 = vcmp.eq.f32.partialorder %v2098, 8.507059e+37
        %v2100 = vand.u32 %v2081, 2147483648
        %v2101 = vor.u32 1.1754944e-38, %v2100
        %v2102 = vsel %vm2099, %v2101, %v2097
        %v2103 = vmul.f32 1.0, %v2102
        %v2104 = vrcp.pop %v2082
        %v2105 = vmul.f32 %v2082, %v2104
        %v2106 = vsub.f32 1.0, %v2105
        %v2107 = vmul.f32 %v2104, %v2106
        %v2108 = vadd.f32 %v2104, %v2107
        %vm2109 = vweird.f32 %v2082
        %vm2110 = vweird.f32 %v2104
        %vm2111 = vmor %vm2109, %vm2110
        %v2112 = vsel %vm2111, %v2104, %v2108
        %v2113 = vand.u32 2147483647, %v2082
        %vm2114 = vcmp.eq.f32.partialorder %v2113, 8.507059e+37
        %v2115 = vand.u32 %v2082, 2147483648
        %v2116 = vor.u32 1.1754944e-38, %v2115
        %v2117 = vsel %vm2114, %v2116, %v2112
        %v2118 = vmul.f32 1.0, %v2117
        %v2119 = vrcp.pop %v2083
        %v2120 = vmul.f32 %v2083, %v2119
        %v2121 = vsub.f32 1.0, %v2120
        %v2122 = vmul.f32 %v2119, %v2121
        %v2123 = vadd.f32 %v2119, %v2122
        %vm2124 = vweird.f32 %v2083
        %vm2125 = vweird.f32 %v2119
        %vm2126 = vmor %vm2124, %vm2125
        %v2127 = vsel %vm2126, %v2119, %v2123
        %v2128 = vand.u32 2147483647, %v2083
        %vm2129 = vcmp.eq.f32.partialorder %v2128, 8.507059e+37
        %v2130 = vand.u32 %v2083, 2147483648
        %v2131 = vor.u32 1.1754944e-38, %v2130
        %v2132 = vsel %vm2129, %v2131, %v2127
        %v2133 = vmul.f32 1.0, %v2132
        %v2134 = vrcp.pop %v2084
        %v2135 = vmul.f32 %v2084, %v2134
        %v2136 = vsub.f32 1.0, %v2135
        %v2137 = vmul.f32 %v2134, %v2136
        %v2138 = vadd.f32 %v2134, %v2137
        %vm2139 = vweird.f32 %v2084
        %vm2140 = vweird.f32 %v2134
        %vm2141 = vmor %vm2139, %vm2140
        %v2142 = vsel %vm2141, %v2134, %v2138
        %v2143 = vand.u32 2147483647, %v2084
        %vm2144 = vcmp.eq.f32.partialorder %v2143, 8.507059e+37
        %v2145 = vand.u32 %v2084, 2147483648
        %v2146 = vor.u32 1.1754944e-38, %v2145
        %v2147 = vsel %vm2144, %v2146, %v2142
        %v2148 = vmul.f32 1.0, %v2147
        %v2149 = vrcp.pop %v2085
        %v2150 = vmul.f32 %v2085, %v2149
        %v2151 = vsub.f32 1.0, %v2150
        %v2152 = vmul.f32 %v2149, %v2151
        %v2153 = vadd.f32 %v2149, %v2152
        %vm2154 = vweird.f32 %v2085
        %vm2155 = vweird.f32 %v2149
        %vm2156 = vmor %vm2154, %vm2155
        %v2157 = vsel %vm2156, %v2149, %v2153
        %v2158 = vand.u32 2147483647, %v2085
        %vm2159 = vcmp.eq.f32.partialorder %v2158, 8.507059e+37
        %v2160 = vand.u32 %v2085, 2147483648
        %v2161 = vor.u32 1.1754944e-38, %v2160
        %v2162 = vsel %vm2159, %v2161, %v2157
        %v2163 = vmul.f32 1.0, %v2162
        %v2164 = vrcp.pop %v2086
        %v2165 = vmul.f32 %v2086, %v2164
        %v2166 = vsub.f32 1.0, %v2165
        %v2167 = vmul.f32 %v2164, %v2166
        %v2168 = vadd.f32 %v2164, %v2167
        %vm2169 = vweird.f32 %v2086
        %vm2170 = vweird.f32 %v2164
        %vm2171 = vmor %vm2169, %vm2170
        %v2172 = vsel %vm2171, %v2164, %v2168
        %v2173 = vand.u32 2147483647, %v2086
        %vm2174 = vcmp.eq.f32.partialorder %v2173, 8.507059e+37
        %v2175 = vand.u32 %v2086, 2147483648
        %v2176 = vor.u32 1.1754944e-38, %v2175
        %v2177 = vsel %vm2174, %v2176, %v2172
        %v2178 = vmul.f32 1.0, %v2177
        %v2179 = vrcp.pop %v2087
        %v2180 = vmul.f32 %v2087, %v2179
        %v2181 = vsub.f32 1.0, %v2180
        %v2182 = vmul.f32 %v2179, %v2181
        %v2183 = vadd.f32 %v2179, %v2182
        %vm2184 = vweird.f32 %v2087
        %vm2185 = vweird.f32 %v2179
        %vm2186 = vmor %vm2184, %vm2185
        %v2187 = vsel %vm2186, %v2179, %v2183
        %v2188 = vand.u32 2147483647, %v2087
        %vm2189 = vcmp.eq.f32.partialorder %v2188, 8.507059e+37
        %v2190 = vand.u32 %v2087, 2147483648
        %v2191 = vor.u32 1.1754944e-38, %v2190
        %v2192 = vsel %vm2189, %v2191, %v2187
        %v2193 = vmul.f32 1.0, %v2192
        %v2194 = vrcp.pop %v2088
        %v2195 = vmul.f32 %v2088, %v2194
        %v2196 = vsub.f32 1.0, %v2195
        %v2197 = vmul.f32 %v2194, %v2196
        %v2198 = vadd.f32 %v2194, %v2197
        %vm2199 = vweird.f32 %v2088
        %vm2200 = vweird.f32 %v2194
        %vm2201 = vmor %vm2199, %vm2200
        %v2202 = vsel %vm2201, %v2194, %v2198
        %v2203 = vand.u32 2147483647, %v2088
        %vm2204 = vcmp.eq.f32.partialorder %v2203, 8.507059e+37
        %v2205 = vand.u32 %v2088, 2147483648
        %v2206 = vor.u32 1.1754944e-38, %v2205
        %v2207 = vsel %vm2204, %v2206, %v2202
        %v2208 = vmul.f32 1.0, %v2207
        %2209 = vrot.lane.b32.xlu0 %v1499, 32
        %v2210 = vpop.permute.xlu0 %2209
        %2211 = vrot.lane.b32.xlu0 %v1500, 32
        %v2212 = vpop.permute.xlu0 %2211
        %2213 = vrot.lane.b32.xlu0 %v1501, 32
        %v2214 = vpop.permute.xlu0 %2213
        %2215 = vrot.lane.b32.xlu0 %v1502, 32
        %v2216 = vpop.permute.xlu0 %2215
        %2217 = vrot.lane.b32.xlu0 %v1503, 32
        %v2218 = vpop.permute.xlu0 %2217
        %2219 = vrot.lane.b32.xlu0 %v1504, 32
        %v2220 = vpop.permute.xlu0 %2219
        %2221 = vrot.lane.b32.xlu0 %v1505, 32
        %v2222 = vpop.permute.xlu0 %2221
        %2223 = vrot.lane.b32.xlu0 %v1506, 32
        %v2224 = vpop.permute.xlu0 %2223
        %v2233 = vmul.f32 %v2103, %v2210
        %v2234 = vmul.f32 %v2118, %v2212
        %v2235 = vmul.f32 %v2133, %v2214
        %v2236 = vmul.f32 %v2148, %v2216
        %v2237 = vmul.f32 %v2163, %v2218
        %v2238 = vmul.f32 %v2178, %v2220
        %v2239 = vmul.f32 %v2193, %v2222
        %v2240 = vmul.f32 %v2208, %v2224
        %v2241 = vld [vmem:[%s18] sm:$0xff]
        %v2242 = vld [vmem:[%s18 + $0x8] sm:$0xff]
        %v2243 = vld [vmem:[%s18 + $0x10] sm:$0xff]
        %v2244 = vld [vmem:[%s18 + $0x18] sm:$0xff]
        %2253 = vrot.lane.b32.xlu0 %v2233, 96
        %v2254 = vpop.permute.xlu0 %2253
        %2255 = vrot.lane.b32.xlu0 %v2234, 96
        %v2256 = vpop.permute.xlu0 %2255
        %2257 = vrot.lane.b32.xlu0 %v2235, 96
        %v2258 = vpop.permute.xlu0 %2257
        %2259 = vrot.lane.b32.xlu0 %v2236, 96
        %v2260 = vpop.permute.xlu0 %2259
        %2261 = vrot.lane.b32.xlu0 %v2237, 96
        %v2262 = vpop.permute.xlu0 %2261
        %2263 = vrot.lane.b32.xlu0 %v2238, 96
        %v2264 = vpop.permute.xlu0 %2263
        %2265 = vrot.lane.b32.xlu0 %v2239, 96
        %v2266 = vpop.permute.xlu0 %2265
        %2267 = vrot.lane.b32.xlu0 %v2240, 96
        %v2268 = vpop.permute.xlu0 %2267
        %v2269 = vsel %vm1026, %v2254, 0
        %v2271 = vsel %vm1026, %v2256, 0
        %v2273 = vsel %vm1026, %v2258, 0
        %v2275 = vsel %vm1026, %v2260, 0
        %v2277 = vsel %vm1026, %v2262, 0
        %v2279 = vsel %vm1026, %v2264, 0
        %v2281 = vsel %vm1026, %v2266, 0
        %v2283 = vsel %vm1026, %v2268, 0
        %2285 = vmatpush.msra.mxu0 0.0
        %2286 = vmatpush.msra.mxu0 0.0
        %2287 = vmatpush.msra.mxu0 0.0
        %2288 = vmatpush.msra.mxu0 0.0
        %2289 = vmatpush.msra.mxu0 0.0
        %2290 = vmatpush.msra.mxu0 0.0
        %2291 = vmatpush.msra.mxu0 0.0
        %2292 = vmatpush.msra.mxu0 0.0
        %2293 = vmatpush.msra.mxu0 0.0
        %2294 = vmatpush.msra.mxu0 0.0
        %2295 = vmatpush.msra.mxu0 0.0
        %2296 = vmatpush.msra.mxu0 0.0
        %2297 = vmatpush.msra.mxu0 %v2244
        %2298 = vmatpush.msra.mxu0 %v2243
        %2299 = vmatpush.msra.mxu0 %v2242
        %2300 = vmatpush.msra.mxu0 %v2241
        %2301 = vmatmul.f32.gmra.mxu0 %v2269
        %v2302 = vpop.f32.mrf.mxu0
        %v2303 = vadd.f32 0.0, %v2302
        %2304 = vmatmul.f32.gmra.mxu0 %v2271
        %v2305 = vpop.f32.mrf.mxu0
        %v2306 = vadd.f32 0.0, %v2305
        %2307 = vmatmul.f32.gmra.mxu0 %v2273
        %v2308 = vpop.f32.mrf.mxu0
        %v2309 = vadd.f32 0.0, %v2308
        %2310 = vmatmul.f32.gmra.mxu0 %v2275
        %v2311 = vpop.f32.mrf.mxu0
        %v2312 = vadd.f32 0.0, %v2311
        %2313 = vmatmul.f32.gmra.mxu0 %v2277
        %v2314 = vpop.f32.mrf.mxu0
        %v2315 = vadd.f32 0.0, %v2314
        %2316 = vmatmul.f32.gmra.mxu0 %v2279
        %v2317 = vpop.f32.mrf.mxu0
        %v2318 = vadd.f32 0.0, %v2317
        %2319 = vmatmul.f32.gmra.mxu0 %v2281
        %v2320 = vpop.f32.mrf.mxu0
        %v2321 = vadd.f32 0.0, %v2320
        %2322 = vmatmul.f32.gmra.mxu0 %v2283
        %v2323 = vpop.f32.mrf.mxu0
        %v2324 = vadd.f32 0.0, %v2323
        %2325 = vdwg.mxu0
        %v2326 = vadd.f32 %v1468, %v2303
        %v2327 = vadd.f32 %v1471, %v2306
        %v2328 = vadd.f32 %v1474, %v2309
        %v2329 = vadd.f32 %v1477, %v2312
        %v2330 = vadd.f32 %v1480, %v2315
        %v2331 = vadd.f32 %v1483, %v2318
        %v2332 = vadd.f32 %v1486, %v2321
        %v2333 = vadd.f32 %v1489, %v2324
        %v2334 = vld [vmem:[%s20] sm:$0xff]
        %v2335 = vld [vmem:[%s20 + $0x8] sm:$0xff]
        %v2336 = vld [vmem:[%s20 + $0x10] sm:$0xff]
        %v2337 = vld [vmem:[%s20 + $0x18] sm:$0xff]
        %2338 = vmatpush.msra.mxu0 0.0
        %2339 = vmatpush.msra.mxu0 0.0
        %2340 = vmatpush.msra.mxu0 0.0
        %2341 = vmatpush.msra.mxu0 0.0
        %2342 = vmatpush.msra.mxu0 0.0
        %2343 = vmatpush.msra.mxu0 0.0
        %2344 = vmatpush.msra.mxu0 0.0
        %2345 = vmatpush.msra.mxu0 0.0
        %2346 = vmatpush.msra.mxu0 0.0
        %2347 = vmatpush.msra.mxu0 0.0
        %2348 = vmatpush.msra.mxu0 0.0
        %2349 = vmatpush.msra.mxu0 0.0
        %2350 = vmatpush.msra.mxu0 %v2337
        %2351 = vmatpush.msra.mxu0 %v2336
        %2352 = vmatpush.msra.mxu0 %v2335
        %2353 = vmatpush.msra.mxu0 %v2334
        %2354 = vmatmul.f32.gmra.mxu0 %v1638
        %v2355 = vpop.f32.mrf.mxu0
        %v2356 = vadd.f32 0.0, %v2355
        %2357 = vmatmul.f32.gmra.mxu0 %v1641
        %v2358 = vpop.f32.mrf.mxu0
        %v2359 = vadd.f32 0.0, %v2358
        %2360 = vmatmul.f32.gmra.mxu0 %v1644
        %v2361 = vpop.f32.mrf.mxu0
        %v2362 = vadd.f32 0.0, %v2361
        %2363 = vmatmul.f32.gmra.mxu0 %v1647
        %v2364 = vpop.f32.mrf.mxu0
        %v2365 = vadd.f32 0.0, %v2364
        %2366 = vmatmul.f32.gmra.mxu0 %v1650
        %v2367 = vpop.f32.mrf.mxu0
        %v2368 = vadd.f32 0.0, %v2367
        %2369 = vmatmul.f32.gmra.mxu0 %v1653
        %v2370 = vpop.f32.mrf.mxu0
        %v2371 = vadd.f32 0.0, %v2370
        %2372 = vmatmul.f32.gmra.mxu0 %v1656
        %v2373 = vpop.f32.mrf.mxu0
        %v2374 = vadd.f32 0.0, %v2373
        %2375 = vmatmul.f32.gmra.mxu0 %v1659
        %v2376 = vpop.f32.mrf.mxu0
        %v2377 = vadd.f32 0.0, %v2376
        %2378 = vdwg.mxu0
        %v2379 = vadd.f32 %v2326, %v2356
        %v2380 = vadd.f32 %v2327, %v2359
        %v2381 = vadd.f32 %v2328, %v2362
        %v2382 = vadd.f32 %v2329, %v2365
        %v2383 = vadd.f32 %v2330, %v2368
        %v2384 = vadd.f32 %v2331, %v2371
        %v2385 = vadd.f32 %v2332, %v2374
        %v2386 = vadd.f32 %v2333, %v2377
        %v2387 = vld [vmem:[%s21] sm:$0xff]
        %v2388 = vld [vmem:[%s21 + $0x8] sm:$0xff]
        %v2389 = vld [vmem:[%s21 + $0x10] sm:$0xff]
        %v2390 = vld [vmem:[%s21 + $0x18] sm:$0xff]
        %2391 = vmatpush.msra.mxu0 0.0
        %2392 = vmatpush.msra.mxu0 0.0
        %2393 = vmatpush.msra.mxu0 0.0
        %2394 = vmatpush.msra.mxu0 0.0
        %2395 = vmatpush.msra.mxu0 0.0
        %2396 = vmatpush.msra.mxu0 0.0
        %2397 = vmatpush.msra.mxu0 0.0
        %2398 = vmatpush.msra.mxu0 0.0
        %2399 = vmatpush.msra.mxu0 0.0
        %2400 = vmatpush.msra.mxu0 0.0
        %2401 = vmatpush.msra.mxu0 0.0
        %2402 = vmatpush.msra.mxu0 0.0
        %2403 = vmatpush.msra.mxu0 %v2390
        %2404 = vmatpush.msra.mxu0 %v2389
        %2405 = vmatpush.msra.mxu0 %v2388
        %2406 = vmatpush.msra.mxu0 %v2387
        %2407 = vmatmul.f32.gmra.mxu0 %v1985
        %v2408 = vpop.f32.mrf.mxu0
        %v2409 = vadd.f32 0.0, %v2408
        %2410 = vmatmul.f32.gmra.mxu0 %v1988
        %v2411 = vpop.f32.mrf.mxu0
        %v2412 = vadd.f32 0.0, %v2411
        %2413 = vmatmul.f32.gmra.mxu0 %v1991
        %v2414 = vpop.f32.mrf.mxu0
        %v2415 = vadd.f32 0.0, %v2414
        %2416 = vmatmul.f32.gmra.mxu0 %v1994
        %v2417 = vpop.f32.mrf.mxu0
        %v2418 = vadd.f32 0.0, %v2417
        %2419 = vmatmul.f32.gmra.mxu0 %v1997
        %v2420 = vpop.f32.mrf.mxu0
        %v2421 = vadd.f32 0.0, %v2420
        %2422 = vmatmul.f32.gmra.mxu0 %v2000
        %v2423 = vpop.f32.mrf.mxu0
        %v2424 = vadd.f32 0.0, %v2423
        %2425 = vmatmul.f32.gmra.mxu0 %v2003
        %v2426 = vpop.f32.mrf.mxu0
        %v2427 = vadd.f32 0.0, %v2426
        %2428 = vmatmul.f32.gmra.mxu0 %v2006
        %v2429 = vpop.f32.mrf.mxu0
        %v2430 = vadd.f32 0.0, %v2429
        %2431 = vdwg.mxu0
        %v2432 = vadd.f32 %v2379, %v2409
        %v2433 = vadd.f32 %v2380, %v2412
        %v2434 = vadd.f32 %v2381, %v2415
        %v2435 = vadd.f32 %v2382, %v2418
        %v2436 = vadd.f32 %v2383, %v2421
        %v2437 = vadd.f32 %v2384, %v2424
        %v2438 = vadd.f32 %v2385, %v2427
        %v2439 = vadd.f32 %v2386, %v2430
        %v2440 = vtanh.pop %v2432
        %v2441 = vtanh.pop %v2433
        %v2442 = vtanh.pop %v2434
        %v2443 = vtanh.pop %v2435
        %v2444 = vtanh.pop %v2436
        %v2445 = vtanh.pop %v2437
        %v2446 = vtanh.pop %v2438
        %v2447 = vtanh.pop %v2439
        %v2448 = vsub.f32 1.0, %v2103
        %v2449 = vsub.f32 1.0, %v2118
        %v2450 = vsub.f32 1.0, %v2133
        %v2451 = vsub.f32 1.0, %v2148
        %v2452 = vsub.f32 1.0, %v2163
        %v2453 = vsub.f32 1.0, %v2178
        %v2454 = vsub.f32 1.0, %v2193
        %v2455 = vsub.f32 1.0, %v2208
        %v2456 = vmul.f32 %v2448, %v1499
        %v2457 = vmul.f32 %v2449, %v1500
        %v2458 = vmul.f32 %v2450, %v1501
        %v2459 = vmul.f32 %v2451, %v1502
        %v2460 = vmul.f32 %v2452, %v1503
        %v2461 = vmul.f32 %v2453, %v1504
        %v2462 = vmul.f32 %v2454, %v1505
        %v2463 = vmul.f32 %v2455, %v1506
        %v2464 = vmul.f32 %v2103, %v2440
        %v2465 = vmul.f32 %v2118, %v2441
        %v2466 = vmul.f32 %v2133, %v2442
        %v2467 = vmul.f32 %v2148, %v2443
        %v2468 = vmul.f32 %v2163, %v2444
        %v2469 = vmul.f32 %v2178, %v2445
        %v2470 = vmul.f32 %v2193, %v2446
        %v2471 = vmul.f32 %v2208, %v2447
        %v2472 = vadd.f32 %v2456, %v2464
        %v2473 = vadd.f32 %v2457, %v2465
        %v2474 = vadd.f32 %v2458, %v2466
        %v2475 = vadd.f32 %v2459, %v2467
        %v2476 = vadd.f32 %v2460, %v2468
        %v2477 = vadd.f32 %v2461, %v2469
        %v2478 = vadd.f32 %v2462, %v2470
        %v2479 = vadd.f32 %v2463, %v2471
        %v2480 = vld [vmem:[%s23] sm:$0xff]
        %v2481 = vld [vmem:[%s23 + $0x8] sm:$0xff]
        %v2482 = vld [vmem:[%s23 + $0x10] sm:$0xff]
        %v2483 = vld [vmem:[%s23 + $0x18] sm:$0xff]
        %v2484 = vld [vmem:[%s24] sm:$0x1]
        %v2486 = vperm.slane %v2484, 0
        %v2489 = vsel %vm1026, %v2472, 0
        %v2492 = vsel %vm1026, %v2473, 0
        %v2495 = vsel %vm1026, %v2474, 0
        %v2498 = vsel %vm1026, %v2475, 0
        %v2501 = vsel %vm1026, %v2476, 0
        %v2504 = vsel %vm1026, %v2477, 0
        %v2507 = vsel %vm1026, %v2478, 0
        %v2510 = vsel %vm1026, %v2479, 0
        %2512 = vmatpush.msra.mxu0 0.0
        %2513 = vmatpush.msra.mxu0 0.0
        %2514 = vmatpush.msra.mxu0 0.0
        %2515 = vmatpush.msra.mxu0 0.0
        %2516 = vmatpush.msra.mxu0 0.0
        %2517 = vmatpush.msra.mxu0 0.0
        %2518 = vmatpush.msra.mxu0 0.0
        %2519 = vmatpush.msra.mxu0 0.0
        %2520 = vmatpush.msra.mxu0 0.0
        %2521 = vmatpush.msra.mxu0 0.0
        %2522 = vmatpush.msra.mxu0 0.0
        %2523 = vmatpush.msra.mxu0 0.0
        %2524 = vmatpush.msra.mxu0 %v2483
        %2525 = vmatpush.msra.mxu0 %v2482
        %2526 = vmatpush.msra.mxu0 %v2481
        %2527 = vmatpush.msra.mxu0 %v2480
        %2528 = vmatmul.f32.gmra.mxu0 %v2489
        %v2529 = vpop.f32.mrf.mxu0
        %v2530 = vadd.f32 %v2486, %v2529
        %2531 = vmatmul.f32.gmra.mxu0 %v2492
        %v2532 = vpop.f32.mrf.mxu0
        %v2533 = vadd.f32 %v2486, %v2532
        %2534 = vmatmul.f32.gmra.mxu0 %v2495
        %v2535 = vpop.f32.mrf.mxu0
        %v2536 = vadd.f32 %v2486, %v2535
        %2537 = vmatmul.f32.gmra.mxu0 %v2498
        %v2538 = vpop.f32.mrf.mxu0
        %v2539 = vadd.f32 %v2486, %v2538
        %2540 = vmatmul.f32.gmra.mxu0 %v2501
        %v2541 = vpop.f32.mrf.mxu0
        %v2542 = vadd.f32 %v2486, %v2541
        %2543 = vmatmul.f32.gmra.mxu0 %v2504
        %v2544 = vpop.f32.mrf.mxu0
        %v2545 = vadd.f32 %v2486, %v2544
        %2546 = vmatmul.f32.gmra.mxu0 %v2507
        %v2547 = vpop.f32.mrf.mxu0
        %v2548 = vadd.f32 %v2486, %v2547
        %2549 = vmatmul.f32.gmra.mxu0 %v2510
        %v2550 = vpop.f32.mrf.mxu0
        %v2551 = vadd.f32 %v2486, %v2550
        %2552 = vdwg.mxu0
        %v2553 = vadd.f32 %v1507, %v2530
        %v2554 = vadd.f32 %v1508, %v2533
        %v2555 = vadd.f32 %v1509, %v2536
        %v2556 = vadd.f32 %v1510, %v2539
        %v2557 = vadd.f32 %v1511, %v2542
        %v2558 = vadd.f32 %v1512, %v2545
        %v2559 = vadd.f32 %v1513, %v2548
        %v2560 = vadd.f32 %v1514, %v2551
      $region129: #{gma_forward.5} parent=123 // loop_footer
        %s1498 = sadd.s32 1, %s1494
      $region130: #{gma_forward.5} parent=123 // loop_footer_branch
        %1493 = sbr.rel target = $region126
      $region131: #{gma_forward.5} parent=123 // loop_exit
        _
      %vm2561 = vcmask 15360
      %2562 = vst.msk [vmem:[%s853] sm:$0xff] %vm2561, %v1507
      %2563 = vst.msk [vmem:[%s853 + $0x8] sm:$0xff] %vm2561, %v1508
      %2564 = vst.msk [vmem:[%s853 + $0x10] sm:$0xff] %vm2561, %v1509
      %2565 = vst.msk [vmem:[%s853 + $0x18] sm:$0xff] %vm2561, %v1510
      %2566 = vst.msk [vmem:[%s853 + $0x20] sm:$0xff] %vm2561, %v1511
      %2567 = vst.msk [vmem:[%s853 + $0x28] sm:$0xff] %vm2561, %v1512
      %2568 = vst.msk [vmem:[%s853 + $0x30] sm:$0xff] %vm2561, %v1513
      %2569 = vst.msk [vmem:[%s853 + $0x38] sm:$0xff] %vm2561, %v1514
      %p2570 = scmp.lt.s32.totalorder %s39, 1
      %s2571 = scalar_select %p2570, %s39, 1
      %s2572 = smul.addr %s2571, 8
      %s2573 = smul.addr %s2572, 8
      %s2574 = scalar_lea.vmem %s26, %s2573
      // Predicated region
      $region132: #{gma_forward.5} parent=123 // pred_check
        %p2575 = pneg %p623
      $region133: #{gma_forward.5} parent=123 // pred_check_branch
        %2577 = sbr.rel (%p2575) target = $region135
      $region134: #{gma_forward.5} parent=123 // pred_region
        _
      $region135: #{gma_forward.5} parent=123 // pred_fallthru
        _
    $region124: #{gma_forward.5} parent=5 // pred_fallthru
      _
    %p2578 = scmp.le.s32.totalorder 2, %s34
    // Predicated region
    $region136: #{gma_forward.5} parent=5 // pred_check
      %p2579 = pneg %p2578
    $region137: #{gma_forward.5} parent=5 // pred_check_branch
      %2581 = sbr.rel (%p2579) target = $region139
    $region138: #{gma_forward.5} parent=5 // pred_region
      %s2582 = ssub.s32 %s34, 2
      // Predicated region
      $region140: #{gma_forward.5} parent=138 // pred_check
        %p2583 = pneg %p629
      $region141: #{gma_forward.5} parent=138 // pred_check_branch
        %2585 = sbr.rel (%p2583) target = $region143
      $region142: #{gma_forward.5} parent=138 // pred_region
        %p2586 = scmp.lt.s32.totalorder %s40, 1
        %s2587 = scalar_select %p2586, %s40, 1
        %s2588 = smul.addr %s2587, 8
        %s2589 = smul.addr %s2588, 8
        %s2590 = scalar_lea.vmem %s26, %s2589
      $region143: #{gma_forward.5} parent=138 // pred_fallthru
        _
    $region139: #{gma_forward.5} parent=5 // pred_fallthru
      _
  $region6: #{gma_forward.5} parent=0 // loop_footer
    %s38 = sadd.s32 1, %s34
  $region7: #{gma_forward.5} parent=0 // loop_footer_branch
    %33 = sbr.rel target = $region3
  $region8: #{gma_forward.5} parent=0 // loop_exit
    _

</llo_original>
